<compile_context>
chip_gen: v5e
topology: v5e:2x2
jax: 0.10.0
libtpu: 0.0.40
codegen_flags: <defaults>
</compile_context>

<pallas_src>
import jax
import jax.numpy as jnp
from jax.experimental import pallas as pl
from jax.experimental.pallas import tpu as pltpu

EPS = 1e-5
F_IN = 1144
F_PAD = 1152          # next multiple of 128 (lane width) — padded once, offline
H1, H2, H3 = 512, 256, 128
VEC_ROWS = 10         # [b1,g1,be1, b2,g2,be2, b3,g3,be3, b4]

# Resident VMEM estimate (bytes): bf16 weights + f32 vec slab, tile-padded.
_WEIGHT_VMEM = (F_PAD * H1 + H1 * H2 + H2 * H3 + 16 * H3) * 2 + 16 * H1 * 4
# Per-sample peak live set (x bf16 + f32/bf16 activation temps), generous 2x.
_PER_SAMPLE_VMEM = 16 * 1024
_VMEM_HEADROOM = 4 << 20
_WHOLE_BATCH_VMEM_CAP = 48 << 20   # stays under v7x's 64 MiB physical VMEM


def _bn_train_fused(h, gamma, beta):
    """Training-mode BatchNorm1d (biased variance, eps=1e-5), fused form.

    One pass for mean / E[h^2]; normalize is a single scale/shift per element.
    Variance is clamped at 0: E[h^2] - mean^2 can go slightly negative in f32
    for high-mean / near-zero-variance features, and eps does not always cover
    the resulting rsqrt NaN.  All in f32 (also keeps v5e's non-bf16 VPU happy).
    """
    mean = jnp.mean(h, axis=0, keepdims=True)
    mean_sq = jnp.mean(h * h, axis=0, keepdims=True)
    var = jnp.maximum(mean_sq - mean * mean, 0.0)
    scale = jax.lax.rsqrt(var + EPS) * gamma
    shift = beta - mean * scale
    return h * scale + shift


def nnue_kernel(x_ref, w1_ref, w2_ref, w3_ref, w4_ref, vec_ref, o_ref):
    x = x_ref[...]                                   # (B, F_PAD) bf16, no cast

    # Unpack the packed vector slab (static slices on the ref -> no extra DMA).
    b1, g1, be1 = vec_ref[0:1, :H1], vec_ref[1:2, :H1], vec_ref[2:3, :H1]
    b2, g2, be2 = vec_ref[3:4, :H2], vec_ref[4:5, :H2], vec_ref[5:6, :H2]
    b3, g3, be3 = vec_ref[6:7, :H3], vec_ref[7:8, :H3], vec_ref[8:9, :H3]
    b4 = vec_ref[9:10, 0:1]                          # (1, 1) fc4 bias

    # Layer 1: fc -> relu -> bn   (bf16 MXU operands, f32 accumulate)
    h = jnp.dot(x, w1_ref[...], preferred_element_type=jnp.float32) + b1
    h = _bn_train_fused(jnp.maximum(h, 0.0), g1, be1)

    # Layer 2
    h = jnp.dot(h.astype(jnp.bfloat16), w2_ref[...],
                preferred_element_type=jnp.float32) + b2
    h = _bn_train_fused(jnp.maximum(h, 0.0), g2, be2)

    # Layer 3
    h = jnp.dot(h.astype(jnp.bfloat16), w3_ref[...],
                preferred_element_type=jnp.float32) + b3
    h = _bn_train_fused(jnp.maximum(h, 0.0), g3, be3)

    # Output head, lane-dense: (1,H3) x (B,H3)^T -> (1, B).  M=1 is a single
    # cheap MXU push; the win is the full-width (batch-on-lanes) output store.
    out = jax.lax.dot_general(
        w4_ref[...], h.astype(jnp.bfloat16),
        dimension_numbers=(((1,), (1,)), ((), ())),
        preferred_element_type=jnp.float32)          # (1, B)
    o_ref[...] = (out + b4).astype(o_ref.dtype)


def prepare_inputs(x):
    """Data-prep-time (amortized / offline), NOT per forward call:
    cast {0,1} NNUE features to bf16 (lossless) and zero-pad 1144 -> 1152 so
    fc1's K dimension is lane-aligned."""
    x = x.astype(jnp.bfloat16)
    if x.shape[1] != F_PAD:
        x = jnp.pad(x, ((0, 0), (0, F_PAD - x.shape[1])))
    return x


def nnue_forward(x, params):
    """x: (B, F_PAD) bfloat16, already padded/cast by prepare_inputs.
    Returns (B, 1) float32, matching the PyTorch module."""
    B = x.shape[0]
    assert x.shape[1] == F_PAD and x.dtype == jnp.bfloat16, (
        "pass prepare_inputs(x): (B, 1152) bfloat16")

    args = (x, params["w1"], params["w2"], params["w3"], params["w4"],
            params["vecs"])

    call_kwargs = {}
    est_vmem = _WEIGHT_VMEM + B * _PER_SAMPLE_VMEM + _VMEM_HEADROOM
    if est_vmem > (12 << 20):
        # Needed once B ~> 1k: v5e's default scoped VMEM is only 16 MiB.
        if est_vmem > _WHOLE_BATCH_VMEM_CAP:
            raise ValueError(
                f"B={B} exceeds the whole-batch-in-VMEM cap "
                "(see TODO(synk): batch-chunked grid with two-pass BN).")
        call_kwargs["compiler_params"] = pltpu.CompilerParams(
            vmem_limit_bytes=int(est_vmem))

    vmem_spec = pl.BlockSpec(memory_space=pltpu.MemorySpace.VMEM)
    out_1B = pl.pallas_call(
        nnue_kernel,
        out_shape=jax.ShapeDtypeStruct((1, B), jnp.float32),   # lane-dense
        in_specs=[vmem_spec] * len(args),
        out_specs=vmem_spec,
        **call_kwargs,
    )(*args)
    return out_1B.reshape(B, 1)                      # layout plumbing, ~free


def init_params(key, input_size=F_IN, h1=H1, h2=H2, h3=H3):
    """Deterministic synthetic parameters (PyTorch-like uniform fan-in init).

    Returns (kernel_params, f32_reference_params)."""
    ks = jax.random.split(key, 8)

    def lin(kw, kb, fan_in, fan_out):
        bound = 1.0 / (fan_in ** 0.5)
        w = jax.random.uniform(kw, (fan_in, fan_out), jnp.float32, -bound, bound)
        b = jax.random.uniform(kb, (fan_out,), jnp.float32, -bound, bound)
        return w, b

    w1, b1 = lin(ks[0], ks[1], input_size, h1)
    w2, b2 = lin(ks[2], ks[3], h1, h2)
    w3, b3 = lin(ks[4], ks[5], h2, h3)
    w4, b4 = lin(ks[6], ks[7], h3, 1)

    ref = dict(w1=w1, b1=b1, w2=w2, b2=b2, w3=w3, b3=b3, w4=w4, b4=b4)

    # One packed (10, H1) f32 slab: rows = [b,gamma,beta] per BN layer (PyTorch
    # BN init: gamma=1, beta=0) + fc4 bias in row 9, col 0.  One DMA descriptor.
    vecs = jnp.zeros((VEC_ROWS, h1), jnp.float32)
    vecs = vecs.at[0, :h1].set(b1)
    vecs = vecs.at[1, :h1].set(1.0)
    vecs = vecs.at[3, :h2].set(b2)
    vecs = vecs.at[4, :h2].set(1.0)
    vecs = vecs.at[6, :h3].set(b3)
    vecs = vecs.at[7, :h3].set(1.0)
    vecs = vecs.at[9, 0].set(b4[0])

    bf16 = jnp.bfloat16
    kern = {
        "w1": jnp.pad(w1, ((0, F_PAD - input_size), (0, 0))).astype(bf16),
        "w2": w2.astype(bf16),              # (H1, H2)
        "w3": w3.astype(bf16),              # (H2, H3)
        "w4": w4.T.astype(bf16),            # (1, H3)
        "vecs": vecs,                       # (10, H1) f32
    }
    return kern, ref


def nnue_reference_bf16(x_pad_bf16, p):
    """Pure-JAX reference mirroring the kernel's numerics exactly
    (bf16 x / weights, f32 accumulate, fused clamped training-mode BN)."""
    v = p["vecs"]

    def layer(h, w, b, g, be):
        h = jnp.dot(h.astype(jnp.bfloat16), w,
                    preferred_element_type=jnp.float32) + b
        return _bn_train_fused(jnp.maximum(h, 0.0), g, be)

    h = layer(x_pad_bf16, p["w1"], v[0:1, :H1], v[1:2, :H1], v[2:3, :H1])
    h = layer(h, p["w2"], v[3:4, :H2], v[4:5, :H2], v[5:6, :H2])
    h = layer(h, p["w3"], v[6:7, :H3], v[7:8, :H3], v[8:9, :H3])
    out = jnp.dot(h.astype(jnp.bfloat16), p["w4"].T,
                  preferred_element_type=jnp.float32)
    return out + v[9:10, 0:1]                        # (B, 1)


def nnue_reference_f32(x_f32, r):
    """Full-f32 reference of the original PyTorch forward (training-mode BN,
    gamma=1/beta=0 default init) — loose sanity bound for the bf16 kernel."""
    def layer(h, w, b):
        h = jnp.maximum(h @ w + b, 0.0)
        mean = h.mean(0, keepdims=True)
        var = ((h - mean) ** 2).mean(0, keepdims=True)
        return (h - mean) * jax.lax.rsqrt(var + EPS)

    h = layer(x_f32, r["w1"], r["b1"])
    h = layer(h, r["w2"], r["b2"])
    h = layer(h, r["w3"], r["b3"])
    return h @ r["w4"] + r["b4"]                     # (B, 1)


if __name__ == "__main__":
    key = jax.random.PRNGKey(0)
    k_param, k_x = jax.random.split(key)

    # Small demo batch; multiple of 16 (bf16 sublane pack) and of the sublane
    # tile.  BatchNorm (training mode) needs B > 1.
    B = 128
    kern_params, ref_params = init_params(k_param)

    # NNUE features are {0,1} (sparse one-hot piece features) -> bf16 lossless.
    x_f32 = (jax.random.uniform(k_x, (B, F_IN)) < 0.1).astype(jnp.float32)
    x_kern = prepare_inputs(x_f32)       # cast + pad ONCE, outside the hot path

    fwd = jax.jit(nnue_forward)
    out = jax.block_until_ready(fwd(x_kern, kern_params))
    assert out.shape == (B, 1), out.shape

    ref_b = nnue_reference_bf16(x_kern, kern_params)
    err_b = float(jnp.max(jnp.abs(out - ref_b)))
    assert jnp.allclose(out, ref_b, atol=5e-3, rtol=5e-3), \
        f"bf16-mirror mismatch: max abs err {err_b}"

    ref_f = nnue_reference_f32(x_f32, ref_params)
    err_f = float(jnp.max(jnp.abs(out - ref_f)))
    assert jnp.allclose(out, ref_f, atol=1e-1, rtol=1e-1), \
        f"f32-reference mismatch: max abs err {err_f}"

    print("KERNEL_OK")
</pallas_src>

<mosaic_0001>
module attributes {stable_mosaic.version = 11 : i64} {
  func.func @nnue_kernel(%arg0: memref<128x1152xbf16, #tpu.memory_space<vmem>>, %arg1: memref<1152x512xbf16, #tpu.memory_space<vmem>>, %arg2: memref<512x256xbf16, #tpu.memory_space<vmem>>, %arg3: memref<256x128xbf16, #tpu.memory_space<vmem>>, %arg4: memref<1x128xbf16, #tpu.memory_space<vmem>>, %arg5: memref<10x512xf32, #tpu.memory_space<vmem>>, %arg6: memref<1x128xf32, #tpu.memory_space<vmem>>) attributes {dimension_semantics = [], scalar_prefetch = 0 : i64, scratch_operands = 0 : i64, tpu.core_type = #tpu.core_type<tc>} {
    %c0 = arith.constant 0 : index
    %c0_0 = arith.constant 0 : index
    %0 = vector.load %arg0[%c0, %c0_0] : memref<128x1152xbf16, #tpu.memory_space<vmem>>, vector<128x1152xbf16>
    %c0_1 = arith.constant 0 : index
    %c0_2 = arith.constant 0 : index
    %1 = vector.load %arg5[%c0_1, %c0_2] : memref<10x512xf32, #tpu.memory_space<vmem>>, vector<1x512xf32>
    %c1 = arith.constant 1 : index
    %c0_3 = arith.constant 0 : index
    %2 = vector.load %arg5[%c1, %c0_3] : memref<10x512xf32, #tpu.memory_space<vmem>>, vector<1x512xf32>
    %c2 = arith.constant 2 : index
    %c0_4 = arith.constant 0 : index
    %3 = vector.load %arg5[%c2, %c0_4] : memref<10x512xf32, #tpu.memory_space<vmem>>, vector<1x512xf32>
    %c3 = arith.constant 3 : index
    %c0_5 = arith.constant 0 : index
    %4 = vector.load %arg5[%c3, %c0_5] : memref<10x512xf32, #tpu.memory_space<vmem>>, vector<1x256xf32>
    %c4 = arith.constant 4 : index
    %c0_6 = arith.constant 0 : index
    %5 = vector.load %arg5[%c4, %c0_6] : memref<10x512xf32, #tpu.memory_space<vmem>>, vector<1x256xf32>
    %c5 = arith.constant 5 : index
    %c0_7 = arith.constant 0 : index
    %6 = vector.load %arg5[%c5, %c0_7] : memref<10x512xf32, #tpu.memory_space<vmem>>, vector<1x256xf32>
    %c6 = arith.constant 6 : index
    %c0_8 = arith.constant 0 : index
    %7 = vector.load %arg5[%c6, %c0_8] : memref<10x512xf32, #tpu.memory_space<vmem>>, vector<1x128xf32>
    %c7 = arith.constant 7 : index
    %c0_9 = arith.constant 0 : index
    %8 = vector.load %arg5[%c7, %c0_9] : memref<10x512xf32, #tpu.memory_space<vmem>>, vector<1x128xf32>
    %c8 = arith.constant 8 : index
    %c0_10 = arith.constant 0 : index
    %9 = vector.load %arg5[%c8, %c0_10] : memref<10x512xf32, #tpu.memory_space<vmem>>, vector<1x128xf32>
    %c9 = arith.constant 9 : index
    %c0_11 = arith.constant 0 : index
    %10 = vector.load %arg5[%c9, %c0_11] : memref<10x512xf32, #tpu.memory_space<vmem>>, vector<1x1xf32>
    %c0_12 = arith.constant 0 : index
    %c0_13 = arith.constant 0 : index
    %11 = vector.load %arg1[%c0_12, %c0_13] : memref<1152x512xbf16, #tpu.memory_space<vmem>>, vector<1152x512xbf16>
    %cst = arith.constant dense<0.000000e+00> : vector<128x512xf32>
    %12 = tpu.matmul %0, %11, %cst {dimension_numbers = #tpu.dot_dimension_numbers<[1], [0], [0], [1], [0, 0, 1, 1], [], []>} : vector<128x1152xbf16>, vector<1152x512xbf16>, vector<128x512xf32> -> vector<128x512xf32>
    %13 = vector.broadcast %1 : vector<1x512xf32> to vector<128x512xf32>
    %14 = arith.addf %12, %13 : vector<128x512xf32>
    %cst_14 = arith.constant 0.000000e+00 : f32
    %15 = vector.broadcast %cst_14 : f32 to vector<128x512xf32>
    %16 = arith.maximumf %14, %15 : vector<128x512xf32>
    %cst_15 = arith.constant dense<0.000000e+00> : vector<512xf32>
    %17 = vector.multi_reduction <add>, %16, %cst_15 [0] : vector<128x512xf32> to vector<512xf32>
    %18 = vector.shape_cast %17 : vector<512xf32> to vector<1x512xf32>
    %cst_16 = arith.constant 1.280000e+02 : f32
    %19 = vector.broadcast %cst_16 : f32 to vector<1x512xf32>
    %20 = arith.divf %18, %19 : vector<1x512xf32>
    %21 = arith.mulf %16, %16 : vector<128x512xf32>
    %cst_17 = arith.constant dense<0.000000e+00> : vector<512xf32>
    %22 = vector.multi_reduction <add>, %21, %cst_17 [0] : vector<128x512xf32> to vector<512xf32>
    %23 = vector.shape_cast %22 : vector<512xf32> to vector<1x512xf32>
    %cst_18 = arith.constant 1.280000e+02 : f32
    %24 = vector.broadcast %cst_18 : f32 to vector<1x512xf32>
    %25 = arith.divf %23, %24 : vector<1x512xf32>
    %26 = arith.mulf %20, %20 : vector<1x512xf32>
    %27 = arith.subf %25, %26 : vector<1x512xf32>
    %cst_19 = arith.constant 0.000000e+00 : f32
    %28 = vector.broadcast %cst_19 : f32 to vector<1x512xf32>
    %29 = arith.maximumf %27, %28 : vector<1x512xf32>
    %cst_20 = arith.constant 9.99999974E-6 : f32
    %30 = vector.broadcast %cst_20 : f32 to vector<1x512xf32>
    %31 = arith.addf %29, %30 : vector<1x512xf32>
    %32 = math.rsqrt %31 : vector<1x512xf32>
    %33 = arith.mulf %32, %2 : vector<1x512xf32>
    %34 = arith.mulf %20, %33 : vector<1x512xf32>
    %35 = arith.subf %3, %34 : vector<1x512xf32>
    %36 = vector.broadcast %33 : vector<1x512xf32> to vector<128x512xf32>
    %37 = arith.mulf %16, %36 : vector<128x512xf32>
    %38 = vector.broadcast %35 : vector<1x512xf32> to vector<128x512xf32>
    %39 = arith.addf %37, %38 : vector<128x512xf32>
    %40 = arith.truncf %39 : vector<128x512xf32> to vector<128x512xbf16>
    %c0_21 = arith.constant 0 : index
    %c0_22 = arith.constant 0 : index
    %41 = vector.load %arg2[%c0_21, %c0_22] : memref<512x256xbf16, #tpu.memory_space<vmem>>, vector<512x256xbf16>
    %cst_23 = arith.constant dense<0.000000e+00> : vector<128x256xf32>
    %42 = tpu.matmul %40, %41, %cst_23 {dimension_numbers = #tpu.dot_dimension_numbers<[1], [0], [0], [1], [0, 0, 1, 1], [], []>} : vector<128x512xbf16>, vector<512x256xbf16>, vector<128x256xf32> -> vector<128x256xf32>
    %43 = vector.broadcast %4 : vector<1x256xf32> to vector<128x256xf32>
    %44 = arith.addf %42, %43 : vector<128x256xf32>
    %cst_24 = arith.constant 0.000000e+00 : f32
    %45 = vector.broadcast %cst_24 : f32 to vector<128x256xf32>
    %46 = arith.maximumf %44, %45 : vector<128x256xf32>
    %cst_25 = arith.constant dense<0.000000e+00> : vector<256xf32>
    %47 = vector.multi_reduction <add>, %46, %cst_25 [0] : vector<128x256xf32> to vector<256xf32>
    %48 = vector.shape_cast %47 : vector<256xf32> to vector<1x256xf32>
    %cst_26 = arith.constant 1.280000e+02 : f32
    %49 = vector.broadcast %cst_26 : f32 to vector<1x256xf32>
    %50 = arith.divf %48, %49 : vector<1x256xf32>
    %51 = arith.mulf %46, %46 : vector<128x256xf32>
    %cst_27 = arith.constant dense<0.000000e+00> : vector<256xf32>
    %52 = vector.multi_reduction <add>, %51, %cst_27 [0] : vector<128x256xf32> to vector<256xf32>
    %53 = vector.shape_cast %52 : vector<256xf32> to vector<1x256xf32>
    %cst_28 = arith.constant 1.280000e+02 : f32
    %54 = vector.broadcast %cst_28 : f32 to vector<1x256xf32>
    %55 = arith.divf %53, %54 : vector<1x256xf32>
    %56 = arith.mulf %50, %50 : vector<1x256xf32>
    %57 = arith.subf %55, %56 : vector<1x256xf32>
    %cst_29 = arith.constant 0.000000e+00 : f32
    %58 = vector.broadcast %cst_29 : f32 to vector<1x256xf32>
    %59 = arith.maximumf %57, %58 : vector<1x256xf32>
    %cst_30 = arith.constant 9.99999974E-6 : f32
    %60 = vector.broadcast %cst_30 : f32 to vector<1x256xf32>
    %61 = arith.addf %59, %60 : vector<1x256xf32>
    %62 = math.rsqrt %61 : vector<1x256xf32>
    %63 = arith.mulf %62, %5 : vector<1x256xf32>
    %64 = arith.mulf %50, %63 : vector<1x256xf32>
    %65 = arith.subf %6, %64 : vector<1x256xf32>
    %66 = vector.broadcast %63 : vector<1x256xf32> to vector<128x256xf32>
    %67 = arith.mulf %46, %66 : vector<128x256xf32>
    %68 = vector.broadcast %65 : vector<1x256xf32> to vector<128x256xf32>
    %69 = arith.addf %67, %68 : vector<128x256xf32>
    %70 = arith.truncf %69 : vector<128x256xf32> to vector<128x256xbf16>
    %c0_31 = arith.constant 0 : index
    %c0_32 = arith.constant 0 : index
    %71 = vector.load %arg3[%c0_31, %c0_32] : memref<256x128xbf16, #tpu.memory_space<vmem>>, vector<256x128xbf16>
    %cst_33 = arith.constant dense<0.000000e+00> : vector<128x128xf32>
    %72 = tpu.matmul %70, %71, %cst_33 {dimension_numbers = #tpu.dot_dimension_numbers<[1], [0], [0], [1], [0, 0, 1, 1], [], []>} : vector<128x256xbf16>, vector<256x128xbf16>, vector<128x128xf32> -> vector<128x128xf32>
    %73 = vector.broadcast %7 : vector<1x128xf32> to vector<128x128xf32>
    %74 = arith.addf %72, %73 : vector<128x128xf32>
    %cst_34 = arith.constant 0.000000e+00 : f32
    %75 = vector.broadcast %cst_34 : f32 to vector<128x128xf32>
    %76 = arith.maximumf %74, %75 : vector<128x128xf32>
    %cst_35 = arith.constant dense<0.000000e+00> : vector<128xf32>
    %77 = vector.multi_reduction <add>, %76, %cst_35 [0] : vector<128x128xf32> to vector<128xf32>
    %78 = vector.shape_cast %77 : vector<128xf32> to vector<1x128xf32>
    %cst_36 = arith.constant 1.280000e+02 : f32
    %79 = vector.broadcast %cst_36 : f32 to vector<1x128xf32>
    %80 = arith.divf %78, %79 : vector<1x128xf32>
    %81 = arith.mulf %76, %76 : vector<128x128xf32>
    %cst_37 = arith.constant dense<0.000000e+00> : vector<128xf32>
    %82 = vector.multi_reduction <add>, %81, %cst_37 [0] : vector<128x128xf32> to vector<128xf32>
    %83 = vector.shape_cast %82 : vector<128xf32> to vector<1x128xf32>
    %cst_38 = arith.constant 1.280000e+02 : f32
    %84 = vector.broadcast %cst_38 : f32 to vector<1x128xf32>
    %85 = arith.divf %83, %84 : vector<1x128xf32>
    %86 = arith.mulf %80, %80 : vector<1x128xf32>
    %87 = arith.subf %85, %86 : vector<1x128xf32>
    %cst_39 = arith.constant 0.000000e+00 : f32
    %88 = vector.broadcast %cst_39 : f32 to vector<1x128xf32>
    %89 = arith.maximumf %87, %88 : vector<1x128xf32>
    %cst_40 = arith.constant 9.99999974E-6 : f32
    %90 = vector.broadcast %cst_40 : f32 to vector<1x128xf32>
    %91 = arith.addf %89, %90 : vector<1x128xf32>
    %92 = math.rsqrt %91 : vector<1x128xf32>
    %93 = arith.mulf %92, %8 : vector<1x128xf32>
    %94 = arith.mulf %80, %93 : vector<1x128xf32>
    %95 = arith.subf %9, %94 : vector<1x128xf32>
    %96 = vector.broadcast %93 : vector<1x128xf32> to vector<128x128xf32>
    %97 = arith.mulf %76, %96 : vector<128x128xf32>
    %98 = vector.broadcast %95 : vector<1x128xf32> to vector<128x128xf32>
    %99 = arith.addf %97, %98 : vector<128x128xf32>
    %c0_41 = arith.constant 0 : index
    %c0_42 = arith.constant 0 : index
    %100 = vector.load %arg4[%c0_41, %c0_42] : memref<1x128xbf16, #tpu.memory_space<vmem>>, vector<1x128xbf16>
    %101 = arith.truncf %99 : vector<128x128xf32> to vector<128x128xbf16>
    %cst_43 = arith.constant dense<0.000000e+00> : vector<1x128xf32>
    %102 = tpu.matmul %100, %101, %cst_43 {dimension_numbers = #tpu.dot_dimension_numbers<[1], [1], [0], [0], [0, 0, 1, 0], [], []>} : vector<1x128xbf16>, vector<128x128xbf16>, vector<1x128xf32> -> vector<1x128xf32>
    %103 = vector.broadcast %10 : vector<1x1xf32> to vector<1x128xf32>
    %104 = arith.addf %102, %103 : vector<1x128xf32>
    %c0_44 = arith.constant 0 : index
    %c0_45 = arith.constant 0 : index
    %105 = vector.load %arg6[%c0_44, %c0_45] : memref<1x128xf32, #tpu.memory_space<vmem>>, vector<1x128xf32>
    tpu.vector_store %arg6[%c0_44, %c0_45], %104 {strides = array<i32>} : memref<1x128xf32, #tpu.memory_space<vmem>>, vector<1x128xf32>,
    return
  }
}

</mosaic_0001>

<llo_original>
// kernel: nnue_forward.1
$region0: #{nnue_forward.1}
  #allocation0 [shape = 'u32[]', space=smem, size = 0x4, offset = 0x4, fixed_abs, tag = 'smem constant byte address 0x4 - core index']
  #allocation1 [shape = 'u32[72,128]{1,0:T(1,128)}', space=vmem, size = 0x9000, scoped, tag = 'internal scratch']
  %s0 = inlined_call_operand.hbm [shape: bf16[128,1152], index: 0, kind: input, shape index: {}]
  %s1 = inlined_call_operand.hbm [shape: bf16[1152,512], index: 1, kind: input, shape index: {}]
  %s2 = inlined_call_operand.hbm [shape: bf16[512,256], index: 2, kind: input, shape index: {}]
  %s3 = inlined_call_operand.hbm [shape: bf16[256,128], index: 3, kind: input, shape index: {}]
  %s4 = inlined_call_operand.hbm [shape: bf16[1,128], index: 4, kind: input, shape index: {}]
  %s5 = inlined_call_operand.hbm [shape: f32[10,512], index: 5, kind: input, shape index: {}]
  %s6 = inlined_call_operand.hbm [shape: f32[1,128], index: 6, kind: output, shape index: {}]
  %s7 = sld [smem:[#allocation0]]
  $region58: #{nnue_forward.1} parent=0
    _
  %s9 = ssub.s32 1, %s7
  %s10 = scalar_select 0, %s9, %s7
  $region1: #{nnue_forward.1} parent=0
    #allocation2 [shape = 'u8[294912]{0}', space=vmem, size = 0x48000, scoped, tag = 'input window, operand 0, single buffered']
    #allocation3 [shape = 's32[1]{0}', space=sflag, size = 0x4, scoped, tag = 'scoped memory for nnue_forward.1']
    #allocation4 [shape = 's32[1]{0}', space=sflag, size = 0x4, scoped, tag = 'scoped memory for nnue_forward.1']
    #allocation5 [shape = 'u8[1179648]{0}', space=vmem, size = 0x120000, scoped, tag = 'input window, operand 1, single buffered']
    #allocation6 [shape = 's32[1]{0}', space=sflag, size = 0x4, scoped, tag = 'scoped memory for nnue_forward.1']
    #allocation7 [shape = 'u8[262144]{0}', space=vmem, size = 0x40000, scoped, tag = 'input window, operand 2, single buffered']
    #allocation8 [shape = 'u8[65536]{0}', space=vmem, size = 0x10000, scoped, tag = 'input window, operand 3, single buffered']
    #allocation9 [shape = 's32[1]{0}', space=sflag, size = 0x4, scoped, tag = 'scoped memory for nnue_forward.1']
    #allocation10 [shape = 'u8[512]{0}', space=vmem, size = 0x400, scoped, tag = 'input window, operand 4, single buffered']
    #allocation11 [shape = 'u8[32768]{0}', space=vmem, size = 0x8000, scoped, tag = 'input window, operand 5, single buffered']
    #allocation12 [shape = 's32[1]{0}', space=sflag, size = 0x4, scoped, tag = 'scoped memory for nnue_forward.1']
    #allocation13 [shape = 'u8[512]{0}', space=vmem, size = 0x400, scoped, tag = 'output window, operand 0, single buffered']
    %11 = vsyncpa [#allocation3], 0
    %12 = vsyncpa [#allocation6], 0
    %13 = vsyncpa [#allocation9], 0
    %14 = vsyncpa [#allocation12], 0
    %15 = vsyncpa [#allocation4], 0
    // Predicated region
    $region2: #{nnue_forward.1} parent=1 // pred_check
      _
    $region3: #{nnue_forward.1} parent=1 // pred_check_branch
      %17 = sbr.rel (0) target = $region5
    $region4: #{nnue_forward.1} parent=1 // pred_region
      %19 = vsyncadd [#allocation3], 0
      %s20 = sshll.u32 %s0, 4
      %s21 = int_to_ptr.hbm [resolvable:$true] %s20
      %s22 = sshll.u32 [#allocation2], 4
      %s23 = int_to_ptr.vmem [resolvable:$true] %s22
      %28 = dma.hbm_to_vmem [thread:$0]  %s21, 9216, %s23, [#allocation3], 576, 576, 36
    $region5: #{nnue_forward.1} parent=1 // pred_fallthru
      _
    // Predicated region
    $region6: #{nnue_forward.1} parent=1 // pred_check
      _
    $region7: #{nnue_forward.1} parent=1 // pred_check_branch
      %30 = sbr.rel (0) target = $region9
    $region8: #{nnue_forward.1} parent=1 // pred_region
      %32 = vsyncadd [#allocation6], 0
      %s33 = sshll.u32 %s1, 4
      %s34 = int_to_ptr.hbm [resolvable:$true] %s33
      %s35 = sshll.u32 [#allocation5], 4
      %s36 = int_to_ptr.vmem [resolvable:$true] %s35
      %41 = dma.hbm_to_vmem [thread:$0]  %s34, 36864, %s36, [#allocation6], 256, 256, 16
    $region9: #{nnue_forward.1} parent=1 // pred_fallthru
      _
    // Predicated region
    $region10: #{nnue_forward.1} parent=1 // pred_check
      _
    $region11: #{nnue_forward.1} parent=1 // pred_check_branch
      %43 = sbr.rel (0) target = $region13
    $region12: #{nnue_forward.1} parent=1 // pred_region
      %45 = vsyncadd [#allocation6], 0
      %s46 = sshll.u32 %s2, 4
      %s47 = int_to_ptr.hbm [resolvable:$true] %s46
      %s48 = sshll.u32 [#allocation7], 4
      %s49 = int_to_ptr.vmem [resolvable:$true] %s48
      %54 = dma.hbm_to_vmem [thread:$0]  %s47, 8192, %s49, [#allocation6], 128, 128, 8
    $region13: #{nnue_forward.1} parent=1 // pred_fallthru
      _
    // Predicated region
    $region14: #{nnue_forward.1} parent=1 // pred_check
      _
    $region15: #{nnue_forward.1} parent=1 // pred_check_branch
      %56 = sbr.rel (0) target = $region17
    $region16: #{nnue_forward.1} parent=1 // pred_region
      %58 = vsyncadd [#allocation9], 0
      %s59 = sshll.u32 %s3, 4
      %s60 = int_to_ptr.hbm [resolvable:$true] %s59
      %s61 = sshll.u32 [#allocation8], 4
      %s62 = int_to_ptr.vmem [resolvable:$true] %s61
      %67 = dma.hbm_to_vmem [thread:$0]  %s60, 2048, %s62, [#allocation9], 64, 64, 4
    $region17: #{nnue_forward.1} parent=1 // pred_fallthru
      _
    // Predicated region
    $region18: #{nnue_forward.1} parent=1 // pred_check
      _
    $region19: #{nnue_forward.1} parent=1 // pred_check_branch
      %69 = sbr.rel (0) target = $region21
    $region20: #{nnue_forward.1} parent=1 // pred_region
      %71 = vsyncadd [#allocation9], 0
      %s73 = sshll.u32 %s4, 4
      %s74 = int_to_ptr.hbm [resolvable:$true] %s73
      %s75 = sshll.u32 [#allocation10], 4
      %s76 = int_to_ptr.vmem [resolvable:$true] %s75
      %78 = dma.hbm_to_vmem [thread:$0]  %s74, 16, %s76, [#allocation9]
    $region21: #{nnue_forward.1} parent=1 // pred_fallthru
      _
    // Predicated region
    $region22: #{nnue_forward.1} parent=1 // pred_check
      _
    $region23: #{nnue_forward.1} parent=1 // pred_check_branch
      %80 = sbr.rel (0) target = $region25
    $region24: #{nnue_forward.1} parent=1 // pred_region
      %82 = vsyncadd [#allocation12], 0
      %s83 = sshll.u32 %s5, 4
      %s84 = int_to_ptr.hbm [resolvable:$true] %s83
      %s85 = sshll.u32 [#allocation11], 4
      %s86 = int_to_ptr.vmem [resolvable:$true] %s85
      %91 = dma.hbm_to_vmem [thread:$0]  %s84, 1024, %s86, [#allocation12], 512, 512, 32
    $region25: #{nnue_forward.1} parent=1 // pred_fallthru
      _
    // Predicated region
    $region26: #{nnue_forward.1} parent=1 // pred_check
      _
    $region27: #{nnue_forward.1} parent=1 // pred_check_branch
      %93 = sbr.rel (0) target = $region29
    $region28: #{nnue_forward.1} parent=1 // pred_region
      %95 = dma.done [#allocation3], 9216
    $region29: #{nnue_forward.1} parent=1 // pred_fallthru
      _
    // Predicated region
    $region30: #{nnue_forward.1} parent=1 // pred_check
      _
    $region31: #{nnue_forward.1} parent=1 // pred_check_branch
      %97 = sbr.rel (0) target = $region33
    $region32: #{nnue_forward.1} parent=1 // pred_region
      %99 = dma.done [#allocation6], 36864
    $region33: #{nnue_forward.1} parent=1 // pred_fallthru
      _
    // Predicated region
    $region34: #{nnue_forward.1} parent=1 // pred_check
      _
    $region35: #{nnue_forward.1} parent=1 // pred_check_branch
      %101 = sbr.rel (0) target = $region37
    $region36: #{nnue_forward.1} parent=1 // pred_region
      %103 = dma.done [#allocation6], 8192
    $region37: #{nnue_forward.1} parent=1 // pred_fallthru
      _
    // Predicated region
    $region38: #{nnue_forward.1} parent=1 // pred_check
      _
    $region39: #{nnue_forward.1} parent=1 // pred_check_branch
      %105 = sbr.rel (0) target = $region41
    $region40: #{nnue_forward.1} parent=1 // pred_region
      %107 = dma.done [#allocation9], 2048
    $region41: #{nnue_forward.1} parent=1 // pred_fallthru
      _
    // Predicated region
    $region42: #{nnue_forward.1} parent=1 // pred_check
      _
    $region43: #{nnue_forward.1} parent=1 // pred_check_branch
      %109 = sbr.rel (0) target = $region45
    $region44: #{nnue_forward.1} parent=1 // pred_region
      %111 = dma.done [#allocation9], 16
    $region45: #{nnue_forward.1} parent=1 // pred_fallthru
      _
    // Predicated region
    $region46: #{nnue_forward.1} parent=1 // pred_check
      _
    $region47: #{nnue_forward.1} parent=1 // pred_check_branch
      %113 = sbr.rel (0) target = $region49
    $region48: #{nnue_forward.1} parent=1 // pred_region
      %115 = dma.done [#allocation12], 1024
    $region49: #{nnue_forward.1} parent=1 // pred_fallthru
      _
    %v116 = vld [vmem:[#allocation2] sm:$0xff]
    %v117 = vld [vmem:[#allocation2 + $0x8] sm:$0xff]
    %v118 = vld [vmem:[#allocation2 + $0x10] sm:$0xff]
    %v119 = vld [vmem:[#allocation2 + $0x18] sm:$0xff]
    %v120 = vld [vmem:[#allocation2 + $0x20] sm:$0xf]
    %v121 = vld [vmem:[#allocation2 + $0x24] sm:$0xff]
    %v122 = vld [vmem:[#allocation2 + $0x2c] sm:$0xff]
    %v123 = vld [vmem:[#allocation2 + $0x34] sm:$0xff]
    %v124 = vld [vmem:[#allocation2 + $0x3c] sm:$0xff]
    %v125 = vld [vmem:[#allocation2 + $0x44] sm:$0xf]
    %v126 = vld [vmem:[#allocation2 + $0x48] sm:$0xff]
    %v127 = vld [vmem:[#allocation2 + $0x50] sm:$0xff]
    %v128 = vld [vmem:[#allocation2 + $0x58] sm:$0xff]
    %v129 = vld [vmem:[#allocation2 + $0x60] sm:$0xff]
    %v130 = vld [vmem:[#allocation2 + $0x68] sm:$0xf]
    %v131 = vld [vmem:[#allocation2 + $0x6c] sm:$0xff]
    %v132 = vld [vmem:[#allocation2 + $0x74] sm:$0xff]
    %v133 = vld [vmem:[#allocation2 + $0x7c] sm:$0xff]
    %v134 = vld [vmem:[#allocation2 + $0x84] sm:$0xff]
    %v135 = vld [vmem:[#allocation2 + $0x8c] sm:$0xf]
    %v136 = vld [vmem:[#allocation2 + $0x90] sm:$0xff]
    %v137 = vld [vmem:[#allocation2 + $0x98] sm:$0xff]
    %v138 = vld [vmem:[#allocation2 + $0xa0] sm:$0xff]
    %v139 = vld [vmem:[#allocation2 + $0xa8] sm:$0xff]
    %v140 = vld [vmem:[#allocation2 + $0xb0] sm:$0xf]
    %v141 = vld [vmem:[#allocation2 + $0xb4] sm:$0xff]
    %v142 = vld [vmem:[#allocation2 + $0xbc] sm:$0xff]
    %v143 = vld [vmem:[#allocation2 + $0xc4] sm:$0xff]
    %v144 = vld [vmem:[#allocation2 + $0xcc] sm:$0xff]
    %v145 = vld [vmem:[#allocation2 + $0xd4] sm:$0xf]
    %v146 = vld [vmem:[#allocation2 + $0xd8] sm:$0xff]
    %v147 = vld [vmem:[#allocation2 + $0xe0] sm:$0xff]
    %v148 = vld [vmem:[#allocation2 + $0xe8] sm:$0xff]
    %v149 = vld [vmem:[#allocation2 + $0xf0] sm:$0xff]
    %v150 = vld [vmem:[#allocation2 + $0xf8] sm:$0xf]
    %v151 = vld [vmem:[#allocation2 + $0xfc] sm:$0xff]
    %v152 = vld [vmem:[#allocation2 + $0x104] sm:$0xff]
    %v153 = vld [vmem:[#allocation2 + $0x10c] sm:$0xff]
    %v154 = vld [vmem:[#allocation2 + $0x114] sm:$0xff]
    %v155 = vld [vmem:[#allocation2 + $0x11c] sm:$0xf]
    %v156 = vld [vmem:[#allocation2 + $0x120] sm:$0xff]
    %v157 = vld [vmem:[#allocation2 + $0x128] sm:$0xff]
    %v158 = vld [vmem:[#allocation2 + $0x130] sm:$0xff]
    %v159 = vld [vmem:[#allocation2 + $0x138] sm:$0xff]
    %v160 = vld [vmem:[#allocation2 + $0x140] sm:$0xf]
    %v161 = vld [vmem:[#allocation2 + $0x144] sm:$0xff]
    %v162 = vld [vmem:[#allocation2 + $0x14c] sm:$0xff]
    %v163 = vld [vmem:[#allocation2 + $0x154] sm:$0xff]
    %v164 = vld [vmem:[#allocation2 + $0x15c] sm:$0xff]
    %v165 = vld [vmem:[#allocation2 + $0x164] sm:$0xf]
    %v166 = vld [vmem:[#allocation2 + $0x168] sm:$0xff]
    %v167 = vld [vmem:[#allocation2 + $0x170] sm:$0xff]
    %v168 = vld [vmem:[#allocation2 + $0x178] sm:$0xff]
    %v169 = vld [vmem:[#allocation2 + $0x180] sm:$0xff]
    %v170 = vld [vmem:[#allocation2 + $0x188] sm:$0xf]
    %v171 = vld [vmem:[#allocation2 + $0x18c] sm:$0xff]
    %v172 = vld [vmem:[#allocation2 + $0x194] sm:$0xff]
    %v173 = vld [vmem:[#allocation2 + $0x19c] sm:$0xff]
    %v174 = vld [vmem:[#allocation2 + $0x1a4] sm:$0xff]
    %v175 = vld [vmem:[#allocation2 + $0x1ac] sm:$0xf]
    %v176 = vld [vmem:[#allocation2 + $0x1b0] sm:$0xff]
    %v177 = vld [vmem:[#allocation2 + $0x1b8] sm:$0xff]
    %v178 = vld [vmem:[#allocation2 + $0x1c0] sm:$0xff]
    %v179 = vld [vmem:[#allocation2 + $0x1c8] sm:$0xff]
    %v180 = vld [vmem:[#allocation2 + $0x1d0] sm:$0xf]
    %v181 = vld [vmem:[#allocation2 + $0x1d4] sm:$0xff]
    %v182 = vld [vmem:[#allocation2 + $0x1dc] sm:$0xff]
    %v183 = vld [vmem:[#allocation2 + $0x1e4] sm:$0xff]
    %v184 = vld [vmem:[#allocation2 + $0x1ec] sm:$0xff]
    %v185 = vld [vmem:[#allocation2 + $0x1f4] sm:$0xf]
    %v186 = vld [vmem:[#allocation2 + $0x1f8] sm:$0xff]
    %v187 = vld [vmem:[#allocation2 + $0x200] sm:$0xff]
    %v188 = vld [vmem:[#allocation2 + $0x208] sm:$0xff]
    %v189 = vld [vmem:[#allocation2 + $0x210] sm:$0xff]
    %v190 = vld [vmem:[#allocation2 + $0x218] sm:$0xf]
    %v191 = vld [vmem:[#allocation2 + $0x21c] sm:$0xff]
    %v192 = vld [vmem:[#allocation2 + $0x224] sm:$0xff]
    %v193 = vld [vmem:[#allocation2 + $0x22c] sm:$0xff]
    %v194 = vld [vmem:[#allocation2 + $0x234] sm:$0xff]
    %v195 = vld [vmem:[#allocation2 + $0x23c] sm:$0xf]
    %v196 = vld [vmem:[#allocation11] ss:$8 sm:$0xf]
    %s197 = scalar_lea.vmem [#allocation11], 1
    %v198 = vld [vmem:[%s197] ss:$8 sm:$0xf]
    %s199 = scalar_lea.vmem [#allocation11], 2
    %v200 = vld [vmem:[%s199] ss:$8 sm:$0xf]
    %s201 = scalar_lea.vmem [#allocation11], 3
    %v202 = vld [vmem:[%s201] ss:$8 sm:$0x3]
    %s203 = scalar_lea.vmem [#allocation11], 4
    %v204 = vld [vmem:[%s203] ss:$8 sm:$0x3]
    %s205 = scalar_lea.vmem [#allocation11], 5
    %v206 = vld [vmem:[%s205] ss:$8 sm:$0x3]
    %v207 = vld [vmem:[#allocation11 + $0x6] ss:$0 sm:$0xff]
    %v208 = vld [vmem:[#allocation11 + $0x7] ss:$0 sm:$0xff]
    %v209 = vld [vmem:[#allocation11 + $0x20] ss:$0 sm:$0xff]
    %v210 = vld [vmem:[#allocation11 + $0x21] ss:$0 sm:$0xff]
    %v211 = vld [vmem:[#allocation5] sm:$0xff]
    %v212 = vld [vmem:[#allocation5 + $0x8] sm:$0xff]
    %v213 = vld [vmem:[#allocation5 + $0x10] sm:$0xff]
    %v214 = vld [vmem:[#allocation5 + $0x18] sm:$0xff]
    %v215 = vld [vmem:[#allocation5 + $0x20] sm:$0xff]
    %v216 = vld [vmem:[#allocation5 + $0x28] sm:$0xff]
    %v217 = vld [vmem:[#allocation5 + $0x30] sm:$0xff]
    %v218 = vld [vmem:[#allocation5 + $0x38] sm:$0xff]
    %v219 = vld [vmem:[#allocation5 + $0x40] sm:$0xff]
    %v220 = vld [vmem:[#allocation5 + $0x48] sm:$0xff]
    %v221 = vld [vmem:[#allocation5 + $0x50] sm:$0xff]
    %v222 = vld [vmem:[#allocation5 + $0x58] sm:$0xff]
    %v223 = vld [vmem:[#allocation5 + $0x60] sm:$0xff]
    %v224 = vld [vmem:[#allocation5 + $0x68] sm:$0xff]
    %v225 = vld [vmem:[#allocation5 + $0x70] sm:$0xff]
    %v226 = vld [vmem:[#allocation5 + $0x78] sm:$0xff]
    %v227 = vld [vmem:[#allocation5 + $0x80] sm:$0xff]
    %v228 = vld [vmem:[#allocation5 + $0x88] sm:$0xff]
    %v229 = vld [vmem:[#allocation5 + $0x90] sm:$0xff]
    %v230 = vld [vmem:[#allocation5 + $0x98] sm:$0xff]
    %v231 = vld [vmem:[#allocation5 + $0xa0] sm:$0xff]
    %v232 = vld [vmem:[#allocation5 + $0xa8] sm:$0xff]
    %v233 = vld [vmem:[#allocation5 + $0xb0] sm:$0xff]
    %v234 = vld [vmem:[#allocation5 + $0xb8] sm:$0xff]
    %v235 = vld [vmem:[#allocation5 + $0xc0] sm:$0xff]
    %v236 = vld [vmem:[#allocation5 + $0xc8] sm:$0xff]
    %v237 = vld [vmem:[#allocation5 + $0xd0] sm:$0xff]
    %v238 = vld [vmem:[#allocation5 + $0xd8] sm:$0xff]
    %v239 = vld [vmem:[#allocation5 + $0xe0] sm:$0xff]
    %v240 = vld [vmem:[#allocation5 + $0xe8] sm:$0xff]
    %v241 = vld [vmem:[#allocation5 + $0xf0] sm:$0xff]
    %v242 = vld [vmem:[#allocation5 + $0xf8] sm:$0xff]
    %v243 = vld [vmem:[#allocation5 + $0x100] sm:$0xff]
    %v244 = vld [vmem:[#allocation5 + $0x108] sm:$0xff]
    %v245 = vld [vmem:[#allocation5 + $0x110] sm:$0xff]
    %v246 = vld [vmem:[#allocation5 + $0x118] sm:$0xff]
    %v247 = vld [vmem:[#allocation5 + $0x120] sm:$0xff]
    %v248 = vld [vmem:[#allocation5 + $0x128] sm:$0xff]
    %v249 = vld [vmem:[#allocation5 + $0x130] sm:$0xff]
    %v250 = vld [vmem:[#allocation5 + $0x138] sm:$0xff]
    %v251 = vld [vmem:[#allocation5 + $0x140] sm:$0xff]
    %v252 = vld [vmem:[#allocation5 + $0x148] sm:$0xff]
    %v253 = vld [vmem:[#allocation5 + $0x150] sm:$0xff]
    %v254 = vld [vmem:[#allocation5 + $0x158] sm:$0xff]
    %v255 = vld [vmem:[#allocation5 + $0x160] sm:$0xff]
    %v256 = vld [vmem:[#allocation5 + $0x168] sm:$0xff]
    %v257 = vld [vmem:[#allocation5 + $0x170] sm:$0xff]
    %v258 = vld [vmem:[#allocation5 + $0x178] sm:$0xff]
    %v259 = vld [vmem:[#allocation5 + $0x180] sm:$0xff]
    %v260 = vld [vmem:[#allocation5 + $0x188] sm:$0xff]
    %v261 = vld [vmem:[#allocation5 + $0x190] sm:$0xff]
    %v262 = vld [vmem:[#allocation5 + $0x198] sm:$0xff]
    %v263 = vld [vmem:[#allocation5 + $0x1a0] sm:$0xff]
    %v264 = vld [vmem:[#allocation5 + $0x1a8] sm:$0xff]
    %v265 = vld [vmem:[#allocation5 + $0x1b0] sm:$0xff]
    %v266 = vld [vmem:[#allocation5 + $0x1b8] sm:$0xff]
    %v267 = vld [vmem:[#allocation5 + $0x1c0] sm:$0xff]
    %v268 = vld [vmem:[#allocation5 + $0x1c8] sm:$0xff]
    %v269 = vld [vmem:[#allocation5 + $0x1d0] sm:$0xff]
    %v270 = vld [vmem:[#allocation5 + $0x1d8] sm:$0xff]
    %v271 = vld [vmem:[#allocation5 + $0x1e0] sm:$0xff]
    %v272 = vld [vmem:[#allocation5 + $0x1e8] sm:$0xff]
    %v273 = vld [vmem:[#allocation5 + $0x1f0] sm:$0xff]
    %v274 = vld [vmem:[#allocation5 + $0x1f8] sm:$0xff]
    %v275 = vld [vmem:[#allocation5 + $0x200] sm:$0xff]
    %v276 = vld [vmem:[#allocation5 + $0x208] sm:$0xff]
    %v277 = vld [vmem:[#allocation5 + $0x210] sm:$0xff]
    %v278 = vld [vmem:[#allocation5 + $0x218] sm:$0xff]
    %v279 = vld [vmem:[#allocation5 + $0x220] sm:$0xff]
    %v280 = vld [vmem:[#allocation5 + $0x228] sm:$0xff]
    %v281 = vld [vmem:[#allocation5 + $0x230] sm:$0xff]
    %v282 = vld [vmem:[#allocation5 + $0x238] sm:$0xff]
    %v283 = vld [vmem:[#allocation5 + $0x240] sm:$0xff]
    %v284 = vld [vmem:[#allocation5 + $0x248] sm:$0xff]
    %v285 = vld [vmem:[#allocation5 + $0x250] sm:$0xff]
    %v286 = vld [vmem:[#allocation5 + $0x258] sm:$0xff]
    %v287 = vld [vmem:[#allocation5 + $0x260] sm:$0xff]
    %v288 = vld [vmem:[#allocation5 + $0x268] sm:$0xff]
    %v289 = vld [vmem:[#allocation5 + $0x270] sm:$0xff]
    %v290 = vld [vmem:[#allocation5 + $0x278] sm:$0xff]
    %v291 = vld [vmem:[#allocation5 + $0x280] sm:$0xff]
    %v292 = vld [vmem:[#allocation5 + $0x288] sm:$0xff]
    %v293 = vld [vmem:[#allocation5 + $0x290] sm:$0xff]
    %v294 = vld [vmem:[#allocation5 + $0x298] sm:$0xff]
    %v295 = vld [vmem:[#allocation5 + $0x2a0] sm:$0xff]
    %v296 = vld [vmem:[#allocation5 + $0x2a8] sm:$0xff]
    %v297 = vld [vmem:[#allocation5 + $0x2b0] sm:$0xff]
    %v298 = vld [vmem:[#allocation5 + $0x2b8] sm:$0xff]
    %v299 = vld [vmem:[#allocation5 + $0x2c0] sm:$0xff]
    %v300 = vld [vmem:[#allocation5 + $0x2c8] sm:$0xff]
    %v301 = vld [vmem:[#allocation5 + $0x2d0] sm:$0xff]
    %v302 = vld [vmem:[#allocation5 + $0x2d8] sm:$0xff]
    %v303 = vld [vmem:[#allocation5 + $0x2e0] sm:$0xff]
    %v304 = vld [vmem:[#allocation5 + $0x2e8] sm:$0xff]
    %v305 = vld [vmem:[#allocation5 + $0x2f0] sm:$0xff]
    %v306 = vld [vmem:[#allocation5 + $0x2f8] sm:$0xff]
    %v307 = vld [vmem:[#allocation5 + $0x300] sm:$0xff]
    %v308 = vld [vmem:[#allocation5 + $0x308] sm:$0xff]
    %v309 = vld [vmem:[#allocation5 + $0x310] sm:$0xff]
    %v310 = vld [vmem:[#allocation5 + $0x318] sm:$0xff]
    %v311 = vld [vmem:[#allocation5 + $0x320] sm:$0xff]
    %v312 = vld [vmem:[#allocation5 + $0x328] sm:$0xff]
    %v313 = vld [vmem:[#allocation5 + $0x330] sm:$0xff]
    %v314 = vld [vmem:[#allocation5 + $0x338] sm:$0xff]
    %v315 = vld [vmem:[#allocation5 + $0x340] sm:$0xff]
    %v316 = vld [vmem:[#allocation5 + $0x348] sm:$0xff]
    %v317 = vld [vmem:[#allocation5 + $0x350] sm:$0xff]
    %v318 = vld [vmem:[#allocation5 + $0x358] sm:$0xff]
    %v319 = vld [vmem:[#allocation5 + $0x360] sm:$0xff]
    %v320 = vld [vmem:[#allocation5 + $0x368] sm:$0xff]
    %v321 = vld [vmem:[#allocation5 + $0x370] sm:$0xff]
    %v322 = vld [vmem:[#allocation5 + $0x378] sm:$0xff]
    %v323 = vld [vmem:[#allocation5 + $0x380] sm:$0xff]
    %v324 = vld [vmem:[#allocation5 + $0x388] sm:$0xff]
    %v325 = vld [vmem:[#allocation5 + $0x390] sm:$0xff]
    %v326 = vld [vmem:[#allocation5 + $0x398] sm:$0xff]
    %v327 = vld [vmem:[#allocation5 + $0x3a0] sm:$0xff]
    %v328 = vld [vmem:[#allocation5 + $0x3a8] sm:$0xff]
    %v329 = vld [vmem:[#allocation5 + $0x3b0] sm:$0xff]
    %v330 = vld [vmem:[#allocation5 + $0x3b8] sm:$0xff]
    %v331 = vld [vmem:[#allocation5 + $0x3c0] sm:$0xff]
    %v332 = vld [vmem:[#allocation5 + $0x3c8] sm:$0xff]
    %v333 = vld [vmem:[#allocation5 + $0x3d0] sm:$0xff]
    %v334 = vld [vmem:[#allocation5 + $0x3d8] sm:$0xff]
    %v335 = vld [vmem:[#allocation5 + $0x3e0] sm:$0xff]
    %v336 = vld [vmem:[#allocation5 + $0x3e8] sm:$0xff]
    %v337 = vld [vmem:[#allocation5 + $0x3f0] sm:$0xff]
    %v338 = vld [vmem:[#allocation5 + $0x3f8] sm:$0xff]
    %v339 = vld [vmem:[#allocation5 + $0x400] sm:$0xff]
    %v340 = vld [vmem:[#allocation5 + $0x408] sm:$0xff]
    %v341 = vld [vmem:[#allocation5 + $0x410] sm:$0xff]
    %v342 = vld [vmem:[#allocation5 + $0x418] sm:$0xff]
    %v343 = vld [vmem:[#allocation5 + $0x420] sm:$0xff]
    %v344 = vld [vmem:[#allocation5 + $0x428] sm:$0xff]
    %v345 = vld [vmem:[#allocation5 + $0x430] sm:$0xff]
    %v346 = vld [vmem:[#allocation5 + $0x438] sm:$0xff]
    %v347 = vld [vmem:[#allocation5 + $0x440] sm:$0xff]
    %v348 = vld [vmem:[#allocation5 + $0x448] sm:$0xff]
    %v349 = vld [vmem:[#allocation5 + $0x450] sm:$0xff]
    %v350 = vld [vmem:[#allocation5 + $0x458] sm:$0xff]
    %v351 = vld [vmem:[#allocation5 + $0x460] sm:$0xff]
    %v352 = vld [vmem:[#allocation5 + $0x468] sm:$0xff]
    %v353 = vld [vmem:[#allocation5 + $0x470] sm:$0xff]
    %v354 = vld [vmem:[#allocation5 + $0x478] sm:$0xff]
    %v355 = vld [vmem:[#allocation5 + $0x480] sm:$0xff]
    %v356 = vld [vmem:[#allocation5 + $0x488] sm:$0xff]
    %v357 = vld [vmem:[#allocation5 + $0x490] sm:$0xff]
    %v358 = vld [vmem:[#allocation5 + $0x498] sm:$0xff]
    %v359 = vld [vmem:[#allocation5 + $0x4a0] sm:$0xff]
    %v360 = vld [vmem:[#allocation5 + $0x4a8] sm:$0xff]
    %v361 = vld [vmem:[#allocation5 + $0x4b0] sm:$0xff]
    %v362 = vld [vmem:[#allocation5 + $0x4b8] sm:$0xff]
    %v363 = vld [vmem:[#allocation5 + $0x4c0] sm:$0xff]
    %v364 = vld [vmem:[#allocation5 + $0x4c8] sm:$0xff]
    %v365 = vld [vmem:[#allocation5 + $0x4d0] sm:$0xff]
    %v366 = vld [vmem:[#allocation5 + $0x4d8] sm:$0xff]
    %v367 = vld [vmem:[#allocation5 + $0x4e0] sm:$0xff]
    %v368 = vld [vmem:[#allocation5 + $0x4e8] sm:$0xff]
    %v369 = vld [vmem:[#allocation5 + $0x4f0] sm:$0xff]
    %v370 = vld [vmem:[#allocation5 + $0x4f8] sm:$0xff]
    %v371 = vld [vmem:[#allocation5 + $0x500] sm:$0xff]
    %v372 = vld [vmem:[#allocation5 + $0x508] sm:$0xff]
    %v373 = vld [vmem:[#allocation5 + $0x510] sm:$0xff]
    %v374 = vld [vmem:[#allocation5 + $0x518] sm:$0xff]
    %v375 = vld [vmem:[#allocation5 + $0x520] sm:$0xff]
    %v376 = vld [vmem:[#allocation5 + $0x528] sm:$0xff]
    %v377 = vld [vmem:[#allocation5 + $0x530] sm:$0xff]
    %v378 = vld [vmem:[#allocation5 + $0x538] sm:$0xff]
    %v379 = vld [vmem:[#allocation5 + $0x540] sm:$0xff]
    %v380 = vld [vmem:[#allocation5 + $0x548] sm:$0xff]
    %v381 = vld [vmem:[#allocation5 + $0x550] sm:$0xff]
    %v382 = vld [vmem:[#allocation5 + $0x558] sm:$0xff]
    %v383 = vld [vmem:[#allocation5 + $0x560] sm:$0xff]
    %v384 = vld [vmem:[#allocation5 + $0x568] sm:$0xff]
    %v385 = vld [vmem:[#allocation5 + $0x570] sm:$0xff]
    %v386 = vld [vmem:[#allocation5 + $0x578] sm:$0xff]
    %v387 = vld [vmem:[#allocation5 + $0x580] sm:$0xff]
    %v388 = vld [vmem:[#allocation5 + $0x588] sm:$0xff]
    %v389 = vld [vmem:[#allocation5 + $0x590] sm:$0xff]
    %v390 = vld [vmem:[#allocation5 + $0x598] sm:$0xff]
    %v391 = vld [vmem:[#allocation5 + $0x5a0] sm:$0xff]
    %v392 = vld [vmem:[#allocation5 + $0x5a8] sm:$0xff]
    %v393 = vld [vmem:[#allocation5 + $0x5b0] sm:$0xff]
    %v394 = vld [vmem:[#allocation5 + $0x5b8] sm:$0xff]
    %v395 = vld [vmem:[#allocation5 + $0x5c0] sm:$0xff]
    %v396 = vld [vmem:[#allocation5 + $0x5c8] sm:$0xff]
    %v397 = vld [vmem:[#allocation5 + $0x5d0] sm:$0xff]
    %v398 = vld [vmem:[#allocation5 + $0x5d8] sm:$0xff]
    %v399 = vld [vmem:[#allocation5 + $0x5e0] sm:$0xff]
    %v400 = vld [vmem:[#allocation5 + $0x5e8] sm:$0xff]
    %v401 = vld [vmem:[#allocation5 + $0x5f0] sm:$0xff]
    %v402 = vld [vmem:[#allocation5 + $0x5f8] sm:$0xff]
    %v403 = vld [vmem:[#allocation5 + $0x600] sm:$0xff]
    %v404 = vld [vmem:[#allocation5 + $0x608] sm:$0xff]
    %v405 = vld [vmem:[#allocation5 + $0x610] sm:$0xff]
    %v406 = vld [vmem:[#allocation5 + $0x618] sm:$0xff]
    %v407 = vld [vmem:[#allocation5 + $0x620] sm:$0xff]
    %v408 = vld [vmem:[#allocation5 + $0x628] sm:$0xff]
    %v409 = vld [vmem:[#allocation5 + $0x630] sm:$0xff]
    %v410 = vld [vmem:[#allocation5 + $0x638] sm:$0xff]
    %v411 = vld [vmem:[#allocation5 + $0x640] sm:$0xff]
    %v412 = vld [vmem:[#allocation5 + $0x648] sm:$0xff]
    %v413 = vld [vmem:[#allocation5 + $0x650] sm:$0xff]
    %v414 = vld [vmem:[#allocation5 + $0x658] sm:$0xff]
    %v415 = vld [vmem:[#allocation5 + $0x660] sm:$0xff]
    %v416 = vld [vmem:[#allocation5 + $0x668] sm:$0xff]
    %v417 = vld [vmem:[#allocation5 + $0x670] sm:$0xff]
    %v418 = vld [vmem:[#allocation5 + $0x678] sm:$0xff]
    %v419 = vld [vmem:[#allocation5 + $0x680] sm:$0xff]
    %v420 = vld [vmem:[#allocation5 + $0x688] sm:$0xff]
    %v421 = vld [vmem:[#allocation5 + $0x690] sm:$0xff]
    %v422 = vld [vmem:[#allocation5 + $0x698] sm:$0xff]
    %v423 = vld [vmem:[#allocation5 + $0x6a0] sm:$0xff]
    %v424 = vld [vmem:[#allocation5 + $0x6a8] sm:$0xff]
    %v425 = vld [vmem:[#allocation5 + $0x6b0] sm:$0xff]
    %v426 = vld [vmem:[#allocation5 + $0x6b8] sm:$0xff]
    %v427 = vld [vmem:[#allocation5 + $0x6c0] sm:$0xff]
    %v428 = vld [vmem:[#allocation5 + $0x6c8] sm:$0xff]
    %v429 = vld [vmem:[#allocation5 + $0x6d0] sm:$0xff]
    %v430 = vld [vmem:[#allocation5 + $0x6d8] sm:$0xff]
    %v431 = vld [vmem:[#allocation5 + $0x6e0] sm:$0xff]
    %v432 = vld [vmem:[#allocation5 + $0x6e8] sm:$0xff]
    %v433 = vld [vmem:[#allocation5 + $0x6f0] sm:$0xff]
    %v434 = vld [vmem:[#allocation5 + $0x6f8] sm:$0xff]
    %v435 = vld [vmem:[#allocation5 + $0x700] sm:$0xff]
    %v436 = vld [vmem:[#allocation5 + $0x708] sm:$0xff]
    %v437 = vld [vmem:[#allocation5 + $0x710] sm:$0xff]
    %v438 = vld [vmem:[#allocation5 + $0x718] sm:$0xff]
    %v439 = vld [vmem:[#allocation5 + $0x720] sm:$0xff]
    %v440 = vld [vmem:[#allocation5 + $0x728] sm:$0xff]
    %v441 = vld [vmem:[#allocation5 + $0x730] sm:$0xff]
    %v442 = vld [vmem:[#allocation5 + $0x738] sm:$0xff]
    %v443 = vld [vmem:[#allocation5 + $0x740] sm:$0xff]
    %v444 = vld [vmem:[#allocation5 + $0x748] sm:$0xff]
    %v445 = vld [vmem:[#allocation5 + $0x750] sm:$0xff]
    %v446 = vld [vmem:[#allocation5 + $0x758] sm:$0xff]
    %v447 = vld [vmem:[#allocation5 + $0x760] sm:$0xff]
    %v448 = vld [vmem:[#allocation5 + $0x768] sm:$0xff]
    %v449 = vld [vmem:[#allocation5 + $0x770] sm:$0xff]
    %v450 = vld [vmem:[#allocation5 + $0x778] sm:$0xff]
    %v451 = vld [vmem:[#allocation5 + $0x780] sm:$0xff]
    %v452 = vld [vmem:[#allocation5 + $0x788] sm:$0xff]
    %v453 = vld [vmem:[#allocation5 + $0x790] sm:$0xff]
    %v454 = vld [vmem:[#allocation5 + $0x798] sm:$0xff]
    %v455 = vld [vmem:[#allocation5 + $0x7a0] sm:$0xff]
    %v456 = vld [vmem:[#allocation5 + $0x7a8] sm:$0xff]
    %v457 = vld [vmem:[#allocation5 + $0x7b0] sm:$0xff]
    %v458 = vld [vmem:[#allocation5 + $0x7b8] sm:$0xff]
    %v459 = vld [vmem:[#allocation5 + $0x7c0] sm:$0xff]
    %v460 = vld [vmem:[#allocation5 + $0x7c8] sm:$0xff]
    %v461 = vld [vmem:[#allocation5 + $0x7d0] sm:$0xff]
    %v462 = vld [vmem:[#allocation5 + $0x7d8] sm:$0xff]
    %v463 = vld [vmem:[#allocation5 + $0x7e0] sm:$0xff]
    %v464 = vld [vmem:[#allocation5 + $0x7e8] sm:$0xff]
    %v465 = vld [vmem:[#allocation5 + $0x7f0] sm:$0xff]
    %v466 = vld [vmem:[#allocation5 + $0x7f8] sm:$0xff]
    %v467 = vld [vmem:[#allocation5 + $0x800] sm:$0xff]
    %v468 = vld [vmem:[#allocation5 + $0x808] sm:$0xff]
    %v469 = vld [vmem:[#allocation5 + $0x810] sm:$0xff]
    %v470 = vld [vmem:[#allocation5 + $0x818] sm:$0xff]
    %v471 = vld [vmem:[#allocation5 + $0x820] sm:$0xff]
    %v472 = vld [vmem:[#allocation5 + $0x828] sm:$0xff]
    %v473 = vld [vmem:[#allocation5 + $0x830] sm:$0xff]
    %v474 = vld [vmem:[#allocation5 + $0x838] sm:$0xff]
    %v475 = vld [vmem:[#allocation5 + $0x840] sm:$0xff]
    %v476 = vld [vmem:[#allocation5 + $0x848] sm:$0xff]
    %v477 = vld [vmem:[#allocation5 + $0x850] sm:$0xff]
    %v478 = vld [vmem:[#allocation5 + $0x858] sm:$0xff]
    %v479 = vld [vmem:[#allocation5 + $0x860] sm:$0xff]
    %v480 = vld [vmem:[#allocation5 + $0x868] sm:$0xff]
    %v481 = vld [vmem:[#allocation5 + $0x870] sm:$0xff]
    %v482 = vld [vmem:[#allocation5 + $0x878] sm:$0xff]
    %v483 = vld [vmem:[#allocation5 + $0x880] sm:$0xff]
    %v484 = vld [vmem:[#allocation5 + $0x888] sm:$0xff]
    %v485 = vld [vmem:[#allocation5 + $0x890] sm:$0xff]
    %v486 = vld [vmem:[#allocation5 + $0x898] sm:$0xff]
    %v487 = vld [vmem:[#allocation5 + $0x8a0] sm:$0xff]
    %v488 = vld [vmem:[#allocation5 + $0x8a8] sm:$0xff]
    %v489 = vld [vmem:[#allocation5 + $0x8b0] sm:$0xff]
    %v490 = vld [vmem:[#allocation5 + $0x8b8] sm:$0xff]
    %v491 = vld [vmem:[#allocation5 + $0x8c0] sm:$0xff]
    %v492 = vld [vmem:[#allocation5 + $0x8c8] sm:$0xff]
    %v493 = vld [vmem:[#allocation5 + $0x8d0] sm:$0xff]
    %v494 = vld [vmem:[#allocation5 + $0x8d8] sm:$0xff]
    %v495 = vld [vmem:[#allocation5 + $0x8e0] sm:$0xff]
    %v496 = vld [vmem:[#allocation5 + $0x8e8] sm:$0xff]
    %v497 = vld [vmem:[#allocation5 + $0x8f0] sm:$0xff]
    %v498 = vld [vmem:[#allocation5 + $0x8f8] sm:$0xff]
    %v500 = vperm.slane %v196, 0
    %v501 = vperm.slane %v196, 1
    %v502 = vperm.slane %v196, 2
    %v503 = vperm.slane %v196, 3
    %v588 = vunpack.c.l.b16 %v116
    %v589 = vunpack.c.h.b16 %v116
    %v590 = vunpack.c.l.b16 %v117
    %v591 = vunpack.c.h.b16 %v117
    %v592 = vunpack.c.l.b16 %v118
    %v593 = vunpack.c.h.b16 %v118
    %v594 = vunpack.c.l.b16 %v119
    %v595 = vunpack.c.h.b16 %v119
    %v596 = vunpack.c.l.b16 %v120
    %v597 = vunpack.c.l.b16 %v121
    %v598 = vunpack.c.h.b16 %v121
    %v599 = vunpack.c.l.b16 %v122
    %v600 = vunpack.c.h.b16 %v122
    %v601 = vunpack.c.l.b16 %v123
    %v602 = vunpack.c.h.b16 %v123
    %v603 = vunpack.c.l.b16 %v124
    %v604 = vunpack.c.h.b16 %v124
    %v605 = vunpack.c.l.b16 %v125
    %v606 = vunpack.c.l.b16 %v126
    %v607 = vunpack.c.h.b16 %v126
    %v608 = vunpack.c.l.b16 %v127
    %v609 = vunpack.c.h.b16 %v127
    %v610 = vunpack.c.l.b16 %v128
    %v611 = vunpack.c.h.b16 %v128
    %v612 = vunpack.c.l.b16 %v129
    %v613 = vunpack.c.h.b16 %v129
    %v614 = vunpack.c.l.b16 %v130
    %v615 = vunpack.c.l.b16 %v131
    %v616 = vunpack.c.h.b16 %v131
    %v617 = vunpack.c.l.b16 %v132
    %v618 = vunpack.c.h.b16 %v132
    %v619 = vunpack.c.l.b16 %v133
    %v620 = vunpack.c.h.b16 %v133
    %v621 = vunpack.c.l.b16 %v134
    %v622 = vunpack.c.h.b16 %v134
    %v623 = vunpack.c.l.b16 %v135
    %v624 = vunpack.c.l.b16 %v136
    %v625 = vunpack.c.h.b16 %v136
    %v626 = vunpack.c.l.b16 %v137
    %v627 = vunpack.c.h.b16 %v137
    %v628 = vunpack.c.l.b16 %v138
    %v629 = vunpack.c.h.b16 %v138
    %v630 = vunpack.c.l.b16 %v139
    %v631 = vunpack.c.h.b16 %v139
    %v632 = vunpack.c.l.b16 %v140
    %v633 = vunpack.c.l.b16 %v141
    %v634 = vunpack.c.h.b16 %v141
    %v635 = vunpack.c.l.b16 %v142
    %v636 = vunpack.c.h.b16 %v142
    %v637 = vunpack.c.l.b16 %v143
    %v638 = vunpack.c.h.b16 %v143
    %v639 = vunpack.c.l.b16 %v144
    %v640 = vunpack.c.h.b16 %v144
    %v641 = vunpack.c.l.b16 %v145
    %v642 = vunpack.c.l.b16 %v146
    %v643 = vunpack.c.h.b16 %v146
    %v644 = vunpack.c.l.b16 %v147
    %v645 = vunpack.c.h.b16 %v147
    %v646 = vunpack.c.l.b16 %v148
    %v647 = vunpack.c.h.b16 %v148
    %v648 = vunpack.c.l.b16 %v149
    %v649 = vunpack.c.h.b16 %v149
    %v650 = vunpack.c.l.b16 %v150
    %v651 = vunpack.c.l.b16 %v151
    %v652 = vunpack.c.h.b16 %v151
    %v653 = vunpack.c.l.b16 %v152
    %v654 = vunpack.c.h.b16 %v152
    %v655 = vunpack.c.l.b16 %v153
    %v656 = vunpack.c.h.b16 %v153
    %v657 = vunpack.c.l.b16 %v154
    %v658 = vunpack.c.h.b16 %v154
    %v659 = vunpack.c.l.b16 %v155
    %v660 = vunpack.c.l.b16 %v156
    %v661 = vunpack.c.h.b16 %v156
    %v662 = vunpack.c.l.b16 %v157
    %v663 = vunpack.c.h.b16 %v157
    %v664 = vunpack.c.l.b16 %v158
    %v665 = vunpack.c.h.b16 %v158
    %v666 = vunpack.c.l.b16 %v159
    %v667 = vunpack.c.h.b16 %v159
    %v668 = vunpack.c.l.b16 %v160
    %v669 = vunpack.c.l.b16 %v161
    %v670 = vunpack.c.h.b16 %v161
    %v671 = vunpack.c.l.b16 %v162
    %v672 = vunpack.c.h.b16 %v162
    %v673 = vunpack.c.l.b16 %v163
    %v674 = vunpack.c.h.b16 %v163
    %v675 = vunpack.c.l.b16 %v164
    %v676 = vunpack.c.h.b16 %v164
    %v677 = vunpack.c.l.b16 %v165
    %v678 = vunpack.c.l.b16 %v166
    %v679 = vunpack.c.h.b16 %v166
    %v680 = vunpack.c.l.b16 %v167
    %v681 = vunpack.c.h.b16 %v167
    %v682 = vunpack.c.l.b16 %v168
    %v683 = vunpack.c.h.b16 %v168
    %v684 = vunpack.c.l.b16 %v169
    %v685 = vunpack.c.h.b16 %v169
    %v686 = vunpack.c.l.b16 %v170
    %v687 = vunpack.c.l.b16 %v171
    %v688 = vunpack.c.h.b16 %v171
    %v689 = vunpack.c.l.b16 %v172
    %v690 = vunpack.c.h.b16 %v172
    %v691 = vunpack.c.l.b16 %v173
    %v692 = vunpack.c.h.b16 %v173
    %v693 = vunpack.c.l.b16 %v174
    %v694 = vunpack.c.h.b16 %v174
    %v695 = vunpack.c.l.b16 %v175
    %v696 = vunpack.c.l.b16 %v176
    %v697 = vunpack.c.h.b16 %v176
    %v698 = vunpack.c.l.b16 %v177
    %v699 = vunpack.c.h.b16 %v177
    %v700 = vunpack.c.l.b16 %v178
    %v701 = vunpack.c.h.b16 %v178
    %v702 = vunpack.c.l.b16 %v179
    %v703 = vunpack.c.h.b16 %v179
    %v704 = vunpack.c.l.b16 %v180
    %v705 = vunpack.c.l.b16 %v181
    %v706 = vunpack.c.h.b16 %v181
    %v707 = vunpack.c.l.b16 %v182
    %v708 = vunpack.c.h.b16 %v182
    %v709 = vunpack.c.l.b16 %v183
    %v710 = vunpack.c.h.b16 %v183
    %v711 = vunpack.c.l.b16 %v184
    %v712 = vunpack.c.h.b16 %v184
    %v713 = vunpack.c.l.b16 %v185
    %v714 = vunpack.c.l.b16 %v186
    %v715 = vunpack.c.h.b16 %v186
    %v716 = vunpack.c.l.b16 %v187
    %v717 = vunpack.c.h.b16 %v187
    %v718 = vunpack.c.l.b16 %v188
    %v719 = vunpack.c.h.b16 %v188
    %v720 = vunpack.c.l.b16 %v189
    %v721 = vunpack.c.h.b16 %v189
    %v722 = vunpack.c.l.b16 %v190
    %v723 = vunpack.c.l.b16 %v191
    %v724 = vunpack.c.h.b16 %v191
    %v725 = vunpack.c.l.b16 %v192
    %v726 = vunpack.c.h.b16 %v192
    %v727 = vunpack.c.l.b16 %v193
    %v728 = vunpack.c.h.b16 %v193
    %v729 = vunpack.c.l.b16 %v194
    %v730 = vunpack.c.h.b16 %v194
    %v731 = vunpack.c.l.b16 %v195
    %v732 = vpack.c.b16 %v597, %v588
    %v733 = vpack.c.b16 %v598, %v589
    %v734 = vpack.c.b16 %v599, %v590
    %v735 = vpack.c.b16 %v600, %v591
    %v736 = vpack.c.b16 %v601, %v592
    %v737 = vpack.c.b16 %v602, %v593
    %v738 = vpack.c.b16 %v603, %v594
    %v739 = vpack.c.b16 %v604, %v595
    %v740 = vpack.c.b16 %v605, %v596
    %v741 = vpack.c.b16 %v615, %v606
    %v742 = vpack.c.b16 %v616, %v607
    %v743 = vpack.c.b16 %v617, %v608
    %v744 = vpack.c.b16 %v618, %v609
    %v745 = vpack.c.b16 %v619, %v610
    %v746 = vpack.c.b16 %v620, %v611
    %v747 = vpack.c.b16 %v621, %v612
    %v748 = vpack.c.b16 %v622, %v613
    %v749 = vpack.c.b16 %v623, %v614
    %v750 = vpack.c.b16 %v633, %v624
    %v751 = vpack.c.b16 %v634, %v625
    %v752 = vpack.c.b16 %v635, %v626
    %v753 = vpack.c.b16 %v636, %v627
    %v754 = vpack.c.b16 %v637, %v628
    %v755 = vpack.c.b16 %v638, %v629
    %v756 = vpack.c.b16 %v639, %v630
    %v757 = vpack.c.b16 %v640, %v631
    %v758 = vpack.c.b16 %v641, %v632
    %v759 = vpack.c.b16 %v651, %v642
    %v760 = vpack.c.b16 %v652, %v643
    %v761 = vpack.c.b16 %v653, %v644
    %v762 = vpack.c.b16 %v654, %v645
    %v763 = vpack.c.b16 %v655, %v646
    %v764 = vpack.c.b16 %v656, %v647
    %v765 = vpack.c.b16 %v657, %v648
    %v766 = vpack.c.b16 %v658, %v649
    %v767 = vpack.c.b16 %v659, %v650
    %v768 = vpack.c.b16 %v669, %v660
    %v769 = vpack.c.b16 %v670, %v661
    %v770 = vpack.c.b16 %v671, %v662
    %v771 = vpack.c.b16 %v672, %v663
    %v772 = vpack.c.b16 %v673, %v664
    %v773 = vpack.c.b16 %v674, %v665
    %v774 = vpack.c.b16 %v675, %v666
    %v775 = vpack.c.b16 %v676, %v667
    %v776 = vpack.c.b16 %v677, %v668
    %v777 = vpack.c.b16 %v687, %v678
    %v778 = vpack.c.b16 %v688, %v679
    %v779 = vpack.c.b16 %v689, %v680
    %v780 = vpack.c.b16 %v690, %v681
    %v781 = vpack.c.b16 %v691, %v682
    %v782 = vpack.c.b16 %v692, %v683
    %v783 = vpack.c.b16 %v693, %v684
    %v784 = vpack.c.b16 %v694, %v685
    %v785 = vpack.c.b16 %v695, %v686
    %v786 = vpack.c.b16 %v705, %v696
    %v787 = vpack.c.b16 %v706, %v697
    %v788 = vpack.c.b16 %v707, %v698
    %v789 = vpack.c.b16 %v708, %v699
    %v790 = vpack.c.b16 %v709, %v700
    %v791 = vpack.c.b16 %v710, %v701
    %v792 = vpack.c.b16 %v711, %v702
    %v793 = vpack.c.b16 %v712, %v703
    %v794 = vpack.c.b16 %v713, %v704
    %v795 = vpack.c.b16 %v723, %v714
    %v796 = vpack.c.b16 %v724, %v715
    %v797 = vpack.c.b16 %v725, %v716
    %v798 = vpack.c.b16 %v726, %v717
    %v799 = vpack.c.b16 %v727, %v718
    %v800 = vpack.c.b16 %v728, %v719
    %v801 = vpack.c.b16 %v729, %v720
    %v802 = vpack.c.b16 %v730, %v721
    %v803 = vpack.c.b16 %v731, %v722
    %v1164 = vunpack.c.l.b16 %v211
    %v1165 = vunpack.c.h.b16 %v211
    %v1166 = vunpack.c.l.b16 %v212
    %v1167 = vunpack.c.h.b16 %v212
    %v1168 = vunpack.c.l.b16 %v213
    %v1169 = vunpack.c.h.b16 %v213
    %v1170 = vunpack.c.l.b16 %v214
    %v1171 = vunpack.c.h.b16 %v214
    %v1172 = vunpack.c.l.b16 %v215
    %v1173 = vunpack.c.h.b16 %v215
    %v1174 = vunpack.c.l.b16 %v216
    %v1175 = vunpack.c.h.b16 %v216
    %v1176 = vunpack.c.l.b16 %v217
    %v1177 = vunpack.c.h.b16 %v217
    %v1178 = vunpack.c.l.b16 %v218
    %v1179 = vunpack.c.h.b16 %v218
    %v1180 = vunpack.c.l.b16 %v219
    %v1181 = vunpack.c.h.b16 %v219
    %v1182 = vunpack.c.l.b16 %v220
    %v1183 = vunpack.c.h.b16 %v220
    %v1184 = vunpack.c.l.b16 %v221
    %v1185 = vunpack.c.h.b16 %v221
    %v1186 = vunpack.c.l.b16 %v222
    %v1187 = vunpack.c.h.b16 %v222
    %v1188 = vunpack.c.l.b16 %v223
    %v1189 = vunpack.c.h.b16 %v223
    %v1190 = vunpack.c.l.b16 %v224
    %v1191 = vunpack.c.h.b16 %v224
    %v1192 = vunpack.c.l.b16 %v225
    %v1193 = vunpack.c.h.b16 %v225
    %v1194 = vunpack.c.l.b16 %v226
    %v1195 = vunpack.c.h.b16 %v226
    %v1196 = vunpack.c.l.b16 %v227
    %v1197 = vunpack.c.h.b16 %v227
    %v1198 = vunpack.c.l.b16 %v228
    %v1199 = vunpack.c.h.b16 %v228
    %v1200 = vunpack.c.l.b16 %v229
    %v1201 = vunpack.c.h.b16 %v229
    %v1202 = vunpack.c.l.b16 %v230
    %v1203 = vunpack.c.h.b16 %v230
    %v1204 = vunpack.c.l.b16 %v231
    %v1205 = vunpack.c.h.b16 %v231
    %v1206 = vunpack.c.l.b16 %v232
    %v1207 = vunpack.c.h.b16 %v232
    %v1208 = vunpack.c.l.b16 %v233
    %v1209 = vunpack.c.h.b16 %v233
    %v1210 = vunpack.c.l.b16 %v234
    %v1211 = vunpack.c.h.b16 %v234
    %v1212 = vunpack.c.l.b16 %v235
    %v1213 = vunpack.c.h.b16 %v235
    %v1214 = vunpack.c.l.b16 %v236
    %v1215 = vunpack.c.h.b16 %v236
    %v1216 = vunpack.c.l.b16 %v237
    %v1217 = vunpack.c.h.b16 %v237
    %v1218 = vunpack.c.l.b16 %v238
    %v1219 = vunpack.c.h.b16 %v238
    %v1220 = vunpack.c.l.b16 %v239
    %v1221 = vunpack.c.h.b16 %v239
    %v1222 = vunpack.c.l.b16 %v240
    %v1223 = vunpack.c.h.b16 %v240
    %v1224 = vunpack.c.l.b16 %v241
    %v1225 = vunpack.c.h.b16 %v241
    %v1226 = vunpack.c.l.b16 %v242
    %v1227 = vunpack.c.h.b16 %v242
    %v1228 = vunpack.c.l.b16 %v243
    %v1229 = vunpack.c.h.b16 %v243
    %v1230 = vunpack.c.l.b16 %v244
    %v1231 = vunpack.c.h.b16 %v244
    %v1232 = vunpack.c.l.b16 %v245
    %v1233 = vunpack.c.h.b16 %v245
    %v1234 = vunpack.c.l.b16 %v246
    %v1235 = vunpack.c.h.b16 %v246
    %v1236 = vunpack.c.l.b16 %v247
    %v1237 = vunpack.c.h.b16 %v247
    %v1238 = vunpack.c.l.b16 %v248
    %v1239 = vunpack.c.h.b16 %v248
    %v1240 = vunpack.c.l.b16 %v249
    %v1241 = vunpack.c.h.b16 %v249
    %v1242 = vunpack.c.l.b16 %v250
    %v1243 = vunpack.c.h.b16 %v250
    %v1244 = vunpack.c.l.b16 %v251
    %v1245 = vunpack.c.h.b16 %v251
    %v1246 = vunpack.c.l.b16 %v252
    %v1247 = vunpack.c.h.b16 %v252
    %v1248 = vunpack.c.l.b16 %v253
    %v1249 = vunpack.c.h.b16 %v253
    %v1250 = vunpack.c.l.b16 %v254
    %v1251 = vunpack.c.h.b16 %v254
    %v1252 = vunpack.c.l.b16 %v255
    %v1253 = vunpack.c.h.b16 %v255
    %v1254 = vunpack.c.l.b16 %v256
    %v1255 = vunpack.c.h.b16 %v256
    %v1256 = vunpack.c.l.b16 %v257
    %v1257 = vunpack.c.h.b16 %v257
    %v1258 = vunpack.c.l.b16 %v258
    %v1259 = vunpack.c.h.b16 %v258
    %v1260 = vunpack.c.l.b16 %v259
    %v1261 = vunpack.c.h.b16 %v259
    %v1262 = vunpack.c.l.b16 %v260
    %v1263 = vunpack.c.h.b16 %v260
    %v1264 = vunpack.c.l.b16 %v261
    %v1265 = vunpack.c.h.b16 %v261
    %v1266 = vunpack.c.l.b16 %v262
    %v1267 = vunpack.c.h.b16 %v262
    %v1268 = vunpack.c.l.b16 %v263
    %v1269 = vunpack.c.h.b16 %v263
    %v1270 = vunpack.c.l.b16 %v264
    %v1271 = vunpack.c.h.b16 %v264
    %v1272 = vunpack.c.l.b16 %v265
    %v1273 = vunpack.c.h.b16 %v265
    %v1274 = vunpack.c.l.b16 %v266
    %v1275 = vunpack.c.h.b16 %v266
    %v1276 = vunpack.c.l.b16 %v267
    %v1277 = vunpack.c.h.b16 %v267
    %v1278 = vunpack.c.l.b16 %v268
    %v1279 = vunpack.c.h.b16 %v268
    %v1280 = vunpack.c.l.b16 %v269
    %v1281 = vunpack.c.h.b16 %v269
    %v1282 = vunpack.c.l.b16 %v270
    %v1283 = vunpack.c.h.b16 %v270
    %v1284 = vunpack.c.l.b16 %v271
    %v1285 = vunpack.c.h.b16 %v271
    %v1286 = vunpack.c.l.b16 %v272
    %v1287 = vunpack.c.h.b16 %v272
    %v1288 = vunpack.c.l.b16 %v273
    %v1289 = vunpack.c.h.b16 %v273
    %v1290 = vunpack.c.l.b16 %v274
    %v1291 = vunpack.c.h.b16 %v274
    %v1292 = vunpack.c.l.b16 %v275
    %v1293 = vunpack.c.h.b16 %v275
    %v1294 = vunpack.c.l.b16 %v276
    %v1295 = vunpack.c.h.b16 %v276
    %v1296 = vunpack.c.l.b16 %v277
    %v1297 = vunpack.c.h.b16 %v277
    %v1298 = vunpack.c.l.b16 %v278
    %v1299 = vunpack.c.h.b16 %v278
    %v1300 = vunpack.c.l.b16 %v279
    %v1301 = vunpack.c.h.b16 %v279
    %v1302 = vunpack.c.l.b16 %v280
    %v1303 = vunpack.c.h.b16 %v280
    %v1304 = vunpack.c.l.b16 %v281
    %v1305 = vunpack.c.h.b16 %v281
    %v1306 = vunpack.c.l.b16 %v282
    %v1307 = vunpack.c.h.b16 %v282
    %v1308 = vunpack.c.l.b16 %v283
    %v1309 = vunpack.c.h.b16 %v283
    %v1310 = vunpack.c.l.b16 %v284
    %v1311 = vunpack.c.h.b16 %v284
    %v1312 = vunpack.c.l.b16 %v285
    %v1313 = vunpack.c.h.b16 %v285
    %v1314 = vunpack.c.l.b16 %v286
    %v1315 = vunpack.c.h.b16 %v286
    %v1316 = vunpack.c.l.b16 %v287
    %v1317 = vunpack.c.h.b16 %v287
    %v1318 = vunpack.c.l.b16 %v288
    %v1319 = vunpack.c.h.b16 %v288
    %v1320 = vunpack.c.l.b16 %v289
    %v1321 = vunpack.c.h.b16 %v289
    %v1322 = vunpack.c.l.b16 %v290
    %v1323 = vunpack.c.h.b16 %v290
    %v1324 = vunpack.c.l.b16 %v291
    %v1325 = vunpack.c.h.b16 %v291
    %v1326 = vunpack.c.l.b16 %v292
    %v1327 = vunpack.c.h.b16 %v292
    %v1328 = vunpack.c.l.b16 %v293
    %v1329 = vunpack.c.h.b16 %v293
    %v1330 = vunpack.c.l.b16 %v294
    %v1331 = vunpack.c.h.b16 %v294
    %v1332 = vunpack.c.l.b16 %v295
    %v1333 = vunpack.c.h.b16 %v295
    %v1334 = vunpack.c.l.b16 %v296
    %v1335 = vunpack.c.h.b16 %v296
    %v1336 = vunpack.c.l.b16 %v297
    %v1337 = vunpack.c.h.b16 %v297
    %v1338 = vunpack.c.l.b16 %v298
    %v1339 = vunpack.c.h.b16 %v298
    %v1340 = vunpack.c.l.b16 %v299
    %v1341 = vunpack.c.h.b16 %v299
    %v1342 = vunpack.c.l.b16 %v300
    %v1343 = vunpack.c.h.b16 %v300
    %v1344 = vunpack.c.l.b16 %v301
    %v1345 = vunpack.c.h.b16 %v301
    %v1346 = vunpack.c.l.b16 %v302
    %v1347 = vunpack.c.h.b16 %v302
    %v1348 = vunpack.c.l.b16 %v303
    %v1349 = vunpack.c.h.b16 %v303
    %v1350 = vunpack.c.l.b16 %v304
    %v1351 = vunpack.c.h.b16 %v304
    %v1352 = vunpack.c.l.b16 %v305
    %v1353 = vunpack.c.h.b16 %v305
    %v1354 = vunpack.c.l.b16 %v306
    %v1355 = vunpack.c.h.b16 %v306
    %v1356 = vunpack.c.l.b16 %v307
    %v1357 = vunpack.c.h.b16 %v307
    %v1358 = vunpack.c.l.b16 %v308
    %v1359 = vunpack.c.h.b16 %v308
    %v1360 = vunpack.c.l.b16 %v309
    %v1361 = vunpack.c.h.b16 %v309
    %v1362 = vunpack.c.l.b16 %v310
    %v1363 = vunpack.c.h.b16 %v310
    %v1364 = vunpack.c.l.b16 %v311
    %v1365 = vunpack.c.h.b16 %v311
    %v1366 = vunpack.c.l.b16 %v312
    %v1367 = vunpack.c.h.b16 %v312
    %v1368 = vunpack.c.l.b16 %v313
    %v1369 = vunpack.c.h.b16 %v313
    %v1370 = vunpack.c.l.b16 %v314
    %v1371 = vunpack.c.h.b16 %v314
    %v1372 = vunpack.c.l.b16 %v315
    %v1373 = vunpack.c.h.b16 %v315
    %v1374 = vunpack.c.l.b16 %v316
    %v1375 = vunpack.c.h.b16 %v316
    %v1376 = vunpack.c.l.b16 %v317
    %v1377 = vunpack.c.h.b16 %v317
    %v1378 = vunpack.c.l.b16 %v318
    %v1379 = vunpack.c.h.b16 %v318
    %v1380 = vunpack.c.l.b16 %v319
    %v1381 = vunpack.c.h.b16 %v319
    %v1382 = vunpack.c.l.b16 %v320
    %v1383 = vunpack.c.h.b16 %v320
    %v1384 = vunpack.c.l.b16 %v321
    %v1385 = vunpack.c.h.b16 %v321
    %v1386 = vunpack.c.l.b16 %v322
    %v1387 = vunpack.c.h.b16 %v322
    %v1388 = vunpack.c.l.b16 %v323
    %v1389 = vunpack.c.h.b16 %v323
    %v1390 = vunpack.c.l.b16 %v324
    %v1391 = vunpack.c.h.b16 %v324
    %v1392 = vunpack.c.l.b16 %v325
    %v1393 = vunpack.c.h.b16 %v325
    %v1394 = vunpack.c.l.b16 %v326
    %v1395 = vunpack.c.h.b16 %v326
    %v1396 = vunpack.c.l.b16 %v327
    %v1397 = vunpack.c.h.b16 %v327
    %v1398 = vunpack.c.l.b16 %v328
    %v1399 = vunpack.c.h.b16 %v328
    %v1400 = vunpack.c.l.b16 %v329
    %v1401 = vunpack.c.h.b16 %v329
    %v1402 = vunpack.c.l.b16 %v330
    %v1403 = vunpack.c.h.b16 %v330
    %v1404 = vunpack.c.l.b16 %v331
    %v1405 = vunpack.c.h.b16 %v331
    %v1406 = vunpack.c.l.b16 %v332
    %v1407 = vunpack.c.h.b16 %v332
    %v1408 = vunpack.c.l.b16 %v333
    %v1409 = vunpack.c.h.b16 %v333
    %v1410 = vunpack.c.l.b16 %v334
    %v1411 = vunpack.c.h.b16 %v334
    %v1412 = vunpack.c.l.b16 %v335
    %v1413 = vunpack.c.h.b16 %v335
    %v1414 = vunpack.c.l.b16 %v336
    %v1415 = vunpack.c.h.b16 %v336
    %v1416 = vunpack.c.l.b16 %v337
    %v1417 = vunpack.c.h.b16 %v337
    %v1418 = vunpack.c.l.b16 %v338
    %v1419 = vunpack.c.h.b16 %v338
    %v1420 = vunpack.c.l.b16 %v339
    %v1421 = vunpack.c.h.b16 %v339
    %v1422 = vunpack.c.l.b16 %v340
    %v1423 = vunpack.c.h.b16 %v340
    %v1424 = vunpack.c.l.b16 %v341
    %v1425 = vunpack.c.h.b16 %v341
    %v1426 = vunpack.c.l.b16 %v342
    %v1427 = vunpack.c.h.b16 %v342
    %v1428 = vunpack.c.l.b16 %v343
    %v1429 = vunpack.c.h.b16 %v343
    %v1430 = vunpack.c.l.b16 %v344
    %v1431 = vunpack.c.h.b16 %v344
    %v1432 = vunpack.c.l.b16 %v345
    %v1433 = vunpack.c.h.b16 %v345
    %v1434 = vunpack.c.l.b16 %v346
    %v1435 = vunpack.c.h.b16 %v346
    %v1436 = vunpack.c.l.b16 %v347
    %v1437 = vunpack.c.h.b16 %v347
    %v1438 = vunpack.c.l.b16 %v348
    %v1439 = vunpack.c.h.b16 %v348
    %v1440 = vunpack.c.l.b16 %v349
    %v1441 = vunpack.c.h.b16 %v349
    %v1442 = vunpack.c.l.b16 %v350
    %v1443 = vunpack.c.h.b16 %v350
    %v1444 = vunpack.c.l.b16 %v351
    %v1445 = vunpack.c.h.b16 %v351
    %v1446 = vunpack.c.l.b16 %v352
    %v1447 = vunpack.c.h.b16 %v352
    %v1448 = vunpack.c.l.b16 %v353
    %v1449 = vunpack.c.h.b16 %v353
    %v1450 = vunpack.c.l.b16 %v354
    %v1451 = vunpack.c.h.b16 %v354
    %v1452 = vunpack.c.l.b16 %v355
    %v1453 = vunpack.c.h.b16 %v355
    %v1454 = vunpack.c.l.b16 %v356
    %v1455 = vunpack.c.h.b16 %v356
    %v1456 = vunpack.c.l.b16 %v357
    %v1457 = vunpack.c.h.b16 %v357
    %v1458 = vunpack.c.l.b16 %v358
    %v1459 = vunpack.c.h.b16 %v358
    %v1460 = vunpack.c.l.b16 %v359
    %v1461 = vunpack.c.h.b16 %v359
    %v1462 = vunpack.c.l.b16 %v360
    %v1463 = vunpack.c.h.b16 %v360
    %v1464 = vunpack.c.l.b16 %v361
    %v1465 = vunpack.c.h.b16 %v361
    %v1466 = vunpack.c.l.b16 %v362
    %v1467 = vunpack.c.h.b16 %v362
    %v1468 = vunpack.c.l.b16 %v363
    %v1469 = vunpack.c.h.b16 %v363
    %v1470 = vunpack.c.l.b16 %v364
    %v1471 = vunpack.c.h.b16 %v364
    %v1472 = vunpack.c.l.b16 %v365
    %v1473 = vunpack.c.h.b16 %v365
    %v1474 = vunpack.c.l.b16 %v366
    %v1475 = vunpack.c.h.b16 %v366
    %v1476 = vunpack.c.l.b16 %v367
    %v1477 = vunpack.c.h.b16 %v367
    %v1478 = vunpack.c.l.b16 %v368
    %v1479 = vunpack.c.h.b16 %v368
    %v1480 = vunpack.c.l.b16 %v369
    %v1481 = vunpack.c.h.b16 %v369
    %v1482 = vunpack.c.l.b16 %v370
    %v1483 = vunpack.c.h.b16 %v370
    %v1484 = vunpack.c.l.b16 %v371
    %v1485 = vunpack.c.h.b16 %v371
    %v1486 = vunpack.c.l.b16 %v372
    %v1487 = vunpack.c.h.b16 %v372
    %v1488 = vunpack.c.l.b16 %v373
    %v1489 = vunpack.c.h.b16 %v373
    %v1490 = vunpack.c.l.b16 %v374
    %v1491 = vunpack.c.h.b16 %v374
    %v1492 = vunpack.c.l.b16 %v375
    %v1493 = vunpack.c.h.b16 %v375
    %v1494 = vunpack.c.l.b16 %v376
    %v1495 = vunpack.c.h.b16 %v376
    %v1496 = vunpack.c.l.b16 %v377
    %v1497 = vunpack.c.h.b16 %v377
    %v1498 = vunpack.c.l.b16 %v378
    %v1499 = vunpack.c.h.b16 %v378
    %v1500 = vunpack.c.l.b16 %v379
    %v1501 = vunpack.c.h.b16 %v379
    %v1502 = vunpack.c.l.b16 %v380
    %v1503 = vunpack.c.h.b16 %v380
    %v1504 = vunpack.c.l.b16 %v381
    %v1505 = vunpack.c.h.b16 %v381
    %v1506 = vunpack.c.l.b16 %v382
    %v1507 = vunpack.c.h.b16 %v382
    %v1508 = vunpack.c.l.b16 %v383
    %v1509 = vunpack.c.h.b16 %v383
    %v1510 = vunpack.c.l.b16 %v384
    %v1511 = vunpack.c.h.b16 %v384
    %v1512 = vunpack.c.l.b16 %v385
    %v1513 = vunpack.c.h.b16 %v385
    %v1514 = vunpack.c.l.b16 %v386
    %v1515 = vunpack.c.h.b16 %v386
    %v1516 = vunpack.c.l.b16 %v387
    %v1517 = vunpack.c.h.b16 %v387
    %v1518 = vunpack.c.l.b16 %v388
    %v1519 = vunpack.c.h.b16 %v388
    %v1520 = vunpack.c.l.b16 %v389
    %v1521 = vunpack.c.h.b16 %v389
    %v1522 = vunpack.c.l.b16 %v390
    %v1523 = vunpack.c.h.b16 %v390
    %v1524 = vunpack.c.l.b16 %v391
    %v1525 = vunpack.c.h.b16 %v391
    %v1526 = vunpack.c.l.b16 %v392
    %v1527 = vunpack.c.h.b16 %v392
    %v1528 = vunpack.c.l.b16 %v393
    %v1529 = vunpack.c.h.b16 %v393
    %v1530 = vunpack.c.l.b16 %v394
    %v1531 = vunpack.c.h.b16 %v394
    %v1532 = vunpack.c.l.b16 %v395
    %v1533 = vunpack.c.h.b16 %v395
    %v1534 = vunpack.c.l.b16 %v396
    %v1535 = vunpack.c.h.b16 %v396
    %v1536 = vunpack.c.l.b16 %v397
    %v1537 = vunpack.c.h.b16 %v397
    %v1538 = vunpack.c.l.b16 %v398
    %v1539 = vunpack.c.h.b16 %v398
    %v1540 = vunpack.c.l.b16 %v399
    %v1541 = vunpack.c.h.b16 %v399
    %v1542 = vunpack.c.l.b16 %v400
    %v1543 = vunpack.c.h.b16 %v400
    %v1544 = vunpack.c.l.b16 %v401
    %v1545 = vunpack.c.h.b16 %v401
    %v1546 = vunpack.c.l.b16 %v402
    %v1547 = vunpack.c.h.b16 %v402
    %v1548 = vunpack.c.l.b16 %v403
    %v1549 = vunpack.c.h.b16 %v403
    %v1550 = vunpack.c.l.b16 %v404
    %v1551 = vunpack.c.h.b16 %v404
    %v1552 = vunpack.c.l.b16 %v405
    %v1553 = vunpack.c.h.b16 %v405
    %v1554 = vunpack.c.l.b16 %v406
    %v1555 = vunpack.c.h.b16 %v406
    %v1556 = vunpack.c.l.b16 %v407
    %v1557 = vunpack.c.h.b16 %v407
    %v1558 = vunpack.c.l.b16 %v408
    %v1559 = vunpack.c.h.b16 %v408
    %v1560 = vunpack.c.l.b16 %v409
    %v1561 = vunpack.c.h.b16 %v409
    %v1562 = vunpack.c.l.b16 %v410
    %v1563 = vunpack.c.h.b16 %v410
    %v1564 = vunpack.c.l.b16 %v411
    %v1565 = vunpack.c.h.b16 %v411
    %v1566 = vunpack.c.l.b16 %v412
    %v1567 = vunpack.c.h.b16 %v412
    %v1568 = vunpack.c.l.b16 %v413
    %v1569 = vunpack.c.h.b16 %v413
    %v1570 = vunpack.c.l.b16 %v414
    %v1571 = vunpack.c.h.b16 %v414
    %v1572 = vunpack.c.l.b16 %v415
    %v1573 = vunpack.c.h.b16 %v415
    %v1574 = vunpack.c.l.b16 %v416
    %v1575 = vunpack.c.h.b16 %v416
    %v1576 = vunpack.c.l.b16 %v417
    %v1577 = vunpack.c.h.b16 %v417
    %v1578 = vunpack.c.l.b16 %v418
    %v1579 = vunpack.c.h.b16 %v418
    %v1580 = vunpack.c.l.b16 %v419
    %v1581 = vunpack.c.h.b16 %v419
    %v1582 = vunpack.c.l.b16 %v420
    %v1583 = vunpack.c.h.b16 %v420
    %v1584 = vunpack.c.l.b16 %v421
    %v1585 = vunpack.c.h.b16 %v421
    %v1586 = vunpack.c.l.b16 %v422
    %v1587 = vunpack.c.h.b16 %v422
    %v1588 = vunpack.c.l.b16 %v423
    %v1589 = vunpack.c.h.b16 %v423
    %v1590 = vunpack.c.l.b16 %v424
    %v1591 = vunpack.c.h.b16 %v424
    %v1592 = vunpack.c.l.b16 %v425
    %v1593 = vunpack.c.h.b16 %v425
    %v1594 = vunpack.c.l.b16 %v426
    %v1595 = vunpack.c.h.b16 %v426
    %v1596 = vunpack.c.l.b16 %v427
    %v1597 = vunpack.c.h.b16 %v427
    %v1598 = vunpack.c.l.b16 %v428
    %v1599 = vunpack.c.h.b16 %v428
    %v1600 = vunpack.c.l.b16 %v429
    %v1601 = vunpack.c.h.b16 %v429
    %v1602 = vunpack.c.l.b16 %v430
    %v1603 = vunpack.c.h.b16 %v430
    %v1604 = vunpack.c.l.b16 %v431
    %v1605 = vunpack.c.h.b16 %v431
    %v1606 = vunpack.c.l.b16 %v432
    %v1607 = vunpack.c.h.b16 %v432
    %v1608 = vunpack.c.l.b16 %v433
    %v1609 = vunpack.c.h.b16 %v433
    %v1610 = vunpack.c.l.b16 %v434
    %v1611 = vunpack.c.h.b16 %v434
    %v1612 = vunpack.c.l.b16 %v435
    %v1613 = vunpack.c.h.b16 %v435
    %v1614 = vunpack.c.l.b16 %v436
    %v1615 = vunpack.c.h.b16 %v436
    %v1616 = vunpack.c.l.b16 %v437
    %v1617 = vunpack.c.h.b16 %v437
    %v1618 = vunpack.c.l.b16 %v438
    %v1619 = vunpack.c.h.b16 %v438
    %v1620 = vunpack.c.l.b16 %v439
    %v1621 = vunpack.c.h.b16 %v439
    %v1622 = vunpack.c.l.b16 %v440
    %v1623 = vunpack.c.h.b16 %v440
    %v1624 = vunpack.c.l.b16 %v441
    %v1625 = vunpack.c.h.b16 %v441
    %v1626 = vunpack.c.l.b16 %v442
    %v1627 = vunpack.c.h.b16 %v442
    %v1628 = vunpack.c.l.b16 %v443
    %v1629 = vunpack.c.h.b16 %v443
    %v1630 = vunpack.c.l.b16 %v444
    %v1631 = vunpack.c.h.b16 %v444
    %v1632 = vunpack.c.l.b16 %v445
    %v1633 = vunpack.c.h.b16 %v445
    %v1634 = vunpack.c.l.b16 %v446
    %v1635 = vunpack.c.h.b16 %v446
    %v1636 = vunpack.c.l.b16 %v447
    %v1637 = vunpack.c.h.b16 %v447
    %v1638 = vunpack.c.l.b16 %v448
    %v1639 = vunpack.c.h.b16 %v448
    %v1640 = vunpack.c.l.b16 %v449
    %v1641 = vunpack.c.h.b16 %v449
    %v1642 = vunpack.c.l.b16 %v450
    %v1643 = vunpack.c.h.b16 %v450
    %v1644 = vunpack.c.l.b16 %v451
    %v1645 = vunpack.c.h.b16 %v451
    %v1646 = vunpack.c.l.b16 %v452
    %v1647 = vunpack.c.h.b16 %v452
    %v1648 = vunpack.c.l.b16 %v453
    %v1649 = vunpack.c.h.b16 %v453
    %v1650 = vunpack.c.l.b16 %v454
    %v1651 = vunpack.c.h.b16 %v454
    %v1652 = vunpack.c.l.b16 %v455
    %v1653 = vunpack.c.h.b16 %v455
    %v1654 = vunpack.c.l.b16 %v456
    %v1655 = vunpack.c.h.b16 %v456
    %v1656 = vunpack.c.l.b16 %v457
    %v1657 = vunpack.c.h.b16 %v457
    %v1658 = vunpack.c.l.b16 %v458
    %v1659 = vunpack.c.h.b16 %v458
    %v1660 = vunpack.c.l.b16 %v459
    %v1661 = vunpack.c.h.b16 %v459
    %v1662 = vunpack.c.l.b16 %v460
    %v1663 = vunpack.c.h.b16 %v460
    %v1664 = vunpack.c.l.b16 %v461
    %v1665 = vunpack.c.h.b16 %v461
    %v1666 = vunpack.c.l.b16 %v462
    %v1667 = vunpack.c.h.b16 %v462
    %v1668 = vunpack.c.l.b16 %v463
    %v1669 = vunpack.c.h.b16 %v463
    %v1670 = vunpack.c.l.b16 %v464
    %v1671 = vunpack.c.h.b16 %v464
    %v1672 = vunpack.c.l.b16 %v465
    %v1673 = vunpack.c.h.b16 %v465
    %v1674 = vunpack.c.l.b16 %v466
    %v1675 = vunpack.c.h.b16 %v466
    %v1676 = vunpack.c.l.b16 %v467
    %v1677 = vunpack.c.h.b16 %v467
    %v1678 = vunpack.c.l.b16 %v468
    %v1679 = vunpack.c.h.b16 %v468
    %v1680 = vunpack.c.l.b16 %v469
    %v1681 = vunpack.c.h.b16 %v469
    %v1682 = vunpack.c.l.b16 %v470
    %v1683 = vunpack.c.h.b16 %v470
    %v1684 = vunpack.c.l.b16 %v471
    %v1685 = vunpack.c.h.b16 %v471
    %v1686 = vunpack.c.l.b16 %v472
    %v1687 = vunpack.c.h.b16 %v472
    %v1688 = vunpack.c.l.b16 %v473
    %v1689 = vunpack.c.h.b16 %v473
    %v1690 = vunpack.c.l.b16 %v474
    %v1691 = vunpack.c.h.b16 %v474
    %v1692 = vunpack.c.l.b16 %v475
    %v1693 = vunpack.c.h.b16 %v475
    %v1694 = vunpack.c.l.b16 %v476
    %v1695 = vunpack.c.h.b16 %v476
    %v1696 = vunpack.c.l.b16 %v477
    %v1697 = vunpack.c.h.b16 %v477
    %v1698 = vunpack.c.l.b16 %v478
    %v1699 = vunpack.c.h.b16 %v478
    %v1700 = vunpack.c.l.b16 %v479
    %v1701 = vunpack.c.h.b16 %v479
    %v1702 = vunpack.c.l.b16 %v480
    %v1703 = vunpack.c.h.b16 %v480
    %v1704 = vunpack.c.l.b16 %v481
    %v1705 = vunpack.c.h.b16 %v481
    %v1706 = vunpack.c.l.b16 %v482
    %v1707 = vunpack.c.h.b16 %v482
    %v1708 = vunpack.c.l.b16 %v483
    %v1709 = vunpack.c.h.b16 %v483
    %v1710 = vunpack.c.l.b16 %v484
    %v1711 = vunpack.c.h.b16 %v484
    %v1712 = vunpack.c.l.b16 %v485
    %v1713 = vunpack.c.h.b16 %v485
    %v1714 = vunpack.c.l.b16 %v486
    %v1715 = vunpack.c.h.b16 %v486
    %v1716 = vunpack.c.l.b16 %v487
    %v1717 = vunpack.c.h.b16 %v487
    %v1718 = vunpack.c.l.b16 %v488
    %v1719 = vunpack.c.h.b16 %v488
    %v1720 = vunpack.c.l.b16 %v489
    %v1721 = vunpack.c.h.b16 %v489
    %v1722 = vunpack.c.l.b16 %v490
    %v1723 = vunpack.c.h.b16 %v490
    %v1724 = vunpack.c.l.b16 %v491
    %v1725 = vunpack.c.h.b16 %v491
    %v1726 = vunpack.c.l.b16 %v492
    %v1727 = vunpack.c.h.b16 %v492
    %v1728 = vunpack.c.l.b16 %v493
    %v1729 = vunpack.c.h.b16 %v493
    %v1730 = vunpack.c.l.b16 %v494
    %v1731 = vunpack.c.h.b16 %v494
    %v1732 = vunpack.c.l.b16 %v495
    %v1733 = vunpack.c.h.b16 %v495
    %v1734 = vunpack.c.l.b16 %v496
    %v1735 = vunpack.c.h.b16 %v496
    %v1736 = vunpack.c.l.b16 %v497
    %v1737 = vunpack.c.h.b16 %v497
    %v1738 = vunpack.c.l.b16 %v498
    %v1739 = vunpack.c.h.b16 %v498
    %v1740 = vpack.c.b16 %v1168, %v1164
    %v1741 = vpack.c.b16 %v1169, %v1165
    %v1742 = vpack.c.b16 %v1170, %v1166
    %v1743 = vpack.c.b16 %v1171, %v1167
    %v1744 = vpack.c.b16 %v1176, %v1172
    %v1745 = vpack.c.b16 %v1177, %v1173
    %v1746 = vpack.c.b16 %v1178, %v1174
    %v1747 = vpack.c.b16 %v1179, %v1175
    %v1748 = vpack.c.b16 %v1184, %v1180
    %v1749 = vpack.c.b16 %v1185, %v1181
    %v1750 = vpack.c.b16 %v1186, %v1182
    %v1751 = vpack.c.b16 %v1187, %v1183
    %v1752 = vpack.c.b16 %v1192, %v1188
    %v1753 = vpack.c.b16 %v1193, %v1189
    %v1754 = vpack.c.b16 %v1194, %v1190
    %v1755 = vpack.c.b16 %v1195, %v1191
    %v1756 = vpack.c.b16 %v1200, %v1196
    %v1757 = vpack.c.b16 %v1201, %v1197
    %v1758 = vpack.c.b16 %v1202, %v1198
    %v1759 = vpack.c.b16 %v1203, %v1199
    %v1760 = vpack.c.b16 %v1208, %v1204
    %v1761 = vpack.c.b16 %v1209, %v1205
    %v1762 = vpack.c.b16 %v1210, %v1206
    %v1763 = vpack.c.b16 %v1211, %v1207
    %v1764 = vpack.c.b16 %v1216, %v1212
    %v1765 = vpack.c.b16 %v1217, %v1213
    %v1766 = vpack.c.b16 %v1218, %v1214
    %v1767 = vpack.c.b16 %v1219, %v1215
    %v1768 = vpack.c.b16 %v1224, %v1220
    %v1769 = vpack.c.b16 %v1225, %v1221
    %v1770 = vpack.c.b16 %v1226, %v1222
    %v1771 = vpack.c.b16 %v1227, %v1223
    %v1772 = vpack.c.b16 %v1232, %v1228
    %v1773 = vpack.c.b16 %v1233, %v1229
    %v1774 = vpack.c.b16 %v1234, %v1230
    %v1775 = vpack.c.b16 %v1235, %v1231
    %v1776 = vpack.c.b16 %v1240, %v1236
    %v1777 = vpack.c.b16 %v1241, %v1237
    %v1778 = vpack.c.b16 %v1242, %v1238
    %v1779 = vpack.c.b16 %v1243, %v1239
    %v1780 = vpack.c.b16 %v1248, %v1244
    %v1781 = vpack.c.b16 %v1249, %v1245
    %v1782 = vpack.c.b16 %v1250, %v1246
    %v1783 = vpack.c.b16 %v1251, %v1247
    %v1784 = vpack.c.b16 %v1256, %v1252
    %v1785 = vpack.c.b16 %v1257, %v1253
    %v1786 = vpack.c.b16 %v1258, %v1254
    %v1787 = vpack.c.b16 %v1259, %v1255
    %v1788 = vpack.c.b16 %v1264, %v1260
    %v1789 = vpack.c.b16 %v1265, %v1261
    %v1790 = vpack.c.b16 %v1266, %v1262
    %v1791 = vpack.c.b16 %v1267, %v1263
    %v1792 = vpack.c.b16 %v1272, %v1268
    %v1793 = vpack.c.b16 %v1273, %v1269
    %v1794 = vpack.c.b16 %v1274, %v1270
    %v1795 = vpack.c.b16 %v1275, %v1271
    %v1796 = vpack.c.b16 %v1280, %v1276
    %v1797 = vpack.c.b16 %v1281, %v1277
    %v1798 = vpack.c.b16 %v1282, %v1278
    %v1799 = vpack.c.b16 %v1283, %v1279
    %v1800 = vpack.c.b16 %v1288, %v1284
    %v1801 = vpack.c.b16 %v1289, %v1285
    %v1802 = vpack.c.b16 %v1290, %v1286
    %v1803 = vpack.c.b16 %v1291, %v1287
    %v1804 = vpack.c.b16 %v1296, %v1292
    %v1805 = vpack.c.b16 %v1297, %v1293
    %v1806 = vpack.c.b16 %v1298, %v1294
    %v1807 = vpack.c.b16 %v1299, %v1295
    %v1808 = vpack.c.b16 %v1304, %v1300
    %v1809 = vpack.c.b16 %v1305, %v1301
    %v1810 = vpack.c.b16 %v1306, %v1302
    %v1811 = vpack.c.b16 %v1307, %v1303
    %v1812 = vpack.c.b16 %v1312, %v1308
    %v1813 = vpack.c.b16 %v1313, %v1309
    %v1814 = vpack.c.b16 %v1314, %v1310
    %v1815 = vpack.c.b16 %v1315, %v1311
    %v1816 = vpack.c.b16 %v1320, %v1316
    %v1817 = vpack.c.b16 %v1321, %v1317
    %v1818 = vpack.c.b16 %v1322, %v1318
    %v1819 = vpack.c.b16 %v1323, %v1319
    %v1820 = vpack.c.b16 %v1328, %v1324
    %v1821 = vpack.c.b16 %v1329, %v1325
    %v1822 = vpack.c.b16 %v1330, %v1326
    %v1823 = vpack.c.b16 %v1331, %v1327
    %v1824 = vpack.c.b16 %v1336, %v1332
    %v1825 = vpack.c.b16 %v1337, %v1333
    %v1826 = vpack.c.b16 %v1338, %v1334
    %v1827 = vpack.c.b16 %v1339, %v1335
    %v1828 = vpack.c.b16 %v1344, %v1340
    %v1829 = vpack.c.b16 %v1345, %v1341
    %v1830 = vpack.c.b16 %v1346, %v1342
    %v1831 = vpack.c.b16 %v1347, %v1343
    %v1832 = vpack.c.b16 %v1352, %v1348
    %v1833 = vpack.c.b16 %v1353, %v1349
    %v1834 = vpack.c.b16 %v1354, %v1350
    %v1835 = vpack.c.b16 %v1355, %v1351
    %v1836 = vpack.c.b16 %v1360, %v1356
    %v1837 = vpack.c.b16 %v1361, %v1357
    %v1838 = vpack.c.b16 %v1362, %v1358
    %v1839 = vpack.c.b16 %v1363, %v1359
    %v1840 = vpack.c.b16 %v1368, %v1364
    %v1841 = vpack.c.b16 %v1369, %v1365
    %v1842 = vpack.c.b16 %v1370, %v1366
    %v1843 = vpack.c.b16 %v1371, %v1367
    %v1844 = vpack.c.b16 %v1376, %v1372
    %v1845 = vpack.c.b16 %v1377, %v1373
    %v1846 = vpack.c.b16 %v1378, %v1374
    %v1847 = vpack.c.b16 %v1379, %v1375
    %v1848 = vpack.c.b16 %v1384, %v1380
    %v1849 = vpack.c.b16 %v1385, %v1381
    %v1850 = vpack.c.b16 %v1386, %v1382
    %v1851 = vpack.c.b16 %v1387, %v1383
    %v1852 = vpack.c.b16 %v1392, %v1388
    %v1853 = vpack.c.b16 %v1393, %v1389
    %v1854 = vpack.c.b16 %v1394, %v1390
    %v1855 = vpack.c.b16 %v1395, %v1391
    %v1856 = vpack.c.b16 %v1400, %v1396
    %v1857 = vpack.c.b16 %v1401, %v1397
    %v1858 = vpack.c.b16 %v1402, %v1398
    %v1859 = vpack.c.b16 %v1403, %v1399
    %v1860 = vpack.c.b16 %v1408, %v1404
    %v1861 = vpack.c.b16 %v1409, %v1405
    %v1862 = vpack.c.b16 %v1410, %v1406
    %v1863 = vpack.c.b16 %v1411, %v1407
    %v1864 = vpack.c.b16 %v1416, %v1412
    %v1865 = vpack.c.b16 %v1417, %v1413
    %v1866 = vpack.c.b16 %v1418, %v1414
    %v1867 = vpack.c.b16 %v1419, %v1415
    %v1868 = vpack.c.b16 %v1424, %v1420
    %v1869 = vpack.c.b16 %v1425, %v1421
    %v1870 = vpack.c.b16 %v1426, %v1422
    %v1871 = vpack.c.b16 %v1427, %v1423
    %v1872 = vpack.c.b16 %v1432, %v1428
    %v1873 = vpack.c.b16 %v1433, %v1429
    %v1874 = vpack.c.b16 %v1434, %v1430
    %v1875 = vpack.c.b16 %v1435, %v1431
    %v1876 = vpack.c.b16 %v1440, %v1436
    %v1877 = vpack.c.b16 %v1441, %v1437
    %v1878 = vpack.c.b16 %v1442, %v1438
    %v1879 = vpack.c.b16 %v1443, %v1439
    %v1880 = vpack.c.b16 %v1448, %v1444
    %v1881 = vpack.c.b16 %v1449, %v1445
    %v1882 = vpack.c.b16 %v1450, %v1446
    %v1883 = vpack.c.b16 %v1451, %v1447
    %v1884 = vpack.c.b16 %v1456, %v1452
    %v1885 = vpack.c.b16 %v1457, %v1453
    %v1886 = vpack.c.b16 %v1458, %v1454
    %v1887 = vpack.c.b16 %v1459, %v1455
    %v1888 = vpack.c.b16 %v1464, %v1460
    %v1889 = vpack.c.b16 %v1465, %v1461
    %v1890 = vpack.c.b16 %v1466, %v1462
    %v1891 = vpack.c.b16 %v1467, %v1463
    %v1892 = vpack.c.b16 %v1472, %v1468
    %v1893 = vpack.c.b16 %v1473, %v1469
    %v1894 = vpack.c.b16 %v1474, %v1470
    %v1895 = vpack.c.b16 %v1475, %v1471
    %v1896 = vpack.c.b16 %v1480, %v1476
    %v1897 = vpack.c.b16 %v1481, %v1477
    %v1898 = vpack.c.b16 %v1482, %v1478
    %v1899 = vpack.c.b16 %v1483, %v1479
    %v1900 = vpack.c.b16 %v1488, %v1484
    %v1901 = vpack.c.b16 %v1489, %v1485
    %v1902 = vpack.c.b16 %v1490, %v1486
    %v1903 = vpack.c.b16 %v1491, %v1487
    %v1904 = vpack.c.b16 %v1496, %v1492
    %v1905 = vpack.c.b16 %v1497, %v1493
    %v1906 = vpack.c.b16 %v1498, %v1494
    %v1907 = vpack.c.b16 %v1499, %v1495
    %v1908 = vpack.c.b16 %v1504, %v1500
    %v1909 = vpack.c.b16 %v1505, %v1501
    %v1910 = vpack.c.b16 %v1506, %v1502
    %v1911 = vpack.c.b16 %v1507, %v1503
    %v1912 = vpack.c.b16 %v1512, %v1508
    %v1913 = vpack.c.b16 %v1513, %v1509
    %v1914 = vpack.c.b16 %v1514, %v1510
    %v1915 = vpack.c.b16 %v1515, %v1511
    %v1916 = vpack.c.b16 %v1520, %v1516
    %v1917 = vpack.c.b16 %v1521, %v1517
    %v1918 = vpack.c.b16 %v1522, %v1518
    %v1919 = vpack.c.b16 %v1523, %v1519
    %v1920 = vpack.c.b16 %v1528, %v1524
    %v1921 = vpack.c.b16 %v1529, %v1525
    %v1922 = vpack.c.b16 %v1530, %v1526
    %v1923 = vpack.c.b16 %v1531, %v1527
    %v1924 = vpack.c.b16 %v1536, %v1532
    %v1925 = vpack.c.b16 %v1537, %v1533
    %v1926 = vpack.c.b16 %v1538, %v1534
    %v1927 = vpack.c.b16 %v1539, %v1535
    %v1928 = vpack.c.b16 %v1544, %v1540
    %v1929 = vpack.c.b16 %v1545, %v1541
    %v1930 = vpack.c.b16 %v1546, %v1542
    %v1931 = vpack.c.b16 %v1547, %v1543
    %v1932 = vpack.c.b16 %v1552, %v1548
    %v1933 = vpack.c.b16 %v1553, %v1549
    %v1934 = vpack.c.b16 %v1554, %v1550
    %v1935 = vpack.c.b16 %v1555, %v1551
    %v1936 = vpack.c.b16 %v1560, %v1556
    %v1937 = vpack.c.b16 %v1561, %v1557
    %v1938 = vpack.c.b16 %v1562, %v1558
    %v1939 = vpack.c.b16 %v1563, %v1559
    %v1940 = vpack.c.b16 %v1568, %v1564
    %v1941 = vpack.c.b16 %v1569, %v1565
    %v1942 = vpack.c.b16 %v1570, %v1566
    %v1943 = vpack.c.b16 %v1571, %v1567
    %v1944 = vpack.c.b16 %v1576, %v1572
    %v1945 = vpack.c.b16 %v1577, %v1573
    %v1946 = vpack.c.b16 %v1578, %v1574
    %v1947 = vpack.c.b16 %v1579, %v1575
    %v1948 = vpack.c.b16 %v1584, %v1580
    %v1949 = vpack.c.b16 %v1585, %v1581
    %v1950 = vpack.c.b16 %v1586, %v1582
    %v1951 = vpack.c.b16 %v1587, %v1583
    %v1952 = vpack.c.b16 %v1592, %v1588
    %v1953 = vpack.c.b16 %v1593, %v1589
    %v1954 = vpack.c.b16 %v1594, %v1590
    %v1955 = vpack.c.b16 %v1595, %v1591
    %v1956 = vpack.c.b16 %v1600, %v1596
    %v1957 = vpack.c.b16 %v1601, %v1597
    %v1958 = vpack.c.b16 %v1602, %v1598
    %v1959 = vpack.c.b16 %v1603, %v1599
    %v1960 = vpack.c.b16 %v1608, %v1604
    %v1961 = vpack.c.b16 %v1609, %v1605
    %v1962 = vpack.c.b16 %v1610, %v1606
    %v1963 = vpack.c.b16 %v1611, %v1607
    %v1964 = vpack.c.b16 %v1616, %v1612
    %v1965 = vpack.c.b16 %v1617, %v1613
    %v1966 = vpack.c.b16 %v1618, %v1614
    %v1967 = vpack.c.b16 %v1619, %v1615
    %v1968 = vpack.c.b16 %v1624, %v1620
    %v1969 = vpack.c.b16 %v1625, %v1621
    %v1970 = vpack.c.b16 %v1626, %v1622
    %v1971 = vpack.c.b16 %v1627, %v1623
    %v1972 = vpack.c.b16 %v1632, %v1628
    %v1973 = vpack.c.b16 %v1633, %v1629
    %v1974 = vpack.c.b16 %v1634, %v1630
    %v1975 = vpack.c.b16 %v1635, %v1631
    %v1976 = vpack.c.b16 %v1640, %v1636
    %v1977 = vpack.c.b16 %v1641, %v1637
    %v1978 = vpack.c.b16 %v1642, %v1638
    %v1979 = vpack.c.b16 %v1643, %v1639
    %v1980 = vpack.c.b16 %v1648, %v1644
    %v1981 = vpack.c.b16 %v1649, %v1645
    %v1982 = vpack.c.b16 %v1650, %v1646
    %v1983 = vpack.c.b16 %v1651, %v1647
    %v1984 = vpack.c.b16 %v1656, %v1652
    %v1985 = vpack.c.b16 %v1657, %v1653
    %v1986 = vpack.c.b16 %v1658, %v1654
    %v1987 = vpack.c.b16 %v1659, %v1655
    %v1988 = vpack.c.b16 %v1664, %v1660
    %v1989 = vpack.c.b16 %v1665, %v1661
    %v1990 = vpack.c.b16 %v1666, %v1662
    %v1991 = vpack.c.b16 %v1667, %v1663
    %v1992 = vpack.c.b16 %v1672, %v1668
    %v1993 = vpack.c.b16 %v1673, %v1669
    %v1994 = vpack.c.b16 %v1674, %v1670
    %v1995 = vpack.c.b16 %v1675, %v1671
    %v1996 = vpack.c.b16 %v1680, %v1676
    %v1997 = vpack.c.b16 %v1681, %v1677
    %v1998 = vpack.c.b16 %v1682, %v1678
    %v1999 = vpack.c.b16 %v1683, %v1679
    %v2000 = vpack.c.b16 %v1688, %v1684
    %v2001 = vpack.c.b16 %v1689, %v1685
    %v2002 = vpack.c.b16 %v1690, %v1686
    %v2003 = vpack.c.b16 %v1691, %v1687
    %v2004 = vpack.c.b16 %v1696, %v1692
    %v2005 = vpack.c.b16 %v1697, %v1693
    %v2006 = vpack.c.b16 %v1698, %v1694
    %v2007 = vpack.c.b16 %v1699, %v1695
    %v2008 = vpack.c.b16 %v1704, %v1700
    %v2009 = vpack.c.b16 %v1705, %v1701
    %v2010 = vpack.c.b16 %v1706, %v1702
    %v2011 = vpack.c.b16 %v1707, %v1703
    %v2012 = vpack.c.b16 %v1712, %v1708
    %v2013 = vpack.c.b16 %v1713, %v1709
    %v2014 = vpack.c.b16 %v1714, %v1710
    %v2015 = vpack.c.b16 %v1715, %v1711
    %v2016 = vpack.c.b16 %v1720, %v1716
    %v2017 = vpack.c.b16 %v1721, %v1717
    %v2018 = vpack.c.b16 %v1722, %v1718
    %v2019 = vpack.c.b16 %v1723, %v1719
    %v2020 = vpack.c.b16 %v1728, %v1724
    %v2021 = vpack.c.b16 %v1729, %v1725
    %v2022 = vpack.c.b16 %v1730, %v1726
    %v2023 = vpack.c.b16 %v1731, %v1727
    %v2024 = vpack.c.b16 %v1736, %v1732
    %v2025 = vpack.c.b16 %v1737, %v1733
    %v2026 = vpack.c.b16 %v1738, %v1734
    %v2027 = vpack.c.b16 %v1739, %v1735
    %2316 = vmatpush.bf16.msra.mxu0 %v1768
    %2317 = vmatpush.bf16.msra.mxu0 %v1764
    %2318 = vmatpush.bf16.msra.mxu0 %v1760
    %2319 = vmatpush.bf16.msra.mxu0 %v1756
    %2320 = vmatpush.bf16.msra.mxu0 %v1752
    %2321 = vmatpush.bf16.msra.mxu0 %v1748
    %2322 = vmatpush.bf16.msra.mxu0 %v1744
    %2323 = vmatpush.bf16.msra.mxu0 %v1740
    %2324 = vmatmul.bf16.gmra.mxu0 %v732
    %v2325 = vpop.f32.mrf.mxu0
    %v2326 = vadd.f32 %v500, %v2325
    %v2327 = vpop.f32.mrf.mxu0
    %v2328 = vadd.f32 %v500, %v2327
    %2329 = vmatmul.bf16.gmra.mxu0 %v741
    %v2330 = vpop.f32.mrf.mxu0
    %v2331 = vadd.f32 %v500, %v2330
    %v2332 = vpop.f32.mrf.mxu0
    %v2333 = vadd.f32 %v500, %v2332
    %2334 = vmatmul.bf16.gmra.mxu0 %v750
    %v2335 = vpop.f32.mrf.mxu0
    %v2336 = vadd.f32 %v500, %v2335
    %v2337 = vpop.f32.mrf.mxu0
    %v2338 = vadd.f32 %v500, %v2337
    %2339 = vmatmul.bf16.gmra.mxu0 %v759
    %v2340 = vpop.f32.mrf.mxu0
    %v2341 = vadd.f32 %v500, %v2340
    %v2342 = vpop.f32.mrf.mxu0
    %v2343 = vadd.f32 %v500, %v2342
    %2344 = vmatmul.bf16.gmra.mxu0 %v768
    %v2345 = vpop.f32.mrf.mxu0
    %v2346 = vadd.f32 %v500, %v2345
    %v2347 = vpop.f32.mrf.mxu0
    %v2348 = vadd.f32 %v500, %v2347
    %2349 = vmatmul.bf16.gmra.mxu0 %v777
    %v2350 = vpop.f32.mrf.mxu0
    %v2351 = vadd.f32 %v500, %v2350
    %v2352 = vpop.f32.mrf.mxu0
    %v2353 = vadd.f32 %v500, %v2352
    %2354 = vmatmul.bf16.gmra.mxu0 %v786
    %v2355 = vpop.f32.mrf.mxu0
    %v2356 = vadd.f32 %v500, %v2355
    %v2357 = vpop.f32.mrf.mxu0
    %v2358 = vadd.f32 %v500, %v2357
    %2359 = vmatmul.bf16.gmra.mxu0 %v795
    %v2360 = vpop.f32.mrf.mxu0
    %v2361 = vadd.f32 %v500, %v2360
    %v2362 = vpop.f32.mrf.mxu0
    %v2363 = vadd.f32 %v500, %v2362
    %2364 = vdwg.mxu0
    %2365 = vmatpush.bf16.msra.mxu0 %v1800
    %2366 = vmatpush.bf16.msra.mxu0 %v1796
    %2367 = vmatpush.bf16.msra.mxu0 %v1792
    %2368 = vmatpush.bf16.msra.mxu0 %v1788
    %2369 = vmatpush.bf16.msra.mxu0 %v1784
    %2370 = vmatpush.bf16.msra.mxu0 %v1780
    %2371 = vmatpush.bf16.msra.mxu0 %v1776
    %2372 = vmatpush.bf16.msra.mxu0 %v1772
    %2373 = vmatmul.bf16.gmra.mxu0 %v733
    %v2374 = vpop.f32.mrf.mxu0
    %v2375 = vadd.f32 %v2326, %v2374
    %v2376 = vpop.f32.mrf.mxu0
    %v2377 = vadd.f32 %v2328, %v2376
    %2378 = vmatmul.bf16.gmra.mxu0 %v742
    %v2379 = vpop.f32.mrf.mxu0
    %v2380 = vadd.f32 %v2331, %v2379
    %v2381 = vpop.f32.mrf.mxu0
    %v2382 = vadd.f32 %v2333, %v2381
    %2383 = vmatmul.bf16.gmra.mxu0 %v751
    %v2384 = vpop.f32.mrf.mxu0
    %v2385 = vadd.f32 %v2336, %v2384
    %v2386 = vpop.f32.mrf.mxu0
    %v2387 = vadd.f32 %v2338, %v2386
    %2388 = vmatmul.bf16.gmra.mxu0 %v760
    %v2389 = vpop.f32.mrf.mxu0
    %v2390 = vadd.f32 %v2341, %v2389
    %v2391 = vpop.f32.mrf.mxu0
    %v2392 = vadd.f32 %v2343, %v2391
    %2393 = vmatmul.bf16.gmra.mxu0 %v769
    %v2394 = vpop.f32.mrf.mxu0
    %v2395 = vadd.f32 %v2346, %v2394
    %v2396 = vpop.f32.mrf.mxu0
    %v2397 = vadd.f32 %v2348, %v2396
    %2398 = vmatmul.bf16.gmra.mxu0 %v778
    %v2399 = vpop.f32.mrf.mxu0
    %v2400 = vadd.f32 %v2351, %v2399
    %v2401 = vpop.f32.mrf.mxu0
    %v2402 = vadd.f32 %v2353, %v2401
    %2403 = vmatmul.bf16.gmra.mxu0 %v787
    %v2404 = vpop.f32.mrf.mxu0
    %v2405 = vadd.f32 %v2356, %v2404
    %v2406 = vpop.f32.mrf.mxu0
    %v2407 = vadd.f32 %v2358, %v2406
    %2408 = vmatmul.bf16.gmra.mxu0 %v796
    %v2409 = vpop.f32.mrf.mxu0
    %v2410 = vadd.f32 %v2361, %v2409
    %v2411 = vpop.f32.mrf.mxu0
    %v2412 = vadd.f32 %v2363, %v2411
    %2413 = vdwg.mxu0
    %2414 = vmatpush.bf16.msra.mxu0 %v1832
    %2415 = vmatpush.bf16.msra.mxu0 %v1828
    %2416 = vmatpush.bf16.msra.mxu0 %v1824
    %2417 = vmatpush.bf16.msra.mxu0 %v1820
    %2418 = vmatpush.bf16.msra.mxu0 %v1816
    %2419 = vmatpush.bf16.msra.mxu0 %v1812
    %2420 = vmatpush.bf16.msra.mxu0 %v1808
    %2421 = vmatpush.bf16.msra.mxu0 %v1804
    %2422 = vmatmul.bf16.gmra.mxu0 %v734
    %v2423 = vpop.f32.mrf.mxu0
    %v2424 = vadd.f32 %v2375, %v2423
    %v2425 = vpop.f32.mrf.mxu0
    %v2426 = vadd.f32 %v2377, %v2425
    %2427 = vmatmul.bf16.gmra.mxu0 %v743
    %v2428 = vpop.f32.mrf.mxu0
    %v2429 = vadd.f32 %v2380, %v2428
    %v2430 = vpop.f32.mrf.mxu0
    %v2431 = vadd.f32 %v2382, %v2430
    %2432 = vmatmul.bf16.gmra.mxu0 %v752
    %v2433 = vpop.f32.mrf.mxu0
    %v2434 = vadd.f32 %v2385, %v2433
    %v2435 = vpop.f32.mrf.mxu0
    %v2436 = vadd.f32 %v2387, %v2435
    %2437 = vmatmul.bf16.gmra.mxu0 %v761
    %v2438 = vpop.f32.mrf.mxu0
    %v2439 = vadd.f32 %v2390, %v2438
    %v2440 = vpop.f32.mrf.mxu0
    %v2441 = vadd.f32 %v2392, %v2440
    %2442 = vmatmul.bf16.gmra.mxu0 %v770
    %v2443 = vpop.f32.mrf.mxu0
    %v2444 = vadd.f32 %v2395, %v2443
    %v2445 = vpop.f32.mrf.mxu0
    %v2446 = vadd.f32 %v2397, %v2445
    %2447 = vmatmul.bf16.gmra.mxu0 %v779
    %v2448 = vpop.f32.mrf.mxu0
    %v2449 = vadd.f32 %v2400, %v2448
    %v2450 = vpop.f32.mrf.mxu0
    %v2451 = vadd.f32 %v2402, %v2450
    %2452 = vmatmul.bf16.gmra.mxu0 %v788
    %v2453 = vpop.f32.mrf.mxu0
    %v2454 = vadd.f32 %v2405, %v2453
    %v2455 = vpop.f32.mrf.mxu0
    %v2456 = vadd.f32 %v2407, %v2455
    %2457 = vmatmul.bf16.gmra.mxu0 %v797
    %v2458 = vpop.f32.mrf.mxu0
    %v2459 = vadd.f32 %v2410, %v2458
    %v2460 = vpop.f32.mrf.mxu0
    %v2461 = vadd.f32 %v2412, %v2460
    %2462 = vdwg.mxu0
    %2463 = vmatpush.bf16.msra.mxu0 %v1864
    %2464 = vmatpush.bf16.msra.mxu0 %v1860
    %2465 = vmatpush.bf16.msra.mxu0 %v1856
    %2466 = vmatpush.bf16.msra.mxu0 %v1852
    %2467 = vmatpush.bf16.msra.mxu0 %v1848
    %2468 = vmatpush.bf16.msra.mxu0 %v1844
    %2469 = vmatpush.bf16.msra.mxu0 %v1840
    %2470 = vmatpush.bf16.msra.mxu0 %v1836
    %2471 = vmatmul.bf16.gmra.mxu0 %v735
    %v2472 = vpop.f32.mrf.mxu0
    %v2473 = vadd.f32 %v2424, %v2472
    %v2474 = vpop.f32.mrf.mxu0
    %v2475 = vadd.f32 %v2426, %v2474
    %2476 = vmatmul.bf16.gmra.mxu0 %v744
    %v2477 = vpop.f32.mrf.mxu0
    %v2478 = vadd.f32 %v2429, %v2477
    %v2479 = vpop.f32.mrf.mxu0
    %v2480 = vadd.f32 %v2431, %v2479
    %2481 = vmatmul.bf16.gmra.mxu0 %v753
    %v2482 = vpop.f32.mrf.mxu0
    %v2483 = vadd.f32 %v2434, %v2482
    %v2484 = vpop.f32.mrf.mxu0
    %v2485 = vadd.f32 %v2436, %v2484
    %2486 = vmatmul.bf16.gmra.mxu0 %v762
    %v2487 = vpop.f32.mrf.mxu0
    %v2488 = vadd.f32 %v2439, %v2487
    %v2489 = vpop.f32.mrf.mxu0
    %v2490 = vadd.f32 %v2441, %v2489
    %2491 = vmatmul.bf16.gmra.mxu0 %v771
    %v2492 = vpop.f32.mrf.mxu0
    %v2493 = vadd.f32 %v2444, %v2492
    %v2494 = vpop.f32.mrf.mxu0
    %v2495 = vadd.f32 %v2446, %v2494
    %2496 = vmatmul.bf16.gmra.mxu0 %v780
    %v2497 = vpop.f32.mrf.mxu0
    %v2498 = vadd.f32 %v2449, %v2497
    %v2499 = vpop.f32.mrf.mxu0
    %v2500 = vadd.f32 %v2451, %v2499
    %2501 = vmatmul.bf16.gmra.mxu0 %v789
    %v2502 = vpop.f32.mrf.mxu0
    %v2503 = vadd.f32 %v2454, %v2502
    %v2504 = vpop.f32.mrf.mxu0
    %v2505 = vadd.f32 %v2456, %v2504
    %2506 = vmatmul.bf16.gmra.mxu0 %v798
    %v2507 = vpop.f32.mrf.mxu0
    %v2508 = vadd.f32 %v2459, %v2507
    %v2509 = vpop.f32.mrf.mxu0
    %v2510 = vadd.f32 %v2461, %v2509
    %2511 = vdwg.mxu0
    %2512 = vmatpush.bf16.msra.mxu0 %v1896
    %2513 = vmatpush.bf16.msra.mxu0 %v1892
    %2514 = vmatpush.bf16.msra.mxu0 %v1888
    %2515 = vmatpush.bf16.msra.mxu0 %v1884
    %2516 = vmatpush.bf16.msra.mxu0 %v1880
    %2517 = vmatpush.bf16.msra.mxu0 %v1876
    %2518 = vmatpush.bf16.msra.mxu0 %v1872
    %2519 = vmatpush.bf16.msra.mxu0 %v1868
    %2520 = vmatmul.bf16.gmra.mxu0 %v736
    %v2521 = vpop.f32.mrf.mxu0
    %v2522 = vadd.f32 %v2473, %v2521
    %v2523 = vpop.f32.mrf.mxu0
    %v2524 = vadd.f32 %v2475, %v2523
    %2525 = vmatmul.bf16.gmra.mxu0 %v745
    %v2526 = vpop.f32.mrf.mxu0
    %v2527 = vadd.f32 %v2478, %v2526
    %v2528 = vpop.f32.mrf.mxu0
    %v2529 = vadd.f32 %v2480, %v2528
    %2530 = vmatmul.bf16.gmra.mxu0 %v754
    %v2531 = vpop.f32.mrf.mxu0
    %v2532 = vadd.f32 %v2483, %v2531
    %v2533 = vpop.f32.mrf.mxu0
    %v2534 = vadd.f32 %v2485, %v2533
    %2535 = vmatmul.bf16.gmra.mxu0 %v763
    %v2536 = vpop.f32.mrf.mxu0
    %v2537 = vadd.f32 %v2488, %v2536
    %v2538 = vpop.f32.mrf.mxu0
    %v2539 = vadd.f32 %v2490, %v2538
    %2540 = vmatmul.bf16.gmra.mxu0 %v772
    %v2541 = vpop.f32.mrf.mxu0
    %v2542 = vadd.f32 %v2493, %v2541
    %v2543 = vpop.f32.mrf.mxu0
    %v2544 = vadd.f32 %v2495, %v2543
    %2545 = vmatmul.bf16.gmra.mxu0 %v781
    %v2546 = vpop.f32.mrf.mxu0
    %v2547 = vadd.f32 %v2498, %v2546
    %v2548 = vpop.f32.mrf.mxu0
    %v2549 = vadd.f32 %v2500, %v2548
    %2550 = vmatmul.bf16.gmra.mxu0 %v790
    %v2551 = vpop.f32.mrf.mxu0
    %v2552 = vadd.f32 %v2503, %v2551
    %v2553 = vpop.f32.mrf.mxu0
    %v2554 = vadd.f32 %v2505, %v2553
    %2555 = vmatmul.bf16.gmra.mxu0 %v799
    %v2556 = vpop.f32.mrf.mxu0
    %v2557 = vadd.f32 %v2508, %v2556
    %v2558 = vpop.f32.mrf.mxu0
    %v2559 = vadd.f32 %v2510, %v2558
    %2560 = vdwg.mxu0
    %2561 = vmatpush.bf16.msra.mxu0 %v1928
    %2562 = vmatpush.bf16.msra.mxu0 %v1924
    %2563 = vmatpush.bf16.msra.mxu0 %v1920
    %2564 = vmatpush.bf16.msra.mxu0 %v1916
    %2565 = vmatpush.bf16.msra.mxu0 %v1912
    %2566 = vmatpush.bf16.msra.mxu0 %v1908
    %2567 = vmatpush.bf16.msra.mxu0 %v1904
    %2568 = vmatpush.bf16.msra.mxu0 %v1900
    %2569 = vmatmul.bf16.gmra.mxu0 %v737
    %v2570 = vpop.f32.mrf.mxu0
    %v2571 = vadd.f32 %v2522, %v2570
    %v2572 = vpop.f32.mrf.mxu0
    %v2573 = vadd.f32 %v2524, %v2572
    %2574 = vmatmul.bf16.gmra.mxu0 %v746
    %v2575 = vpop.f32.mrf.mxu0
    %v2576 = vadd.f32 %v2527, %v2575
    %v2577 = vpop.f32.mrf.mxu0
    %v2578 = vadd.f32 %v2529, %v2577
    %2579 = vmatmul.bf16.gmra.mxu0 %v755
    %v2580 = vpop.f32.mrf.mxu0
    %v2581 = vadd.f32 %v2532, %v2580
    %v2582 = vpop.f32.mrf.mxu0
    %v2583 = vadd.f32 %v2534, %v2582
    %2584 = vmatmul.bf16.gmra.mxu0 %v764
    %v2585 = vpop.f32.mrf.mxu0
    %v2586 = vadd.f32 %v2537, %v2585
    %v2587 = vpop.f32.mrf.mxu0
    %v2588 = vadd.f32 %v2539, %v2587
    %2589 = vmatmul.bf16.gmra.mxu0 %v773
    %v2590 = vpop.f32.mrf.mxu0
    %v2591 = vadd.f32 %v2542, %v2590
    %v2592 = vpop.f32.mrf.mxu0
    %v2593 = vadd.f32 %v2544, %v2592
    %2594 = vmatmul.bf16.gmra.mxu0 %v782
    %v2595 = vpop.f32.mrf.mxu0
    %v2596 = vadd.f32 %v2547, %v2595
    %v2597 = vpop.f32.mrf.mxu0
    %v2598 = vadd.f32 %v2549, %v2597
    %2599 = vmatmul.bf16.gmra.mxu0 %v791
    %v2600 = vpop.f32.mrf.mxu0
    %v2601 = vadd.f32 %v2552, %v2600
    %v2602 = vpop.f32.mrf.mxu0
    %v2603 = vadd.f32 %v2554, %v2602
    %2604 = vmatmul.bf16.gmra.mxu0 %v800
    %v2605 = vpop.f32.mrf.mxu0
    %v2606 = vadd.f32 %v2557, %v2605
    %v2607 = vpop.f32.mrf.mxu0
    %v2608 = vadd.f32 %v2559, %v2607
    %2609 = vdwg.mxu0
    %2610 = vmatpush.bf16.msra.mxu0 %v1960
    %2611 = vmatpush.bf16.msra.mxu0 %v1956
    %2612 = vmatpush.bf16.msra.mxu0 %v1952
    %2613 = vmatpush.bf16.msra.mxu0 %v1948
    %2614 = vmatpush.bf16.msra.mxu0 %v1944
    %2615 = vmatpush.bf16.msra.mxu0 %v1940
    %2616 = vmatpush.bf16.msra.mxu0 %v1936
    %2617 = vmatpush.bf16.msra.mxu0 %v1932
    %2618 = vmatmul.bf16.gmra.mxu0 %v738
    %v2619 = vpop.f32.mrf.mxu0
    %v2620 = vadd.f32 %v2571, %v2619
    %v2621 = vpop.f32.mrf.mxu0
    %v2622 = vadd.f32 %v2573, %v2621
    %2623 = vmatmul.bf16.gmra.mxu0 %v747
    %v2624 = vpop.f32.mrf.mxu0
    %v2625 = vadd.f32 %v2576, %v2624
    %v2626 = vpop.f32.mrf.mxu0
    %v2627 = vadd.f32 %v2578, %v2626
    %2628 = vmatmul.bf16.gmra.mxu0 %v756
    %v2629 = vpop.f32.mrf.mxu0
    %v2630 = vadd.f32 %v2581, %v2629
    %v2631 = vpop.f32.mrf.mxu0
    %v2632 = vadd.f32 %v2583, %v2631
    %2633 = vmatmul.bf16.gmra.mxu0 %v765
    %v2634 = vpop.f32.mrf.mxu0
    %v2635 = vadd.f32 %v2586, %v2634
    %v2636 = vpop.f32.mrf.mxu0
    %v2637 = vadd.f32 %v2588, %v2636
    %2638 = vmatmul.bf16.gmra.mxu0 %v774
    %v2639 = vpop.f32.mrf.mxu0
    %v2640 = vadd.f32 %v2591, %v2639
    %v2641 = vpop.f32.mrf.mxu0
    %v2642 = vadd.f32 %v2593, %v2641
    %2643 = vmatmul.bf16.gmra.mxu0 %v783
    %v2644 = vpop.f32.mrf.mxu0
    %v2645 = vadd.f32 %v2596, %v2644
    %v2646 = vpop.f32.mrf.mxu0
    %v2647 = vadd.f32 %v2598, %v2646
    %2648 = vmatmul.bf16.gmra.mxu0 %v792
    %v2649 = vpop.f32.mrf.mxu0
    %v2650 = vadd.f32 %v2601, %v2649
    %v2651 = vpop.f32.mrf.mxu0
    %v2652 = vadd.f32 %v2603, %v2651
    %2653 = vmatmul.bf16.gmra.mxu0 %v801
    %v2654 = vpop.f32.mrf.mxu0
    %v2655 = vadd.f32 %v2606, %v2654
    %v2656 = vpop.f32.mrf.mxu0
    %v2657 = vadd.f32 %v2608, %v2656
    %2658 = vdwg.mxu0
    %2659 = vmatpush.bf16.msra.mxu0 %v1992
    %2660 = vmatpush.bf16.msra.mxu0 %v1988
    %2661 = vmatpush.bf16.msra.mxu0 %v1984
    %2662 = vmatpush.bf16.msra.mxu0 %v1980
    %2663 = vmatpush.bf16.msra.mxu0 %v1976
    %2664 = vmatpush.bf16.msra.mxu0 %v1972
    %2665 = vmatpush.bf16.msra.mxu0 %v1968
    %2666 = vmatpush.bf16.msra.mxu0 %v1964
    %2667 = vmatmul.bf16.gmra.mxu0 %v739
    %v2668 = vpop.f32.mrf.mxu0
    %v2669 = vadd.f32 %v2620, %v2668
    %v2670 = vpop.f32.mrf.mxu0
    %v2671 = vadd.f32 %v2622, %v2670
    %2672 = vmatmul.bf16.gmra.mxu0 %v748
    %v2673 = vpop.f32.mrf.mxu0
    %v2674 = vadd.f32 %v2625, %v2673
    %v2675 = vpop.f32.mrf.mxu0
    %v2676 = vadd.f32 %v2627, %v2675
    %2677 = vmatmul.bf16.gmra.mxu0 %v757
    %v2678 = vpop.f32.mrf.mxu0
    %v2679 = vadd.f32 %v2630, %v2678
    %v2680 = vpop.f32.mrf.mxu0
    %v2681 = vadd.f32 %v2632, %v2680
    %2682 = vmatmul.bf16.gmra.mxu0 %v766
    %v2683 = vpop.f32.mrf.mxu0
    %v2684 = vadd.f32 %v2635, %v2683
    %v2685 = vpop.f32.mrf.mxu0
    %v2686 = vadd.f32 %v2637, %v2685
    %2687 = vmatmul.bf16.gmra.mxu0 %v775
    %v2688 = vpop.f32.mrf.mxu0
    %v2689 = vadd.f32 %v2640, %v2688
    %v2690 = vpop.f32.mrf.mxu0
    %v2691 = vadd.f32 %v2642, %v2690
    %2692 = vmatmul.bf16.gmra.mxu0 %v784
    %v2693 = vpop.f32.mrf.mxu0
    %v2694 = vadd.f32 %v2645, %v2693
    %v2695 = vpop.f32.mrf.mxu0
    %v2696 = vadd.f32 %v2647, %v2695
    %2697 = vmatmul.bf16.gmra.mxu0 %v793
    %v2698 = vpop.f32.mrf.mxu0
    %v2699 = vadd.f32 %v2650, %v2698
    %v2700 = vpop.f32.mrf.mxu0
    %v2701 = vadd.f32 %v2652, %v2700
    %2702 = vmatmul.bf16.gmra.mxu0 %v802
    %v2703 = vpop.f32.mrf.mxu0
    %v2704 = vadd.f32 %v2655, %v2703
    %v2705 = vpop.f32.mrf.mxu0
    %v2706 = vadd.f32 %v2657, %v2705
    %2707 = vdwg.mxu0
    %2708 = vmatpush.bf16.msra.mxu0 %v2024
    %2709 = vmatpush.bf16.msra.mxu0 %v2020
    %2710 = vmatpush.bf16.msra.mxu0 %v2016
    %2711 = vmatpush.bf16.msra.mxu0 %v2012
    %2712 = vmatpush.bf16.msra.mxu0 %v2008
    %2713 = vmatpush.bf16.msra.mxu0 %v2004
    %2714 = vmatpush.bf16.msra.mxu0 %v2000
    %2715 = vmatpush.bf16.msra.mxu0 %v1996
    %2716 = vmatmul.bf16.gmra.mxu0 %v740
    %v2717 = vpop.f32.mrf.mxu0
    %v2718 = vadd.f32 %v2669, %v2717
    %v2719 = vpop.f32.mrf.mxu0
    %v2720 = vadd.f32 %v2671, %v2719
    %2721 = vmatmul.bf16.gmra.mxu0 %v749
    %v2722 = vpop.f32.mrf.mxu0
    %v2723 = vadd.f32 %v2674, %v2722
    %v2724 = vpop.f32.mrf.mxu0
    %v2725 = vadd.f32 %v2676, %v2724
    %2726 = vmatmul.bf16.gmra.mxu0 %v758
    %v2727 = vpop.f32.mrf.mxu0
    %v2728 = vadd.f32 %v2679, %v2727
    %v2729 = vpop.f32.mrf.mxu0
    %v2730 = vadd.f32 %v2681, %v2729
    %2731 = vmatmul.bf16.gmra.mxu0 %v767
    %v2732 = vpop.f32.mrf.mxu0
    %v2733 = vadd.f32 %v2684, %v2732
    %v2734 = vpop.f32.mrf.mxu0
    %v2735 = vadd.f32 %v2686, %v2734
    %2736 = vmatmul.bf16.gmra.mxu0 %v776
    %v2737 = vpop.f32.mrf.mxu0
    %v2738 = vadd.f32 %v2689, %v2737
    %v2739 = vpop.f32.mrf.mxu0
    %v2740 = vadd.f32 %v2691, %v2739
    %2741 = vmatmul.bf16.gmra.mxu0 %v785
    %v2742 = vpop.f32.mrf.mxu0
    %v2743 = vadd.f32 %v2694, %v2742
    %v2744 = vpop.f32.mrf.mxu0
    %v2745 = vadd.f32 %v2696, %v2744
    %2746 = vmatmul.bf16.gmra.mxu0 %v794
    %v2747 = vpop.f32.mrf.mxu0
    %v2748 = vadd.f32 %v2699, %v2747
    %v2749 = vpop.f32.mrf.mxu0
    %v2750 = vadd.f32 %v2701, %v2749
    %2751 = vmatmul.bf16.gmra.mxu0 %v803
    %v2752 = vpop.f32.mrf.mxu0
    %v2753 = vadd.f32 %v2704, %v2752
    %v2754 = vpop.f32.mrf.mxu0
    %v2755 = vadd.f32 %v2706, %v2754
    %2756 = vdwg.mxu0
    %2757 = vmatpush.bf16.msra.mxu0 %v1769
    %2758 = vmatpush.bf16.msra.mxu0 %v1765
    %2759 = vmatpush.bf16.msra.mxu0 %v1761
    %2760 = vmatpush.bf16.msra.mxu0 %v1757
    %2761 = vmatpush.bf16.msra.mxu0 %v1753
    %2762 = vmatpush.bf16.msra.mxu0 %v1749
    %2763 = vmatpush.bf16.msra.mxu0 %v1745
    %2764 = vmatpush.bf16.msra.mxu0 %v1741
    %2765 = vmatmul.bf16.gmra.mxu0 %v732
    %v2766 = vpop.f32.mrf.mxu0
    %v2767 = vadd.f32 %v501, %v2766
    %v2768 = vpop.f32.mrf.mxu0
    %v2769 = vadd.f32 %v501, %v2768
    %2770 = vmatmul.bf16.gmra.mxu0 %v741
    %v2771 = vpop.f32.mrf.mxu0
    %v2772 = vadd.f32 %v501, %v2771
    %v2773 = vpop.f32.mrf.mxu0
    %v2774 = vadd.f32 %v501, %v2773
    %2775 = vmatmul.bf16.gmra.mxu0 %v750
    %v2776 = vpop.f32.mrf.mxu0
    %v2777 = vadd.f32 %v501, %v2776
    %v2778 = vpop.f32.mrf.mxu0
    %v2779 = vadd.f32 %v501, %v2778
    %2780 = vmatmul.bf16.gmra.mxu0 %v759
    %v2781 = vpop.f32.mrf.mxu0
    %v2782 = vadd.f32 %v501, %v2781
    %v2783 = vpop.f32.mrf.mxu0
    %v2784 = vadd.f32 %v501, %v2783
    %2785 = vmatmul.bf16.gmra.mxu0 %v768
    %v2786 = vpop.f32.mrf.mxu0
    %v2787 = vadd.f32 %v501, %v2786
    %v2788 = vpop.f32.mrf.mxu0
    %v2789 = vadd.f32 %v501, %v2788
    %2790 = vmatmul.bf16.gmra.mxu0 %v777
    %v2791 = vpop.f32.mrf.mxu0
    %v2792 = vadd.f32 %v501, %v2791
    %v2793 = vpop.f32.mrf.mxu0
    %v2794 = vadd.f32 %v501, %v2793
    %2795 = vmatmul.bf16.gmra.mxu0 %v786
    %v2796 = vpop.f32.mrf.mxu0
    %v2797 = vadd.f32 %v501, %v2796
    %v2798 = vpop.f32.mrf.mxu0
    %v2799 = vadd.f32 %v501, %v2798
    %2800 = vmatmul.bf16.gmra.mxu0 %v795
    %v2801 = vpop.f32.mrf.mxu0
    %v2802 = vadd.f32 %v501, %v2801
    %v2803 = vpop.f32.mrf.mxu0
    %v2804 = vadd.f32 %v501, %v2803
    %2805 = vdwg.mxu0
    %2806 = vmatpush.bf16.msra.mxu0 %v1801
    %2807 = vmatpush.bf16.msra.mxu0 %v1797
    %2808 = vmatpush.bf16.msra.mxu0 %v1793
    %2809 = vmatpush.bf16.msra.mxu0 %v1789
    %2810 = vmatpush.bf16.msra.mxu0 %v1785
    %2811 = vmatpush.bf16.msra.mxu0 %v1781
    %2812 = vmatpush.bf16.msra.mxu0 %v1777
    %2813 = vmatpush.bf16.msra.mxu0 %v1773
    %2814 = vmatmul.bf16.gmra.mxu0 %v733
    %v2815 = vpop.f32.mrf.mxu0
    %v2816 = vadd.f32 %v2767, %v2815
    %v2817 = vpop.f32.mrf.mxu0
    %v2818 = vadd.f32 %v2769, %v2817
    %2819 = vmatmul.bf16.gmra.mxu0 %v742
    %v2820 = vpop.f32.mrf.mxu0
    %v2821 = vadd.f32 %v2772, %v2820
    %v2822 = vpop.f32.mrf.mxu0
    %v2823 = vadd.f32 %v2774, %v2822
    %2824 = vmatmul.bf16.gmra.mxu0 %v751
    %v2825 = vpop.f32.mrf.mxu0
    %v2826 = vadd.f32 %v2777, %v2825
    %v2827 = vpop.f32.mrf.mxu0
    %v2828 = vadd.f32 %v2779, %v2827
    %2829 = vmatmul.bf16.gmra.mxu0 %v760
    %v2830 = vpop.f32.mrf.mxu0
    %v2831 = vadd.f32 %v2782, %v2830
    %v2832 = vpop.f32.mrf.mxu0
    %v2833 = vadd.f32 %v2784, %v2832
    %2834 = vmatmul.bf16.gmra.mxu0 %v769
    %v2835 = vpop.f32.mrf.mxu0
    %v2836 = vadd.f32 %v2787, %v2835
    %v2837 = vpop.f32.mrf.mxu0
    %v2838 = vadd.f32 %v2789, %v2837
    %2839 = vmatmul.bf16.gmra.mxu0 %v778
    %v2840 = vpop.f32.mrf.mxu0
    %v2841 = vadd.f32 %v2792, %v2840
    %v2842 = vpop.f32.mrf.mxu0
    %v2843 = vadd.f32 %v2794, %v2842
    %2844 = vmatmul.bf16.gmra.mxu0 %v787
    %v2845 = vpop.f32.mrf.mxu0
    %v2846 = vadd.f32 %v2797, %v2845
    %v2847 = vpop.f32.mrf.mxu0
    %v2848 = vadd.f32 %v2799, %v2847
    %2849 = vmatmul.bf16.gmra.mxu0 %v796
    %v2850 = vpop.f32.mrf.mxu0
    %v2851 = vadd.f32 %v2802, %v2850
    %v2852 = vpop.f32.mrf.mxu0
    %v2853 = vadd.f32 %v2804, %v2852
    %2854 = vdwg.mxu0
    %2855 = vmatpush.bf16.msra.mxu0 %v1833
    %2856 = vmatpush.bf16.msra.mxu0 %v1829
    %2857 = vmatpush.bf16.msra.mxu0 %v1825
    %2858 = vmatpush.bf16.msra.mxu0 %v1821
    %2859 = vmatpush.bf16.msra.mxu0 %v1817
    %2860 = vmatpush.bf16.msra.mxu0 %v1813
    %2861 = vmatpush.bf16.msra.mxu0 %v1809
    %2862 = vmatpush.bf16.msra.mxu0 %v1805
    %2863 = vmatmul.bf16.gmra.mxu0 %v734
    %v2864 = vpop.f32.mrf.mxu0
    %v2865 = vadd.f32 %v2816, %v2864
    %v2866 = vpop.f32.mrf.mxu0
    %v2867 = vadd.f32 %v2818, %v2866
    %2868 = vmatmul.bf16.gmra.mxu0 %v743
    %v2869 = vpop.f32.mrf.mxu0
    %v2870 = vadd.f32 %v2821, %v2869
    %v2871 = vpop.f32.mrf.mxu0
    %v2872 = vadd.f32 %v2823, %v2871
    %2873 = vmatmul.bf16.gmra.mxu0 %v752
    %v2874 = vpop.f32.mrf.mxu0
    %v2875 = vadd.f32 %v2826, %v2874
    %v2876 = vpop.f32.mrf.mxu0
    %v2877 = vadd.f32 %v2828, %v2876
    %2878 = vmatmul.bf16.gmra.mxu0 %v761
    %v2879 = vpop.f32.mrf.mxu0
    %v2880 = vadd.f32 %v2831, %v2879
    %v2881 = vpop.f32.mrf.mxu0
    %v2882 = vadd.f32 %v2833, %v2881
    %2883 = vmatmul.bf16.gmra.mxu0 %v770
    %v2884 = vpop.f32.mrf.mxu0
    %v2885 = vadd.f32 %v2836, %v2884
    %v2886 = vpop.f32.mrf.mxu0
    %v2887 = vadd.f32 %v2838, %v2886
    %2888 = vmatmul.bf16.gmra.mxu0 %v779
    %v2889 = vpop.f32.mrf.mxu0
    %v2890 = vadd.f32 %v2841, %v2889
    %v2891 = vpop.f32.mrf.mxu0
    %v2892 = vadd.f32 %v2843, %v2891
    %2893 = vmatmul.bf16.gmra.mxu0 %v788
    %v2894 = vpop.f32.mrf.mxu0
    %v2895 = vadd.f32 %v2846, %v2894
    %v2896 = vpop.f32.mrf.mxu0
    %v2897 = vadd.f32 %v2848, %v2896
    %2898 = vmatmul.bf16.gmra.mxu0 %v797
    %v2899 = vpop.f32.mrf.mxu0
    %v2900 = vadd.f32 %v2851, %v2899
    %v2901 = vpop.f32.mrf.mxu0
    %v2902 = vadd.f32 %v2853, %v2901
    %2903 = vdwg.mxu0
    %2904 = vmatpush.bf16.msra.mxu0 %v1865
    %2905 = vmatpush.bf16.msra.mxu0 %v1861
    %2906 = vmatpush.bf16.msra.mxu0 %v1857
    %2907 = vmatpush.bf16.msra.mxu0 %v1853
    %2908 = vmatpush.bf16.msra.mxu0 %v1849
    %2909 = vmatpush.bf16.msra.mxu0 %v1845
    %2910 = vmatpush.bf16.msra.mxu0 %v1841
    %2911 = vmatpush.bf16.msra.mxu0 %v1837
    %2912 = vmatmul.bf16.gmra.mxu0 %v735
    %v2913 = vpop.f32.mrf.mxu0
    %v2914 = vadd.f32 %v2865, %v2913
    %v2915 = vpop.f32.mrf.mxu0
    %v2916 = vadd.f32 %v2867, %v2915
    %2917 = vmatmul.bf16.gmra.mxu0 %v744
    %v2918 = vpop.f32.mrf.mxu0
    %v2919 = vadd.f32 %v2870, %v2918
    %v2920 = vpop.f32.mrf.mxu0
    %v2921 = vadd.f32 %v2872, %v2920
    %2922 = vmatmul.bf16.gmra.mxu0 %v753
    %v2923 = vpop.f32.mrf.mxu0
    %v2924 = vadd.f32 %v2875, %v2923
    %v2925 = vpop.f32.mrf.mxu0
    %v2926 = vadd.f32 %v2877, %v2925
    %2927 = vmatmul.bf16.gmra.mxu0 %v762
    %v2928 = vpop.f32.mrf.mxu0
    %v2929 = vadd.f32 %v2880, %v2928
    %v2930 = vpop.f32.mrf.mxu0
    %v2931 = vadd.f32 %v2882, %v2930
    %2932 = vmatmul.bf16.gmra.mxu0 %v771
    %v2933 = vpop.f32.mrf.mxu0
    %v2934 = vadd.f32 %v2885, %v2933
    %v2935 = vpop.f32.mrf.mxu0
    %v2936 = vadd.f32 %v2887, %v2935
    %2937 = vmatmul.bf16.gmra.mxu0 %v780
    %v2938 = vpop.f32.mrf.mxu0
    %v2939 = vadd.f32 %v2890, %v2938
    %v2940 = vpop.f32.mrf.mxu0
    %v2941 = vadd.f32 %v2892, %v2940
    %2942 = vmatmul.bf16.gmra.mxu0 %v789
    %v2943 = vpop.f32.mrf.mxu0
    %v2944 = vadd.f32 %v2895, %v2943
    %v2945 = vpop.f32.mrf.mxu0
    %v2946 = vadd.f32 %v2897, %v2945
    %2947 = vmatmul.bf16.gmra.mxu0 %v798
    %v2948 = vpop.f32.mrf.mxu0
    %v2949 = vadd.f32 %v2900, %v2948
    %v2950 = vpop.f32.mrf.mxu0
    %v2951 = vadd.f32 %v2902, %v2950
    %2952 = vdwg.mxu0
    %2953 = vmatpush.bf16.msra.mxu0 %v1897
    %2954 = vmatpush.bf16.msra.mxu0 %v1893
    %2955 = vmatpush.bf16.msra.mxu0 %v1889
    %2956 = vmatpush.bf16.msra.mxu0 %v1885
    %2957 = vmatpush.bf16.msra.mxu0 %v1881
    %2958 = vmatpush.bf16.msra.mxu0 %v1877
    %2959 = vmatpush.bf16.msra.mxu0 %v1873
    %2960 = vmatpush.bf16.msra.mxu0 %v1869
    %2961 = vmatmul.bf16.gmra.mxu0 %v736
    %v2962 = vpop.f32.mrf.mxu0
    %v2963 = vadd.f32 %v2914, %v2962
    %v2964 = vpop.f32.mrf.mxu0
    %v2965 = vadd.f32 %v2916, %v2964
    %2966 = vmatmul.bf16.gmra.mxu0 %v745
    %v2967 = vpop.f32.mrf.mxu0
    %v2968 = vadd.f32 %v2919, %v2967
    %v2969 = vpop.f32.mrf.mxu0
    %v2970 = vadd.f32 %v2921, %v2969
    %2971 = vmatmul.bf16.gmra.mxu0 %v754
    %v2972 = vpop.f32.mrf.mxu0
    %v2973 = vadd.f32 %v2924, %v2972
    %v2974 = vpop.f32.mrf.mxu0
    %v2975 = vadd.f32 %v2926, %v2974
    %2976 = vmatmul.bf16.gmra.mxu0 %v763
    %v2977 = vpop.f32.mrf.mxu0
    %v2978 = vadd.f32 %v2929, %v2977
    %v2979 = vpop.f32.mrf.mxu0
    %v2980 = vadd.f32 %v2931, %v2979
    %2981 = vmatmul.bf16.gmra.mxu0 %v772
    %v2982 = vpop.f32.mrf.mxu0
    %v2983 = vadd.f32 %v2934, %v2982
    %v2984 = vpop.f32.mrf.mxu0
    %v2985 = vadd.f32 %v2936, %v2984
    %2986 = vmatmul.bf16.gmra.mxu0 %v781
    %v2987 = vpop.f32.mrf.mxu0
    %v2988 = vadd.f32 %v2939, %v2987
    %v2989 = vpop.f32.mrf.mxu0
    %v2990 = vadd.f32 %v2941, %v2989
    %2991 = vmatmul.bf16.gmra.mxu0 %v790
    %v2992 = vpop.f32.mrf.mxu0
    %v2993 = vadd.f32 %v2944, %v2992
    %v2994 = vpop.f32.mrf.mxu0
    %v2995 = vadd.f32 %v2946, %v2994
    %2996 = vmatmul.bf16.gmra.mxu0 %v799
    %v2997 = vpop.f32.mrf.mxu0
    %v2998 = vadd.f32 %v2949, %v2997
    %v2999 = vpop.f32.mrf.mxu0
    %v3000 = vadd.f32 %v2951, %v2999
    %3001 = vdwg.mxu0
    %3002 = vmatpush.bf16.msra.mxu0 %v1929
    %3003 = vmatpush.bf16.msra.mxu0 %v1925
    %3004 = vmatpush.bf16.msra.mxu0 %v1921
    %3005 = vmatpush.bf16.msra.mxu0 %v1917
    %3006 = vmatpush.bf16.msra.mxu0 %v1913
    %3007 = vmatpush.bf16.msra.mxu0 %v1909
    %3008 = vmatpush.bf16.msra.mxu0 %v1905
    %3009 = vmatpush.bf16.msra.mxu0 %v1901
    %3010 = vmatmul.bf16.gmra.mxu0 %v737
    %v3011 = vpop.f32.mrf.mxu0
    %v3012 = vadd.f32 %v2963, %v3011
    %v3013 = vpop.f32.mrf.mxu0
    %v3014 = vadd.f32 %v2965, %v3013
    %3015 = vmatmul.bf16.gmra.mxu0 %v746
    %v3016 = vpop.f32.mrf.mxu0
    %v3017 = vadd.f32 %v2968, %v3016
    %v3018 = vpop.f32.mrf.mxu0
    %v3019 = vadd.f32 %v2970, %v3018
    %3020 = vmatmul.bf16.gmra.mxu0 %v755
    %v3021 = vpop.f32.mrf.mxu0
    %v3022 = vadd.f32 %v2973, %v3021
    %v3023 = vpop.f32.mrf.mxu0
    %v3024 = vadd.f32 %v2975, %v3023
    %3025 = vmatmul.bf16.gmra.mxu0 %v764
    %v3026 = vpop.f32.mrf.mxu0
    %v3027 = vadd.f32 %v2978, %v3026
    %v3028 = vpop.f32.mrf.mxu0
    %v3029 = vadd.f32 %v2980, %v3028
    %3030 = vmatmul.bf16.gmra.mxu0 %v773
    %v3031 = vpop.f32.mrf.mxu0
    %v3032 = vadd.f32 %v2983, %v3031
    %v3033 = vpop.f32.mrf.mxu0
    %v3034 = vadd.f32 %v2985, %v3033
    %3035 = vmatmul.bf16.gmra.mxu0 %v782
    %v3036 = vpop.f32.mrf.mxu0
    %v3037 = vadd.f32 %v2988, %v3036
    %v3038 = vpop.f32.mrf.mxu0
    %v3039 = vadd.f32 %v2990, %v3038
    %3040 = vmatmul.bf16.gmra.mxu0 %v791
    %v3041 = vpop.f32.mrf.mxu0
    %v3042 = vadd.f32 %v2993, %v3041
    %v3043 = vpop.f32.mrf.mxu0
    %v3044 = vadd.f32 %v2995, %v3043
    %3045 = vmatmul.bf16.gmra.mxu0 %v800
    %v3046 = vpop.f32.mrf.mxu0
    %v3047 = vadd.f32 %v2998, %v3046
    %v3048 = vpop.f32.mrf.mxu0
    %v3049 = vadd.f32 %v3000, %v3048
    %3050 = vdwg.mxu0
    %3051 = vmatpush.bf16.msra.mxu0 %v1961
    %3052 = vmatpush.bf16.msra.mxu0 %v1957
    %3053 = vmatpush.bf16.msra.mxu0 %v1953
    %3054 = vmatpush.bf16.msra.mxu0 %v1949
    %3055 = vmatpush.bf16.msra.mxu0 %v1945
    %3056 = vmatpush.bf16.msra.mxu0 %v1941
    %3057 = vmatpush.bf16.msra.mxu0 %v1937
    %3058 = vmatpush.bf16.msra.mxu0 %v1933
    %3059 = vmatmul.bf16.gmra.mxu0 %v738
    %v3060 = vpop.f32.mrf.mxu0
    %v3061 = vadd.f32 %v3012, %v3060
    %v3062 = vpop.f32.mrf.mxu0
    %v3063 = vadd.f32 %v3014, %v3062
    %3064 = vmatmul.bf16.gmra.mxu0 %v747
    %v3065 = vpop.f32.mrf.mxu0
    %v3066 = vadd.f32 %v3017, %v3065
    %v3067 = vpop.f32.mrf.mxu0
    %v3068 = vadd.f32 %v3019, %v3067
    %3069 = vmatmul.bf16.gmra.mxu0 %v756
    %v3070 = vpop.f32.mrf.mxu0
    %v3071 = vadd.f32 %v3022, %v3070
    %v3072 = vpop.f32.mrf.mxu0
    %v3073 = vadd.f32 %v3024, %v3072
    %3074 = vmatmul.bf16.gmra.mxu0 %v765
    %v3075 = vpop.f32.mrf.mxu0
    %v3076 = vadd.f32 %v3027, %v3075
    %v3077 = vpop.f32.mrf.mxu0
    %v3078 = vadd.f32 %v3029, %v3077
    %3079 = vmatmul.bf16.gmra.mxu0 %v774
    %v3080 = vpop.f32.mrf.mxu0
    %v3081 = vadd.f32 %v3032, %v3080
    %v3082 = vpop.f32.mrf.mxu0
    %v3083 = vadd.f32 %v3034, %v3082
    %3084 = vmatmul.bf16.gmra.mxu0 %v783
    %v3085 = vpop.f32.mrf.mxu0
    %v3086 = vadd.f32 %v3037, %v3085
    %v3087 = vpop.f32.mrf.mxu0
    %v3088 = vadd.f32 %v3039, %v3087
    %3089 = vmatmul.bf16.gmra.mxu0 %v792
    %v3090 = vpop.f32.mrf.mxu0
    %v3091 = vadd.f32 %v3042, %v3090
    %v3092 = vpop.f32.mrf.mxu0
    %v3093 = vadd.f32 %v3044, %v3092
    %3094 = vmatmul.bf16.gmra.mxu0 %v801
    %v3095 = vpop.f32.mrf.mxu0
    %v3096 = vadd.f32 %v3047, %v3095
    %v3097 = vpop.f32.mrf.mxu0
    %v3098 = vadd.f32 %v3049, %v3097
    %3099 = vdwg.mxu0
    %3100 = vmatpush.bf16.msra.mxu0 %v1993
    %3101 = vmatpush.bf16.msra.mxu0 %v1989
    %3102 = vmatpush.bf16.msra.mxu0 %v1985
    %3103 = vmatpush.bf16.msra.mxu0 %v1981
    %3104 = vmatpush.bf16.msra.mxu0 %v1977
    %3105 = vmatpush.bf16.msra.mxu0 %v1973
    %3106 = vmatpush.bf16.msra.mxu0 %v1969
    %3107 = vmatpush.bf16.msra.mxu0 %v1965
    %3108 = vmatmul.bf16.gmra.mxu0 %v739
    %v3109 = vpop.f32.mrf.mxu0
    %v3110 = vadd.f32 %v3061, %v3109
    %v3111 = vpop.f32.mrf.mxu0
    %v3112 = vadd.f32 %v3063, %v3111
    %3113 = vmatmul.bf16.gmra.mxu0 %v748
    %v3114 = vpop.f32.mrf.mxu0
    %v3115 = vadd.f32 %v3066, %v3114
    %v3116 = vpop.f32.mrf.mxu0
    %v3117 = vadd.f32 %v3068, %v3116
    %3118 = vmatmul.bf16.gmra.mxu0 %v757
    %v3119 = vpop.f32.mrf.mxu0
    %v3120 = vadd.f32 %v3071, %v3119
    %v3121 = vpop.f32.mrf.mxu0
    %v3122 = vadd.f32 %v3073, %v3121
    %3123 = vmatmul.bf16.gmra.mxu0 %v766
    %v3124 = vpop.f32.mrf.mxu0
    %v3125 = vadd.f32 %v3076, %v3124
    %v3126 = vpop.f32.mrf.mxu0
    %v3127 = vadd.f32 %v3078, %v3126
    %3128 = vmatmul.bf16.gmra.mxu0 %v775
    %v3129 = vpop.f32.mrf.mxu0
    %v3130 = vadd.f32 %v3081, %v3129
    %v3131 = vpop.f32.mrf.mxu0
    %v3132 = vadd.f32 %v3083, %v3131
    %3133 = vmatmul.bf16.gmra.mxu0 %v784
    %v3134 = vpop.f32.mrf.mxu0
    %v3135 = vadd.f32 %v3086, %v3134
    %v3136 = vpop.f32.mrf.mxu0
    %v3137 = vadd.f32 %v3088, %v3136
    %3138 = vmatmul.bf16.gmra.mxu0 %v793
    %v3139 = vpop.f32.mrf.mxu0
    %v3140 = vadd.f32 %v3091, %v3139
    %v3141 = vpop.f32.mrf.mxu0
    %v3142 = vadd.f32 %v3093, %v3141
    %3143 = vmatmul.bf16.gmra.mxu0 %v802
    %v3144 = vpop.f32.mrf.mxu0
    %v3145 = vadd.f32 %v3096, %v3144
    %v3146 = vpop.f32.mrf.mxu0
    %v3147 = vadd.f32 %v3098, %v3146
    %3148 = vdwg.mxu0
    %3149 = vmatpush.bf16.msra.mxu0 %v2025
    %3150 = vmatpush.bf16.msra.mxu0 %v2021
    %3151 = vmatpush.bf16.msra.mxu0 %v2017
    %3152 = vmatpush.bf16.msra.mxu0 %v2013
    %3153 = vmatpush.bf16.msra.mxu0 %v2009
    %3154 = vmatpush.bf16.msra.mxu0 %v2005
    %3155 = vmatpush.bf16.msra.mxu0 %v2001
    %3156 = vmatpush.bf16.msra.mxu0 %v1997
    %3157 = vmatmul.bf16.gmra.mxu0 %v740
    %v3158 = vpop.f32.mrf.mxu0
    %v3159 = vadd.f32 %v3110, %v3158
    %v3160 = vpop.f32.mrf.mxu0
    %v3161 = vadd.f32 %v3112, %v3160
    %3162 = vmatmul.bf16.gmra.mxu0 %v749
    %v3163 = vpop.f32.mrf.mxu0
    %v3164 = vadd.f32 %v3115, %v3163
    %v3165 = vpop.f32.mrf.mxu0
    %v3166 = vadd.f32 %v3117, %v3165
    %3167 = vmatmul.bf16.gmra.mxu0 %v758
    %v3168 = vpop.f32.mrf.mxu0
    %v3169 = vadd.f32 %v3120, %v3168
    %v3170 = vpop.f32.mrf.mxu0
    %v3171 = vadd.f32 %v3122, %v3170
    %3172 = vmatmul.bf16.gmra.mxu0 %v767
    %v3173 = vpop.f32.mrf.mxu0
    %v3174 = vadd.f32 %v3125, %v3173
    %v3175 = vpop.f32.mrf.mxu0
    %v3176 = vadd.f32 %v3127, %v3175
    %3177 = vmatmul.bf16.gmra.mxu0 %v776
    %v3178 = vpop.f32.mrf.mxu0
    %v3179 = vadd.f32 %v3130, %v3178
    %v3180 = vpop.f32.mrf.mxu0
    %v3181 = vadd.f32 %v3132, %v3180
    %3182 = vmatmul.bf16.gmra.mxu0 %v785
    %v3183 = vpop.f32.mrf.mxu0
    %v3184 = vadd.f32 %v3135, %v3183
    %v3185 = vpop.f32.mrf.mxu0
    %v3186 = vadd.f32 %v3137, %v3185
    %3187 = vmatmul.bf16.gmra.mxu0 %v794
    %v3188 = vpop.f32.mrf.mxu0
    %v3189 = vadd.f32 %v3140, %v3188
    %v3190 = vpop.f32.mrf.mxu0
    %v3191 = vadd.f32 %v3142, %v3190
    %3192 = vmatmul.bf16.gmra.mxu0 %v803
    %v3193 = vpop.f32.mrf.mxu0
    %v3194 = vadd.f32 %v3145, %v3193
    %v3195 = vpop.f32.mrf.mxu0
    %v3196 = vadd.f32 %v3147, %v3195
    %3197 = vdwg.mxu0
    %3198 = vmatpush.bf16.msra.mxu0 %v1770
    %3199 = vmatpush.bf16.msra.mxu0 %v1766
    %3200 = vmatpush.bf16.msra.mxu0 %v1762
    %3201 = vmatpush.bf16.msra.mxu0 %v1758
    %3202 = vmatpush.bf16.msra.mxu0 %v1754
    %3203 = vmatpush.bf16.msra.mxu0 %v1750
    %3204 = vmatpush.bf16.msra.mxu0 %v1746
    %3205 = vmatpush.bf16.msra.mxu0 %v1742
    %3206 = vmatmul.bf16.gmra.mxu0 %v732
    %v3207 = vpop.f32.mrf.mxu0
    %v3208 = vadd.f32 %v502, %v3207
    %v3209 = vpop.f32.mrf.mxu0
    %v3210 = vadd.f32 %v502, %v3209
    %3211 = vmatmul.bf16.gmra.mxu0 %v741
    %v3212 = vpop.f32.mrf.mxu0
    %v3213 = vadd.f32 %v502, %v3212
    %v3214 = vpop.f32.mrf.mxu0
    %v3215 = vadd.f32 %v502, %v3214
    %3216 = vmatmul.bf16.gmra.mxu0 %v750
    %v3217 = vpop.f32.mrf.mxu0
    %v3218 = vadd.f32 %v502, %v3217
    %v3219 = vpop.f32.mrf.mxu0
    %v3220 = vadd.f32 %v502, %v3219
    %3221 = vmatmul.bf16.gmra.mxu0 %v759
    %v3222 = vpop.f32.mrf.mxu0
    %v3223 = vadd.f32 %v502, %v3222
    %v3224 = vpop.f32.mrf.mxu0
    %v3225 = vadd.f32 %v502, %v3224
    %3226 = vmatmul.bf16.gmra.mxu0 %v768
    %v3227 = vpop.f32.mrf.mxu0
    %v3228 = vadd.f32 %v502, %v3227
    %v3229 = vpop.f32.mrf.mxu0
    %v3230 = vadd.f32 %v502, %v3229
    %3231 = vmatmul.bf16.gmra.mxu0 %v777
    %v3232 = vpop.f32.mrf.mxu0
    %v3233 = vadd.f32 %v502, %v3232
    %v3234 = vpop.f32.mrf.mxu0
    %v3235 = vadd.f32 %v502, %v3234
    %3236 = vmatmul.bf16.gmra.mxu0 %v786
    %v3237 = vpop.f32.mrf.mxu0
    %v3238 = vadd.f32 %v502, %v3237
    %v3239 = vpop.f32.mrf.mxu0
    %v3240 = vadd.f32 %v502, %v3239
    %3241 = vmatmul.bf16.gmra.mxu0 %v795
    %v3242 = vpop.f32.mrf.mxu0
    %v3243 = vadd.f32 %v502, %v3242
    %v3244 = vpop.f32.mrf.mxu0
    %v3245 = vadd.f32 %v502, %v3244
    %3246 = vdwg.mxu0
    %3247 = vmatpush.bf16.msra.mxu0 %v1802
    %3248 = vmatpush.bf16.msra.mxu0 %v1798
    %3249 = vmatpush.bf16.msra.mxu0 %v1794
    %3250 = vmatpush.bf16.msra.mxu0 %v1790
    %3251 = vmatpush.bf16.msra.mxu0 %v1786
    %3252 = vmatpush.bf16.msra.mxu0 %v1782
    %3253 = vmatpush.bf16.msra.mxu0 %v1778
    %3254 = vmatpush.bf16.msra.mxu0 %v1774
    %3255 = vmatmul.bf16.gmra.mxu0 %v733
    %v3256 = vpop.f32.mrf.mxu0
    %v3257 = vadd.f32 %v3208, %v3256
    %v3258 = vpop.f32.mrf.mxu0
    %v3259 = vadd.f32 %v3210, %v3258
    %3260 = vmatmul.bf16.gmra.mxu0 %v742
    %v3261 = vpop.f32.mrf.mxu0
    %v3262 = vadd.f32 %v3213, %v3261
    %v3263 = vpop.f32.mrf.mxu0
    %v3264 = vadd.f32 %v3215, %v3263
    %3265 = vmatmul.bf16.gmra.mxu0 %v751
    %v3266 = vpop.f32.mrf.mxu0
    %v3267 = vadd.f32 %v3218, %v3266
    %v3268 = vpop.f32.mrf.mxu0
    %v3269 = vadd.f32 %v3220, %v3268
    %3270 = vmatmul.bf16.gmra.mxu0 %v760
    %v3271 = vpop.f32.mrf.mxu0
    %v3272 = vadd.f32 %v3223, %v3271
    %v3273 = vpop.f32.mrf.mxu0
    %v3274 = vadd.f32 %v3225, %v3273
    %3275 = vmatmul.bf16.gmra.mxu0 %v769
    %v3276 = vpop.f32.mrf.mxu0
    %v3277 = vadd.f32 %v3228, %v3276
    %v3278 = vpop.f32.mrf.mxu0
    %v3279 = vadd.f32 %v3230, %v3278
    %3280 = vmatmul.bf16.gmra.mxu0 %v778
    %v3281 = vpop.f32.mrf.mxu0
    %v3282 = vadd.f32 %v3233, %v3281
    %v3283 = vpop.f32.mrf.mxu0
    %v3284 = vadd.f32 %v3235, %v3283
    %3285 = vmatmul.bf16.gmra.mxu0 %v787
    %v3286 = vpop.f32.mrf.mxu0
    %v3287 = vadd.f32 %v3238, %v3286
    %v3288 = vpop.f32.mrf.mxu0
    %v3289 = vadd.f32 %v3240, %v3288
    %3290 = vmatmul.bf16.gmra.mxu0 %v796
    %v3291 = vpop.f32.mrf.mxu0
    %v3292 = vadd.f32 %v3243, %v3291
    %v3293 = vpop.f32.mrf.mxu0
    %v3294 = vadd.f32 %v3245, %v3293
    %3295 = vdwg.mxu0
    %3296 = vmatpush.bf16.msra.mxu0 %v1834
    %3297 = vmatpush.bf16.msra.mxu0 %v1830
    %3298 = vmatpush.bf16.msra.mxu0 %v1826
    %3299 = vmatpush.bf16.msra.mxu0 %v1822
    %3300 = vmatpush.bf16.msra.mxu0 %v1818
    %3301 = vmatpush.bf16.msra.mxu0 %v1814
    %3302 = vmatpush.bf16.msra.mxu0 %v1810
    %3303 = vmatpush.bf16.msra.mxu0 %v1806
    %3304 = vmatmul.bf16.gmra.mxu0 %v734
    %v3305 = vpop.f32.mrf.mxu0
    %v3306 = vadd.f32 %v3257, %v3305
    %v3307 = vpop.f32.mrf.mxu0
    %v3308 = vadd.f32 %v3259, %v3307
    %3309 = vmatmul.bf16.gmra.mxu0 %v743
    %v3310 = vpop.f32.mrf.mxu0
    %v3311 = vadd.f32 %v3262, %v3310
    %v3312 = vpop.f32.mrf.mxu0
    %v3313 = vadd.f32 %v3264, %v3312
    %3314 = vmatmul.bf16.gmra.mxu0 %v752
    %v3315 = vpop.f32.mrf.mxu0
    %v3316 = vadd.f32 %v3267, %v3315
    %v3317 = vpop.f32.mrf.mxu0
    %v3318 = vadd.f32 %v3269, %v3317
    %3319 = vmatmul.bf16.gmra.mxu0 %v761
    %v3320 = vpop.f32.mrf.mxu0
    %v3321 = vadd.f32 %v3272, %v3320
    %v3322 = vpop.f32.mrf.mxu0
    %v3323 = vadd.f32 %v3274, %v3322
    %3324 = vmatmul.bf16.gmra.mxu0 %v770
    %v3325 = vpop.f32.mrf.mxu0
    %v3326 = vadd.f32 %v3277, %v3325
    %v3327 = vpop.f32.mrf.mxu0
    %v3328 = vadd.f32 %v3279, %v3327
    %3329 = vmatmul.bf16.gmra.mxu0 %v779
    %v3330 = vpop.f32.mrf.mxu0
    %v3331 = vadd.f32 %v3282, %v3330
    %v3332 = vpop.f32.mrf.mxu0
    %v3333 = vadd.f32 %v3284, %v3332
    %3334 = vmatmul.bf16.gmra.mxu0 %v788
    %v3335 = vpop.f32.mrf.mxu0
    %v3336 = vadd.f32 %v3287, %v3335
    %v3337 = vpop.f32.mrf.mxu0
    %v3338 = vadd.f32 %v3289, %v3337
    %3339 = vmatmul.bf16.gmra.mxu0 %v797
    %v3340 = vpop.f32.mrf.mxu0
    %v3341 = vadd.f32 %v3292, %v3340
    %v3342 = vpop.f32.mrf.mxu0
    %v3343 = vadd.f32 %v3294, %v3342
    %3344 = vdwg.mxu0
    %3345 = vmatpush.bf16.msra.mxu0 %v1866
    %3346 = vmatpush.bf16.msra.mxu0 %v1862
    %3347 = vmatpush.bf16.msra.mxu0 %v1858
    %3348 = vmatpush.bf16.msra.mxu0 %v1854
    %3349 = vmatpush.bf16.msra.mxu0 %v1850
    %3350 = vmatpush.bf16.msra.mxu0 %v1846
    %3351 = vmatpush.bf16.msra.mxu0 %v1842
    %3352 = vmatpush.bf16.msra.mxu0 %v1838
    %3353 = vmatmul.bf16.gmra.mxu0 %v735
    %v3354 = vpop.f32.mrf.mxu0
    %v3355 = vadd.f32 %v3306, %v3354
    %v3356 = vpop.f32.mrf.mxu0
    %v3357 = vadd.f32 %v3308, %v3356
    %3358 = vmatmul.bf16.gmra.mxu0 %v744
    %v3359 = vpop.f32.mrf.mxu0
    %v3360 = vadd.f32 %v3311, %v3359
    %v3361 = vpop.f32.mrf.mxu0
    %v3362 = vadd.f32 %v3313, %v3361
    %3363 = vmatmul.bf16.gmra.mxu0 %v753
    %v3364 = vpop.f32.mrf.mxu0
    %v3365 = vadd.f32 %v3316, %v3364
    %v3366 = vpop.f32.mrf.mxu0
    %v3367 = vadd.f32 %v3318, %v3366
    %3368 = vmatmul.bf16.gmra.mxu0 %v762
    %v3369 = vpop.f32.mrf.mxu0
    %v3370 = vadd.f32 %v3321, %v3369
    %v3371 = vpop.f32.mrf.mxu0
    %v3372 = vadd.f32 %v3323, %v3371
    %3373 = vmatmul.bf16.gmra.mxu0 %v771
    %v3374 = vpop.f32.mrf.mxu0
    %v3375 = vadd.f32 %v3326, %v3374
    %v3376 = vpop.f32.mrf.mxu0
    %v3377 = vadd.f32 %v3328, %v3376
    %3378 = vmatmul.bf16.gmra.mxu0 %v780
    %v3379 = vpop.f32.mrf.mxu0
    %v3380 = vadd.f32 %v3331, %v3379
    %v3381 = vpop.f32.mrf.mxu0
    %v3382 = vadd.f32 %v3333, %v3381
    %3383 = vmatmul.bf16.gmra.mxu0 %v789
    %v3384 = vpop.f32.mrf.mxu0
    %v3385 = vadd.f32 %v3336, %v3384
    %v3386 = vpop.f32.mrf.mxu0
    %v3387 = vadd.f32 %v3338, %v3386
    %3388 = vmatmul.bf16.gmra.mxu0 %v798
    %v3389 = vpop.f32.mrf.mxu0
    %v3390 = vadd.f32 %v3341, %v3389
    %v3391 = vpop.f32.mrf.mxu0
    %v3392 = vadd.f32 %v3343, %v3391
    %3393 = vdwg.mxu0
    %3394 = vmatpush.bf16.msra.mxu0 %v1898
    %3395 = vmatpush.bf16.msra.mxu0 %v1894
    %3396 = vmatpush.bf16.msra.mxu0 %v1890
    %3397 = vmatpush.bf16.msra.mxu0 %v1886
    %3398 = vmatpush.bf16.msra.mxu0 %v1882
    %3399 = vmatpush.bf16.msra.mxu0 %v1878
    %3400 = vmatpush.bf16.msra.mxu0 %v1874
    %3401 = vmatpush.bf16.msra.mxu0 %v1870
    %3402 = vmatmul.bf16.gmra.mxu0 %v736
    %v3403 = vpop.f32.mrf.mxu0
    %v3404 = vadd.f32 %v3355, %v3403
    %v3405 = vpop.f32.mrf.mxu0
    %v3406 = vadd.f32 %v3357, %v3405
    %3407 = vmatmul.bf16.gmra.mxu0 %v745
    %v3408 = vpop.f32.mrf.mxu0
    %v3409 = vadd.f32 %v3360, %v3408
    %v3410 = vpop.f32.mrf.mxu0
    %v3411 = vadd.f32 %v3362, %v3410
    %3412 = vmatmul.bf16.gmra.mxu0 %v754
    %v3413 = vpop.f32.mrf.mxu0
    %v3414 = vadd.f32 %v3365, %v3413
    %v3415 = vpop.f32.mrf.mxu0
    %v3416 = vadd.f32 %v3367, %v3415
    %3417 = vmatmul.bf16.gmra.mxu0 %v763
    %v3418 = vpop.f32.mrf.mxu0
    %v3419 = vadd.f32 %v3370, %v3418
    %v3420 = vpop.f32.mrf.mxu0
    %v3421 = vadd.f32 %v3372, %v3420
    %3422 = vmatmul.bf16.gmra.mxu0 %v772
    %v3423 = vpop.f32.mrf.mxu0
    %v3424 = vadd.f32 %v3375, %v3423
    %v3425 = vpop.f32.mrf.mxu0
    %v3426 = vadd.f32 %v3377, %v3425
    %3427 = vmatmul.bf16.gmra.mxu0 %v781
    %v3428 = vpop.f32.mrf.mxu0
    %v3429 = vadd.f32 %v3380, %v3428
    %v3430 = vpop.f32.mrf.mxu0
    %v3431 = vadd.f32 %v3382, %v3430
    %3432 = vmatmul.bf16.gmra.mxu0 %v790
    %v3433 = vpop.f32.mrf.mxu0
    %v3434 = vadd.f32 %v3385, %v3433
    %v3435 = vpop.f32.mrf.mxu0
    %v3436 = vadd.f32 %v3387, %v3435
    %3437 = vmatmul.bf16.gmra.mxu0 %v799
    %v3438 = vpop.f32.mrf.mxu0
    %v3439 = vadd.f32 %v3390, %v3438
    %v3440 = vpop.f32.mrf.mxu0
    %v3441 = vadd.f32 %v3392, %v3440
    %3442 = vdwg.mxu0
    %3443 = vmatpush.bf16.msra.mxu0 %v1930
    %3444 = vmatpush.bf16.msra.mxu0 %v1926
    %3445 = vmatpush.bf16.msra.mxu0 %v1922
    %3446 = vmatpush.bf16.msra.mxu0 %v1918
    %3447 = vmatpush.bf16.msra.mxu0 %v1914
    %3448 = vmatpush.bf16.msra.mxu0 %v1910
    %3449 = vmatpush.bf16.msra.mxu0 %v1906
    %3450 = vmatpush.bf16.msra.mxu0 %v1902
    %3451 = vmatmul.bf16.gmra.mxu0 %v737
    %v3452 = vpop.f32.mrf.mxu0
    %v3453 = vadd.f32 %v3404, %v3452
    %v3454 = vpop.f32.mrf.mxu0
    %v3455 = vadd.f32 %v3406, %v3454
    %3456 = vmatmul.bf16.gmra.mxu0 %v746
    %v3457 = vpop.f32.mrf.mxu0
    %v3458 = vadd.f32 %v3409, %v3457
    %v3459 = vpop.f32.mrf.mxu0
    %v3460 = vadd.f32 %v3411, %v3459
    %3461 = vmatmul.bf16.gmra.mxu0 %v755
    %v3462 = vpop.f32.mrf.mxu0
    %v3463 = vadd.f32 %v3414, %v3462
    %v3464 = vpop.f32.mrf.mxu0
    %v3465 = vadd.f32 %v3416, %v3464
    %3466 = vmatmul.bf16.gmra.mxu0 %v764
    %v3467 = vpop.f32.mrf.mxu0
    %v3468 = vadd.f32 %v3419, %v3467
    %v3469 = vpop.f32.mrf.mxu0
    %v3470 = vadd.f32 %v3421, %v3469
    %3471 = vmatmul.bf16.gmra.mxu0 %v773
    %v3472 = vpop.f32.mrf.mxu0
    %v3473 = vadd.f32 %v3424, %v3472
    %v3474 = vpop.f32.mrf.mxu0
    %v3475 = vadd.f32 %v3426, %v3474
    %3476 = vmatmul.bf16.gmra.mxu0 %v782
    %v3477 = vpop.f32.mrf.mxu0
    %v3478 = vadd.f32 %v3429, %v3477
    %v3479 = vpop.f32.mrf.mxu0
    %v3480 = vadd.f32 %v3431, %v3479
    %3481 = vmatmul.bf16.gmra.mxu0 %v791
    %v3482 = vpop.f32.mrf.mxu0
    %v3483 = vadd.f32 %v3434, %v3482
    %v3484 = vpop.f32.mrf.mxu0
    %v3485 = vadd.f32 %v3436, %v3484
    %3486 = vmatmul.bf16.gmra.mxu0 %v800
    %v3487 = vpop.f32.mrf.mxu0
    %v3488 = vadd.f32 %v3439, %v3487
    %v3489 = vpop.f32.mrf.mxu0
    %v3490 = vadd.f32 %v3441, %v3489
    %3491 = vdwg.mxu0
    %3492 = vmatpush.bf16.msra.mxu0 %v1962
    %3493 = vmatpush.bf16.msra.mxu0 %v1958
    %3494 = vmatpush.bf16.msra.mxu0 %v1954
    %3495 = vmatpush.bf16.msra.mxu0 %v1950
    %3496 = vmatpush.bf16.msra.mxu0 %v1946
    %3497 = vmatpush.bf16.msra.mxu0 %v1942
    %3498 = vmatpush.bf16.msra.mxu0 %v1938
    %3499 = vmatpush.bf16.msra.mxu0 %v1934
    %3500 = vmatmul.bf16.gmra.mxu0 %v738
    %v3501 = vpop.f32.mrf.mxu0
    %v3502 = vadd.f32 %v3453, %v3501
    %v3503 = vpop.f32.mrf.mxu0
    %v3504 = vadd.f32 %v3455, %v3503
    %3505 = vmatmul.bf16.gmra.mxu0 %v747
    %v3506 = vpop.f32.mrf.mxu0
    %v3507 = vadd.f32 %v3458, %v3506
    %v3508 = vpop.f32.mrf.mxu0
    %v3509 = vadd.f32 %v3460, %v3508
    %3510 = vmatmul.bf16.gmra.mxu0 %v756
    %v3511 = vpop.f32.mrf.mxu0
    %v3512 = vadd.f32 %v3463, %v3511
    %v3513 = vpop.f32.mrf.mxu0
    %v3514 = vadd.f32 %v3465, %v3513
    %3515 = vmatmul.bf16.gmra.mxu0 %v765
    %v3516 = vpop.f32.mrf.mxu0
    %v3517 = vadd.f32 %v3468, %v3516
    %v3518 = vpop.f32.mrf.mxu0
    %v3519 = vadd.f32 %v3470, %v3518
    %3520 = vmatmul.bf16.gmra.mxu0 %v774
    %v3521 = vpop.f32.mrf.mxu0
    %v3522 = vadd.f32 %v3473, %v3521
    %v3523 = vpop.f32.mrf.mxu0
    %v3524 = vadd.f32 %v3475, %v3523
    %3525 = vmatmul.bf16.gmra.mxu0 %v783
    %v3526 = vpop.f32.mrf.mxu0
    %v3527 = vadd.f32 %v3478, %v3526
    %v3528 = vpop.f32.mrf.mxu0
    %v3529 = vadd.f32 %v3480, %v3528
    %3530 = vmatmul.bf16.gmra.mxu0 %v792
    %v3531 = vpop.f32.mrf.mxu0
    %v3532 = vadd.f32 %v3483, %v3531
    %v3533 = vpop.f32.mrf.mxu0
    %v3534 = vadd.f32 %v3485, %v3533
    %3535 = vmatmul.bf16.gmra.mxu0 %v801
    %v3536 = vpop.f32.mrf.mxu0
    %v3537 = vadd.f32 %v3488, %v3536
    %v3538 = vpop.f32.mrf.mxu0
    %v3539 = vadd.f32 %v3490, %v3538
    %3540 = vdwg.mxu0
    %3541 = vmatpush.bf16.msra.mxu0 %v1994
    %3542 = vmatpush.bf16.msra.mxu0 %v1990
    %3543 = vmatpush.bf16.msra.mxu0 %v1986
    %3544 = vmatpush.bf16.msra.mxu0 %v1982
    %3545 = vmatpush.bf16.msra.mxu0 %v1978
    %3546 = vmatpush.bf16.msra.mxu0 %v1974
    %3547 = vmatpush.bf16.msra.mxu0 %v1970
    %3548 = vmatpush.bf16.msra.mxu0 %v1966
    %3549 = vmatmul.bf16.gmra.mxu0 %v739
    %v3550 = vpop.f32.mrf.mxu0
    %v3551 = vadd.f32 %v3502, %v3550
    %v3552 = vpop.f32.mrf.mxu0
    %v3553 = vadd.f32 %v3504, %v3552
    %3554 = vmatmul.bf16.gmra.mxu0 %v748
    %v3555 = vpop.f32.mrf.mxu0
    %v3556 = vadd.f32 %v3507, %v3555
    %v3557 = vpop.f32.mrf.mxu0
    %v3558 = vadd.f32 %v3509, %v3557
    %3559 = vmatmul.bf16.gmra.mxu0 %v757
    %v3560 = vpop.f32.mrf.mxu0
    %v3561 = vadd.f32 %v3512, %v3560
    %v3562 = vpop.f32.mrf.mxu0
    %v3563 = vadd.f32 %v3514, %v3562
    %3564 = vmatmul.bf16.gmra.mxu0 %v766
    %v3565 = vpop.f32.mrf.mxu0
    %v3566 = vadd.f32 %v3517, %v3565
    %v3567 = vpop.f32.mrf.mxu0
    %v3568 = vadd.f32 %v3519, %v3567
    %3569 = vmatmul.bf16.gmra.mxu0 %v775
    %v3570 = vpop.f32.mrf.mxu0
    %v3571 = vadd.f32 %v3522, %v3570
    %v3572 = vpop.f32.mrf.mxu0
    %v3573 = vadd.f32 %v3524, %v3572
    %3574 = vmatmul.bf16.gmra.mxu0 %v784
    %v3575 = vpop.f32.mrf.mxu0
    %v3576 = vadd.f32 %v3527, %v3575
    %v3577 = vpop.f32.mrf.mxu0
    %v3578 = vadd.f32 %v3529, %v3577
    %3579 = vmatmul.bf16.gmra.mxu0 %v793
    %v3580 = vpop.f32.mrf.mxu0
    %v3581 = vadd.f32 %v3532, %v3580
    %v3582 = vpop.f32.mrf.mxu0
    %v3583 = vadd.f32 %v3534, %v3582
    %3584 = vmatmul.bf16.gmra.mxu0 %v802
    %v3585 = vpop.f32.mrf.mxu0
    %v3586 = vadd.f32 %v3537, %v3585
    %v3587 = vpop.f32.mrf.mxu0
    %v3588 = vadd.f32 %v3539, %v3587
    %3589 = vdwg.mxu0
    %3590 = vmatpush.bf16.msra.mxu0 %v2026
    %3591 = vmatpush.bf16.msra.mxu0 %v2022
    %3592 = vmatpush.bf16.msra.mxu0 %v2018
    %3593 = vmatpush.bf16.msra.mxu0 %v2014
    %3594 = vmatpush.bf16.msra.mxu0 %v2010
    %3595 = vmatpush.bf16.msra.mxu0 %v2006
    %3596 = vmatpush.bf16.msra.mxu0 %v2002
    %3597 = vmatpush.bf16.msra.mxu0 %v1998
    %3598 = vmatmul.bf16.gmra.mxu0 %v740
    %v3599 = vpop.f32.mrf.mxu0
    %v3600 = vadd.f32 %v3551, %v3599
    %v3601 = vpop.f32.mrf.mxu0
    %v3602 = vadd.f32 %v3553, %v3601
    %3603 = vmatmul.bf16.gmra.mxu0 %v749
    %v3604 = vpop.f32.mrf.mxu0
    %v3605 = vadd.f32 %v3556, %v3604
    %v3606 = vpop.f32.mrf.mxu0
    %v3607 = vadd.f32 %v3558, %v3606
    %3608 = vmatmul.bf16.gmra.mxu0 %v758
    %v3609 = vpop.f32.mrf.mxu0
    %v3610 = vadd.f32 %v3561, %v3609
    %v3611 = vpop.f32.mrf.mxu0
    %v3612 = vadd.f32 %v3563, %v3611
    %3613 = vmatmul.bf16.gmra.mxu0 %v767
    %v3614 = vpop.f32.mrf.mxu0
    %v3615 = vadd.f32 %v3566, %v3614
    %v3616 = vpop.f32.mrf.mxu0
    %v3617 = vadd.f32 %v3568, %v3616
    %3618 = vmatmul.bf16.gmra.mxu0 %v776
    %v3619 = vpop.f32.mrf.mxu0
    %v3620 = vadd.f32 %v3571, %v3619
    %v3621 = vpop.f32.mrf.mxu0
    %v3622 = vadd.f32 %v3573, %v3621
    %3623 = vmatmul.bf16.gmra.mxu0 %v785
    %v3624 = vpop.f32.mrf.mxu0
    %v3625 = vadd.f32 %v3576, %v3624
    %v3626 = vpop.f32.mrf.mxu0
    %v3627 = vadd.f32 %v3578, %v3626
    %3628 = vmatmul.bf16.gmra.mxu0 %v794
    %v3629 = vpop.f32.mrf.mxu0
    %v3630 = vadd.f32 %v3581, %v3629
    %v3631 = vpop.f32.mrf.mxu0
    %v3632 = vadd.f32 %v3583, %v3631
    %3633 = vmatmul.bf16.gmra.mxu0 %v803
    %v3634 = vpop.f32.mrf.mxu0
    %v3635 = vadd.f32 %v3586, %v3634
    %v3636 = vpop.f32.mrf.mxu0
    %v3637 = vadd.f32 %v3588, %v3636
    %3638 = vdwg.mxu0
    %3639 = vmatpush.bf16.msra.mxu0 %v1771
    %3640 = vmatpush.bf16.msra.mxu0 %v1767
    %3641 = vmatpush.bf16.msra.mxu0 %v1763
    %3642 = vmatpush.bf16.msra.mxu0 %v1759
    %3643 = vmatpush.bf16.msra.mxu0 %v1755
    %3644 = vmatpush.bf16.msra.mxu0 %v1751
    %3645 = vmatpush.bf16.msra.mxu0 %v1747
    %3646 = vmatpush.bf16.msra.mxu0 %v1743
    %3647 = vmatmul.bf16.gmra.mxu0 %v732
    %v3648 = vpop.f32.mrf.mxu0
    %v3649 = vadd.f32 %v503, %v3648
    %v3650 = vpop.f32.mrf.mxu0
    %v3651 = vadd.f32 %v503, %v3650
    %3652 = vmatmul.bf16.gmra.mxu0 %v741
    %v3653 = vpop.f32.mrf.mxu0
    %v3654 = vadd.f32 %v503, %v3653
    %v3655 = vpop.f32.mrf.mxu0
    %v3656 = vadd.f32 %v503, %v3655
    %3657 = vmatmul.bf16.gmra.mxu0 %v750
    %v3658 = vpop.f32.mrf.mxu0
    %v3659 = vadd.f32 %v503, %v3658
    %v3660 = vpop.f32.mrf.mxu0
    %v3661 = vadd.f32 %v503, %v3660
    %3662 = vmatmul.bf16.gmra.mxu0 %v759
    %v3663 = vpop.f32.mrf.mxu0
    %v3664 = vadd.f32 %v503, %v3663
    %v3665 = vpop.f32.mrf.mxu0
    %v3666 = vadd.f32 %v503, %v3665
    %3667 = vmatmul.bf16.gmra.mxu0 %v768
    %v3668 = vpop.f32.mrf.mxu0
    %v3669 = vadd.f32 %v503, %v3668
    %v3670 = vpop.f32.mrf.mxu0
    %v3671 = vadd.f32 %v503, %v3670
    %3672 = vmatmul.bf16.gmra.mxu0 %v777
    %v3673 = vpop.f32.mrf.mxu0
    %v3674 = vadd.f32 %v503, %v3673
    %v3675 = vpop.f32.mrf.mxu0
    %v3676 = vadd.f32 %v503, %v3675
    %3677 = vmatmul.bf16.gmra.mxu0 %v786
    %v3678 = vpop.f32.mrf.mxu0
    %v3679 = vadd.f32 %v503, %v3678
    %v3680 = vpop.f32.mrf.mxu0
    %v3681 = vadd.f32 %v503, %v3680
    %3682 = vmatmul.bf16.gmra.mxu0 %v795
    %v3683 = vpop.f32.mrf.mxu0
    %v3684 = vadd.f32 %v503, %v3683
    %v3685 = vpop.f32.mrf.mxu0
    %v3686 = vadd.f32 %v503, %v3685
    %3687 = vdwg.mxu0
    %3688 = vmatpush.bf16.msra.mxu0 %v1803
    %3689 = vmatpush.bf16.msra.mxu0 %v1799
    %3690 = vmatpush.bf16.msra.mxu0 %v1795
    %3691 = vmatpush.bf16.msra.mxu0 %v1791
    %3692 = vmatpush.bf16.msra.mxu0 %v1787
    %3693 = vmatpush.bf16.msra.mxu0 %v1783
    %3694 = vmatpush.bf16.msra.mxu0 %v1779
    %3695 = vmatpush.bf16.msra.mxu0 %v1775
    %3696 = vmatmul.bf16.gmra.mxu0 %v733
    %v3697 = vpop.f32.mrf.mxu0
    %v3698 = vadd.f32 %v3649, %v3697
    %v3699 = vpop.f32.mrf.mxu0
    %v3700 = vadd.f32 %v3651, %v3699
    %3701 = vmatmul.bf16.gmra.mxu0 %v742
    %v3702 = vpop.f32.mrf.mxu0
    %v3703 = vadd.f32 %v3654, %v3702
    %v3704 = vpop.f32.mrf.mxu0
    %v3705 = vadd.f32 %v3656, %v3704
    %3706 = vmatmul.bf16.gmra.mxu0 %v751
    %v3707 = vpop.f32.mrf.mxu0
    %v3708 = vadd.f32 %v3659, %v3707
    %v3709 = vpop.f32.mrf.mxu0
    %v3710 = vadd.f32 %v3661, %v3709
    %3711 = vmatmul.bf16.gmra.mxu0 %v760
    %v3712 = vpop.f32.mrf.mxu0
    %v3713 = vadd.f32 %v3664, %v3712
    %v3714 = vpop.f32.mrf.mxu0
    %v3715 = vadd.f32 %v3666, %v3714
    %3716 = vmatmul.bf16.gmra.mxu0 %v769
    %v3717 = vpop.f32.mrf.mxu0
    %v3718 = vadd.f32 %v3669, %v3717
    %v3719 = vpop.f32.mrf.mxu0
    %v3720 = vadd.f32 %v3671, %v3719
    %3721 = vmatmul.bf16.gmra.mxu0 %v778
    %v3722 = vpop.f32.mrf.mxu0
    %v3723 = vadd.f32 %v3674, %v3722
    %v3724 = vpop.f32.mrf.mxu0
    %v3725 = vadd.f32 %v3676, %v3724
    %3726 = vmatmul.bf16.gmra.mxu0 %v787
    %v3727 = vpop.f32.mrf.mxu0
    %v3728 = vadd.f32 %v3679, %v3727
    %v3729 = vpop.f32.mrf.mxu0
    %v3730 = vadd.f32 %v3681, %v3729
    %3731 = vmatmul.bf16.gmra.mxu0 %v796
    %v3732 = vpop.f32.mrf.mxu0
    %v3733 = vadd.f32 %v3684, %v3732
    %v3734 = vpop.f32.mrf.mxu0
    %v3735 = vadd.f32 %v3686, %v3734
    %3736 = vdwg.mxu0
    %3737 = vmatpush.bf16.msra.mxu0 %v1835
    %3738 = vmatpush.bf16.msra.mxu0 %v1831
    %3739 = vmatpush.bf16.msra.mxu0 %v1827
    %3740 = vmatpush.bf16.msra.mxu0 %v1823
    %3741 = vmatpush.bf16.msra.mxu0 %v1819
    %3742 = vmatpush.bf16.msra.mxu0 %v1815
    %3743 = vmatpush.bf16.msra.mxu0 %v1811
    %3744 = vmatpush.bf16.msra.mxu0 %v1807
    %3745 = vmatmul.bf16.gmra.mxu0 %v734
    %v3746 = vpop.f32.mrf.mxu0
    %v3747 = vadd.f32 %v3698, %v3746
    %v3748 = vpop.f32.mrf.mxu0
    %v3749 = vadd.f32 %v3700, %v3748
    %3750 = vmatmul.bf16.gmra.mxu0 %v743
    %v3751 = vpop.f32.mrf.mxu0
    %v3752 = vadd.f32 %v3703, %v3751
    %v3753 = vpop.f32.mrf.mxu0
    %v3754 = vadd.f32 %v3705, %v3753
    %3755 = vmatmul.bf16.gmra.mxu0 %v752
    %v3756 = vpop.f32.mrf.mxu0
    %v3757 = vadd.f32 %v3708, %v3756
    %v3758 = vpop.f32.mrf.mxu0
    %v3759 = vadd.f32 %v3710, %v3758
    %3760 = vmatmul.bf16.gmra.mxu0 %v761
    %v3761 = vpop.f32.mrf.mxu0
    %v3762 = vadd.f32 %v3713, %v3761
    %v3763 = vpop.f32.mrf.mxu0
    %v3764 = vadd.f32 %v3715, %v3763
    %3765 = vmatmul.bf16.gmra.mxu0 %v770
    %v3766 = vpop.f32.mrf.mxu0
    %v3767 = vadd.f32 %v3718, %v3766
    %v3768 = vpop.f32.mrf.mxu0
    %v3769 = vadd.f32 %v3720, %v3768
    %3770 = vmatmul.bf16.gmra.mxu0 %v779
    %v3771 = vpop.f32.mrf.mxu0
    %v3772 = vadd.f32 %v3723, %v3771
    %v3773 = vpop.f32.mrf.mxu0
    %v3774 = vadd.f32 %v3725, %v3773
    %3775 = vmatmul.bf16.gmra.mxu0 %v788
    %v3776 = vpop.f32.mrf.mxu0
    %v3777 = vadd.f32 %v3728, %v3776
    %v3778 = vpop.f32.mrf.mxu0
    %v3779 = vadd.f32 %v3730, %v3778
    %3780 = vmatmul.bf16.gmra.mxu0 %v797
    %v3781 = vpop.f32.mrf.mxu0
    %v3782 = vadd.f32 %v3733, %v3781
    %v3783 = vpop.f32.mrf.mxu0
    %v3784 = vadd.f32 %v3735, %v3783
    %3785 = vdwg.mxu0
    %3786 = vmatpush.bf16.msra.mxu0 %v1867
    %3787 = vmatpush.bf16.msra.mxu0 %v1863
    %3788 = vmatpush.bf16.msra.mxu0 %v1859
    %3789 = vmatpush.bf16.msra.mxu0 %v1855
    %3790 = vmatpush.bf16.msra.mxu0 %v1851
    %3791 = vmatpush.bf16.msra.mxu0 %v1847
    %3792 = vmatpush.bf16.msra.mxu0 %v1843
    %3793 = vmatpush.bf16.msra.mxu0 %v1839
    %3794 = vmatmul.bf16.gmra.mxu0 %v735
    %v3795 = vpop.f32.mrf.mxu0
    %v3796 = vadd.f32 %v3747, %v3795
    %v3797 = vpop.f32.mrf.mxu0
    %v3798 = vadd.f32 %v3749, %v3797
    %3799 = vmatmul.bf16.gmra.mxu0 %v744
    %v3800 = vpop.f32.mrf.mxu0
    %v3801 = vadd.f32 %v3752, %v3800
    %v3802 = vpop.f32.mrf.mxu0
    %v3803 = vadd.f32 %v3754, %v3802
    %3804 = vmatmul.bf16.gmra.mxu0 %v753
    %v3805 = vpop.f32.mrf.mxu0
    %v3806 = vadd.f32 %v3757, %v3805
    %v3807 = vpop.f32.mrf.mxu0
    %v3808 = vadd.f32 %v3759, %v3807
    %3809 = vmatmul.bf16.gmra.mxu0 %v762
    %v3810 = vpop.f32.mrf.mxu0
    %v3811 = vadd.f32 %v3762, %v3810
    %v3812 = vpop.f32.mrf.mxu0
    %v3813 = vadd.f32 %v3764, %v3812
    %3814 = vmatmul.bf16.gmra.mxu0 %v771
    %v3815 = vpop.f32.mrf.mxu0
    %v3816 = vadd.f32 %v3767, %v3815
    %v3817 = vpop.f32.mrf.mxu0
    %v3818 = vadd.f32 %v3769, %v3817
    %3819 = vmatmul.bf16.gmra.mxu0 %v780
    %v3820 = vpop.f32.mrf.mxu0
    %v3821 = vadd.f32 %v3772, %v3820
    %v3822 = vpop.f32.mrf.mxu0
    %v3823 = vadd.f32 %v3774, %v3822
    %3824 = vmatmul.bf16.gmra.mxu0 %v789
    %v3825 = vpop.f32.mrf.mxu0
    %v3826 = vadd.f32 %v3777, %v3825
    %v3827 = vpop.f32.mrf.mxu0
    %v3828 = vadd.f32 %v3779, %v3827
    %3829 = vmatmul.bf16.gmra.mxu0 %v798
    %v3830 = vpop.f32.mrf.mxu0
    %v3831 = vadd.f32 %v3782, %v3830
    %v3832 = vpop.f32.mrf.mxu0
    %v3833 = vadd.f32 %v3784, %v3832
    %3834 = vdwg.mxu0
    %3835 = vmatpush.bf16.msra.mxu0 %v1899
    %3836 = vmatpush.bf16.msra.mxu0 %v1895
    %3837 = vmatpush.bf16.msra.mxu0 %v1891
    %3838 = vmatpush.bf16.msra.mxu0 %v1887
    %3839 = vmatpush.bf16.msra.mxu0 %v1883
    %3840 = vmatpush.bf16.msra.mxu0 %v1879
    %3841 = vmatpush.bf16.msra.mxu0 %v1875
    %3842 = vmatpush.bf16.msra.mxu0 %v1871
    %3843 = vmatmul.bf16.gmra.mxu0 %v736
    %v3844 = vpop.f32.mrf.mxu0
    %v3845 = vadd.f32 %v3796, %v3844
    %v3846 = vpop.f32.mrf.mxu0
    %v3847 = vadd.f32 %v3798, %v3846
    %3848 = vmatmul.bf16.gmra.mxu0 %v745
    %v3849 = vpop.f32.mrf.mxu0
    %v3850 = vadd.f32 %v3801, %v3849
    %v3851 = vpop.f32.mrf.mxu0
    %v3852 = vadd.f32 %v3803, %v3851
    %3853 = vmatmul.bf16.gmra.mxu0 %v754
    %v3854 = vpop.f32.mrf.mxu0
    %v3855 = vadd.f32 %v3806, %v3854
    %v3856 = vpop.f32.mrf.mxu0
    %v3857 = vadd.f32 %v3808, %v3856
    %3858 = vmatmul.bf16.gmra.mxu0 %v763
    %v3859 = vpop.f32.mrf.mxu0
    %v3860 = vadd.f32 %v3811, %v3859
    %v3861 = vpop.f32.mrf.mxu0
    %v3862 = vadd.f32 %v3813, %v3861
    %3863 = vmatmul.bf16.gmra.mxu0 %v772
    %v3864 = vpop.f32.mrf.mxu0
    %v3865 = vadd.f32 %v3816, %v3864
    %v3866 = vpop.f32.mrf.mxu0
    %v3867 = vadd.f32 %v3818, %v3866
    %3868 = vmatmul.bf16.gmra.mxu0 %v781
    %v3869 = vpop.f32.mrf.mxu0
    %v3870 = vadd.f32 %v3821, %v3869
    %v3871 = vpop.f32.mrf.mxu0
    %v3872 = vadd.f32 %v3823, %v3871
    %3873 = vmatmul.bf16.gmra.mxu0 %v790
    %v3874 = vpop.f32.mrf.mxu0
    %v3875 = vadd.f32 %v3826, %v3874
    %v3876 = vpop.f32.mrf.mxu0
    %v3877 = vadd.f32 %v3828, %v3876
    %3878 = vmatmul.bf16.gmra.mxu0 %v799
    %v3879 = vpop.f32.mrf.mxu0
    %v3880 = vadd.f32 %v3831, %v3879
    %v3881 = vpop.f32.mrf.mxu0
    %v3882 = vadd.f32 %v3833, %v3881
    %3883 = vdwg.mxu0
    %3884 = vmatpush.bf16.msra.mxu0 %v1931
    %3885 = vmatpush.bf16.msra.mxu0 %v1927
    %3886 = vmatpush.bf16.msra.mxu0 %v1923
    %3887 = vmatpush.bf16.msra.mxu0 %v1919
    %3888 = vmatpush.bf16.msra.mxu0 %v1915
    %3889 = vmatpush.bf16.msra.mxu0 %v1911
    %3890 = vmatpush.bf16.msra.mxu0 %v1907
    %3891 = vmatpush.bf16.msra.mxu0 %v1903
    %3892 = vmatmul.bf16.gmra.mxu0 %v737
    %v3893 = vpop.f32.mrf.mxu0
    %v3894 = vadd.f32 %v3845, %v3893
    %v3895 = vpop.f32.mrf.mxu0
    %v3896 = vadd.f32 %v3847, %v3895
    %3897 = vmatmul.bf16.gmra.mxu0 %v746
    %v3898 = vpop.f32.mrf.mxu0
    %v3899 = vadd.f32 %v3850, %v3898
    %v3900 = vpop.f32.mrf.mxu0
    %v3901 = vadd.f32 %v3852, %v3900
    %3902 = vmatmul.bf16.gmra.mxu0 %v755
    %v3903 = vpop.f32.mrf.mxu0
    %v3904 = vadd.f32 %v3855, %v3903
    %v3905 = vpop.f32.mrf.mxu0
    %v3906 = vadd.f32 %v3857, %v3905
    %3907 = vmatmul.bf16.gmra.mxu0 %v764
    %v3908 = vpop.f32.mrf.mxu0
    %v3909 = vadd.f32 %v3860, %v3908
    %v3910 = vpop.f32.mrf.mxu0
    %v3911 = vadd.f32 %v3862, %v3910
    %3912 = vmatmul.bf16.gmra.mxu0 %v773
    %v3913 = vpop.f32.mrf.mxu0
    %v3914 = vadd.f32 %v3865, %v3913
    %v3915 = vpop.f32.mrf.mxu0
    %v3916 = vadd.f32 %v3867, %v3915
    %3917 = vmatmul.bf16.gmra.mxu0 %v782
    %v3918 = vpop.f32.mrf.mxu0
    %v3919 = vadd.f32 %v3870, %v3918
    %v3920 = vpop.f32.mrf.mxu0
    %v3921 = vadd.f32 %v3872, %v3920
    %3922 = vmatmul.bf16.gmra.mxu0 %v791
    %v3923 = vpop.f32.mrf.mxu0
    %v3924 = vadd.f32 %v3875, %v3923
    %v3925 = vpop.f32.mrf.mxu0
    %v3926 = vadd.f32 %v3877, %v3925
    %3927 = vmatmul.bf16.gmra.mxu0 %v800
    %v3928 = vpop.f32.mrf.mxu0
    %v3929 = vadd.f32 %v3880, %v3928
    %v3930 = vpop.f32.mrf.mxu0
    %v3931 = vadd.f32 %v3882, %v3930
    %3932 = vdwg.mxu0
    %3933 = vmatpush.bf16.msra.mxu0 %v1963
    %3934 = vmatpush.bf16.msra.mxu0 %v1959
    %3935 = vmatpush.bf16.msra.mxu0 %v1955
    %3936 = vmatpush.bf16.msra.mxu0 %v1951
    %3937 = vmatpush.bf16.msra.mxu0 %v1947
    %3938 = vmatpush.bf16.msra.mxu0 %v1943
    %3939 = vmatpush.bf16.msra.mxu0 %v1939
    %3940 = vmatpush.bf16.msra.mxu0 %v1935
    %3941 = vmatmul.bf16.gmra.mxu0 %v738
    %v3942 = vpop.f32.mrf.mxu0
    %v3943 = vadd.f32 %v3894, %v3942
    %v3944 = vpop.f32.mrf.mxu0
    %v3945 = vadd.f32 %v3896, %v3944
    %3946 = vmatmul.bf16.gmra.mxu0 %v747
    %v3947 = vpop.f32.mrf.mxu0
    %v3948 = vadd.f32 %v3899, %v3947
    %v3949 = vpop.f32.mrf.mxu0
    %v3950 = vadd.f32 %v3901, %v3949
    %3951 = vmatmul.bf16.gmra.mxu0 %v756
    %v3952 = vpop.f32.mrf.mxu0
    %v3953 = vadd.f32 %v3904, %v3952
    %v3954 = vpop.f32.mrf.mxu0
    %v3955 = vadd.f32 %v3906, %v3954
    %3956 = vmatmul.bf16.gmra.mxu0 %v765
    %v3957 = vpop.f32.mrf.mxu0
    %v3958 = vadd.f32 %v3909, %v3957
    %v3959 = vpop.f32.mrf.mxu0
    %v3960 = vadd.f32 %v3911, %v3959
    %3961 = vmatmul.bf16.gmra.mxu0 %v774
    %v3962 = vpop.f32.mrf.mxu0
    %v3963 = vadd.f32 %v3914, %v3962
    %v3964 = vpop.f32.mrf.mxu0
    %v3965 = vadd.f32 %v3916, %v3964
    %3966 = vmatmul.bf16.gmra.mxu0 %v783
    %v3967 = vpop.f32.mrf.mxu0
    %v3968 = vadd.f32 %v3919, %v3967
    %v3969 = vpop.f32.mrf.mxu0
    %v3970 = vadd.f32 %v3921, %v3969
    %3971 = vmatmul.bf16.gmra.mxu0 %v792
    %v3972 = vpop.f32.mrf.mxu0
    %v3973 = vadd.f32 %v3924, %v3972
    %v3974 = vpop.f32.mrf.mxu0
    %v3975 = vadd.f32 %v3926, %v3974
    %3976 = vmatmul.bf16.gmra.mxu0 %v801
    %v3977 = vpop.f32.mrf.mxu0
    %v3978 = vadd.f32 %v3929, %v3977
    %v3979 = vpop.f32.mrf.mxu0
    %v3980 = vadd.f32 %v3931, %v3979
    %3981 = vdwg.mxu0
    %3982 = vmatpush.bf16.msra.mxu0 %v1995
    %3983 = vmatpush.bf16.msra.mxu0 %v1991
    %3984 = vmatpush.bf16.msra.mxu0 %v1987
    %3985 = vmatpush.bf16.msra.mxu0 %v1983
    %3986 = vmatpush.bf16.msra.mxu0 %v1979
    %3987 = vmatpush.bf16.msra.mxu0 %v1975
    %3988 = vmatpush.bf16.msra.mxu0 %v1971
    %3989 = vmatpush.bf16.msra.mxu0 %v1967
    %3990 = vmatmul.bf16.gmra.mxu0 %v739
    %v3991 = vpop.f32.mrf.mxu0
    %v3992 = vadd.f32 %v3943, %v3991
    %v3993 = vpop.f32.mrf.mxu0
    %v3994 = vadd.f32 %v3945, %v3993
    %3995 = vmatmul.bf16.gmra.mxu0 %v748
    %v3996 = vpop.f32.mrf.mxu0
    %v3997 = vadd.f32 %v3948, %v3996
    %v3998 = vpop.f32.mrf.mxu0
    %v3999 = vadd.f32 %v3950, %v3998
    %4000 = vmatmul.bf16.gmra.mxu0 %v757
    %v4001 = vpop.f32.mrf.mxu0
    %v4002 = vadd.f32 %v3953, %v4001
    %v4003 = vpop.f32.mrf.mxu0
    %v4004 = vadd.f32 %v3955, %v4003
    %4005 = vmatmul.bf16.gmra.mxu0 %v766
    %v4006 = vpop.f32.mrf.mxu0
    %v4007 = vadd.f32 %v3958, %v4006
    %v4008 = vpop.f32.mrf.mxu0
    %v4009 = vadd.f32 %v3960, %v4008
    %4010 = vmatmul.bf16.gmra.mxu0 %v775
    %v4011 = vpop.f32.mrf.mxu0
    %v4012 = vadd.f32 %v3963, %v4011
    %v4013 = vpop.f32.mrf.mxu0
    %v4014 = vadd.f32 %v3965, %v4013
    %4015 = vmatmul.bf16.gmra.mxu0 %v784
    %v4016 = vpop.f32.mrf.mxu0
    %v4017 = vadd.f32 %v3968, %v4016
    %v4018 = vpop.f32.mrf.mxu0
    %v4019 = vadd.f32 %v3970, %v4018
    %4020 = vmatmul.bf16.gmra.mxu0 %v793
    %v4021 = vpop.f32.mrf.mxu0
    %v4022 = vadd.f32 %v3973, %v4021
    %v4023 = vpop.f32.mrf.mxu0
    %v4024 = vadd.f32 %v3975, %v4023
    %4025 = vmatmul.bf16.gmra.mxu0 %v802
    %v4026 = vpop.f32.mrf.mxu0
    %v4027 = vadd.f32 %v3978, %v4026
    %v4028 = vpop.f32.mrf.mxu0
    %v4029 = vadd.f32 %v3980, %v4028
    %4030 = vdwg.mxu0
    %4031 = vmatpush.bf16.msra.mxu0 %v2027
    %4032 = vmatpush.bf16.msra.mxu0 %v2023
    %4033 = vmatpush.bf16.msra.mxu0 %v2019
    %4034 = vmatpush.bf16.msra.mxu0 %v2015
    %4035 = vmatpush.bf16.msra.mxu0 %v2011
    %4036 = vmatpush.bf16.msra.mxu0 %v2007
    %4037 = vmatpush.bf16.msra.mxu0 %v2003
    %4038 = vmatpush.bf16.msra.mxu0 %v1999
    %4039 = vmatmul.bf16.gmra.mxu0 %v740
    %v4040 = vpop.f32.mrf.mxu0
    %v4041 = vadd.f32 %v3992, %v4040
    %v4042 = vpop.f32.mrf.mxu0
    %v4043 = vadd.f32 %v3994, %v4042
    %4044 = vmatmul.bf16.gmra.mxu0 %v749
    %v4045 = vpop.f32.mrf.mxu0
    %v4046 = vadd.f32 %v3997, %v4045
    %v4047 = vpop.f32.mrf.mxu0
    %v4048 = vadd.f32 %v3999, %v4047
    %4049 = vmatmul.bf16.gmra.mxu0 %v758
    %v4050 = vpop.f32.mrf.mxu0
    %v4051 = vadd.f32 %v4002, %v4050
    %v4052 = vpop.f32.mrf.mxu0
    %v4053 = vadd.f32 %v4004, %v4052
    %4054 = vmatmul.bf16.gmra.mxu0 %v767
    %v4055 = vpop.f32.mrf.mxu0
    %v4056 = vadd.f32 %v4007, %v4055
    %v4057 = vpop.f32.mrf.mxu0
    %v4058 = vadd.f32 %v4009, %v4057
    %4059 = vmatmul.bf16.gmra.mxu0 %v776
    %v4060 = vpop.f32.mrf.mxu0
    %v4061 = vadd.f32 %v4012, %v4060
    %v4062 = vpop.f32.mrf.mxu0
    %v4063 = vadd.f32 %v4014, %v4062
    %4064 = vmatmul.bf16.gmra.mxu0 %v785
    %v4065 = vpop.f32.mrf.mxu0
    %v4066 = vadd.f32 %v4017, %v4065
    %v4067 = vpop.f32.mrf.mxu0
    %v4068 = vadd.f32 %v4019, %v4067
    %4069 = vmatmul.bf16.gmra.mxu0 %v794
    %v4070 = vpop.f32.mrf.mxu0
    %v4071 = vadd.f32 %v4022, %v4070
    %v4072 = vpop.f32.mrf.mxu0
    %v4073 = vadd.f32 %v4024, %v4072
    %4074 = vmatmul.bf16.gmra.mxu0 %v803
    %v4075 = vpop.f32.mrf.mxu0
    %v4076 = vadd.f32 %v4027, %v4075
    %v4077 = vpop.f32.mrf.mxu0
    %v4078 = vadd.f32 %v4029, %v4077
    %4079 = vdwg.mxu0
    %v4080 = vmax.f32 %v2718, 0.0
    %v4081 = vmax.f32 %v3159, 0.0
    %v4082 = vmax.f32 %v3600, 0.0
    %v4083 = vmax.f32 %v4041, 0.0
    %v4084 = vmax.f32 %v2720, 0.0
    %v4085 = vmax.f32 %v3161, 0.0
    %v4086 = vmax.f32 %v3602, 0.0
    %v4087 = vmax.f32 %v4043, 0.0
    %v4088 = vmax.f32 %v2723, 0.0
    %v4089 = vmax.f32 %v3164, 0.0
    %v4090 = vmax.f32 %v3605, 0.0
    %v4091 = vmax.f32 %v4046, 0.0
    %v4092 = vmax.f32 %v2725, 0.0
    %v4093 = vmax.f32 %v3166, 0.0
    %v4094 = vmax.f32 %v3607, 0.0
    %v4095 = vmax.f32 %v4048, 0.0
    %v4096 = vmax.f32 %v2728, 0.0
    %v4097 = vmax.f32 %v3169, 0.0
    %v4098 = vmax.f32 %v3610, 0.0
    %v4099 = vmax.f32 %v4051, 0.0
    %v4100 = vmax.f32 %v2730, 0.0
    %v4101 = vmax.f32 %v3171, 0.0
    %v4102 = vmax.f32 %v3612, 0.0
    %v4103 = vmax.f32 %v4053, 0.0
    %v4104 = vmax.f32 %v2733, 0.0
    %v4105 = vmax.f32 %v3174, 0.0
    %v4106 = vmax.f32 %v3615, 0.0
    %v4107 = vmax.f32 %v4056, 0.0
    %v4108 = vmax.f32 %v2735, 0.0
    %v4109 = vmax.f32 %v3176, 0.0
    %v4110 = vmax.f32 %v3617, 0.0
    %v4111 = vmax.f32 %v4058, 0.0
    %v4112 = vmax.f32 %v2738, 0.0
    %v4113 = vmax.f32 %v3179, 0.0
    %v4114 = vmax.f32 %v3620, 0.0
    %v4115 = vmax.f32 %v4061, 0.0
    %v4116 = vmax.f32 %v2740, 0.0
    %v4117 = vmax.f32 %v3181, 0.0
    %v4118 = vmax.f32 %v3622, 0.0
    %v4119 = vmax.f32 %v4063, 0.0
    %v4120 = vmax.f32 %v2743, 0.0
    %v4121 = vmax.f32 %v3184, 0.0
    %v4122 = vmax.f32 %v3625, 0.0
    %v4123 = vmax.f32 %v4066, 0.0
    %v4124 = vmax.f32 %v2745, 0.0
    %v4125 = vmax.f32 %v3186, 0.0
    %v4126 = vmax.f32 %v3627, 0.0
    %v4127 = vmax.f32 %v4068, 0.0
    %v4128 = vmax.f32 %v2748, 0.0
    %v4129 = vmax.f32 %v3189, 0.0
    %v4130 = vmax.f32 %v3630, 0.0
    %v4131 = vmax.f32 %v4071, 0.0
    %v4132 = vmax.f32 %v2750, 0.0
    %v4133 = vmax.f32 %v3191, 0.0
    %v4134 = vmax.f32 %v3632, 0.0
    %v4135 = vmax.f32 %v4073, 0.0
    %v4136 = vmax.f32 %v2753, 0.0
    %v4137 = vmax.f32 %v3194, 0.0
    %v4138 = vmax.f32 %v3635, 0.0
    %v4139 = vmax.f32 %v4076, 0.0
    %v4140 = vmax.f32 %v2755, 0.0
    %v4141 = vmax.f32 %v3196, 0.0
    %v4142 = vmax.f32 %v3637, 0.0
    %v4143 = vmax.f32 %v4078, 0.0
    %v4144 = vadd.f32 %v4080, %v4084
    %v4145 = vadd.f32 %v4144, %v4088
    %v4146 = vadd.f32 %v4145, %v4092
    %v4147 = vadd.f32 %v4146, %v4096
    %v4148 = vadd.f32 %v4147, %v4100
    %v4149 = vadd.f32 %v4148, %v4104
    %v4150 = vadd.f32 %v4149, %v4108
    %v4151 = vadd.f32 %v4150, %v4112
    %v4152 = vadd.f32 %v4151, %v4116
    %v4153 = vadd.f32 %v4152, %v4120
    %v4154 = vadd.f32 %v4153, %v4124
    %v4155 = vadd.f32 %v4154, %v4128
    %v4156 = vadd.f32 %v4155, %v4132
    %v4157 = vadd.f32 %v4156, %v4136
    %v4158 = vadd.f32 %v4157, %v4140
    %v4159 = vrot.slane %v4158, 4
    %v4160 = vadd.f32 %v4158, %v4159
    %v4161 = vrot.slane %v4160, 2
    %v4162 = vadd.f32 %v4160, %v4161
    %v4163 = vrot.slane %v4162, 1
    %v4164 = vadd.f32 %v4162, %v4163
    %v4165 = vadd.f32 %v4081, %v4085
    %v4166 = vadd.f32 %v4165, %v4089
    %v4167 = vadd.f32 %v4166, %v4093
    %v4168 = vadd.f32 %v4167, %v4097
    %v4169 = vadd.f32 %v4168, %v4101
    %v4170 = vadd.f32 %v4169, %v4105
    %v4171 = vadd.f32 %v4170, %v4109
    %v4172 = vadd.f32 %v4171, %v4113
    %v4173 = vadd.f32 %v4172, %v4117
    %v4174 = vadd.f32 %v4173, %v4121
    %v4175 = vadd.f32 %v4174, %v4125
    %v4176 = vadd.f32 %v4175, %v4129
    %v4177 = vadd.f32 %v4176, %v4133
    %v4178 = vadd.f32 %v4177, %v4137
    %v4179 = vadd.f32 %v4178, %v4141
    %v4180 = vrot.slane %v4179, 4
    %v4181 = vadd.f32 %v4179, %v4180
    %v4182 = vrot.slane %v4181, 2
    %v4183 = vadd.f32 %v4181, %v4182
    %v4184 = vrot.slane %v4183, 1
    %v4185 = vadd.f32 %v4183, %v4184
    %v4186 = vadd.f32 %v4082, %v4086
    %v4187 = vadd.f32 %v4186, %v4090
    %v4188 = vadd.f32 %v4187, %v4094
    %v4189 = vadd.f32 %v4188, %v4098
    %v4190 = vadd.f32 %v4189, %v4102
    %v4191 = vadd.f32 %v4190, %v4106
    %v4192 = vadd.f32 %v4191, %v4110
    %v4193 = vadd.f32 %v4192, %v4114
    %v4194 = vadd.f32 %v4193, %v4118
    %v4195 = vadd.f32 %v4194, %v4122
    %v4196 = vadd.f32 %v4195, %v4126
    %v4197 = vadd.f32 %v4196, %v4130
    %v4198 = vadd.f32 %v4197, %v4134
    %v4199 = vadd.f32 %v4198, %v4138
    %v4200 = vadd.f32 %v4199, %v4142
    %v4201 = vrot.slane %v4200, 4
    %v4202 = vadd.f32 %v4200, %v4201
    %v4203 = vrot.slane %v4202, 2
    %v4204 = vadd.f32 %v4202, %v4203
    %v4205 = vrot.slane %v4204, 1
    %v4206 = vadd.f32 %v4204, %v4205
    %v4207 = vadd.f32 %v4083, %v4087
    %v4208 = vadd.f32 %v4207, %v4091
    %v4209 = vadd.f32 %v4208, %v4095
    %v4210 = vadd.f32 %v4209, %v4099
    %v4211 = vadd.f32 %v4210, %v4103
    %v4212 = vadd.f32 %v4211, %v4107
    %v4213 = vadd.f32 %v4212, %v4111
    %v4214 = vadd.f32 %v4213, %v4115
    %v4215 = vadd.f32 %v4214, %v4119
    %v4216 = vadd.f32 %v4215, %v4123
    %v4217 = vadd.f32 %v4216, %v4127
    %v4218 = vadd.f32 %v4217, %v4131
    %v4219 = vadd.f32 %v4218, %v4135
    %v4220 = vadd.f32 %v4219, %v4139
    %v4221 = vadd.f32 %v4220, %v4143
    %v4222 = vrot.slane %v4221, 4
    %v4223 = vadd.f32 %v4221, %v4222
    %v4224 = vrot.slane %v4223, 2
    %v4225 = vadd.f32 %v4223, %v4224
    %v4226 = vrot.slane %v4225, 1
    %v4227 = vadd.f32 %v4225, %v4226
    %v4228 = vrcp.pop 128.0
    %v4229 = vmul.f32 128.0, %v4228
    %v4230 = vsub.f32 1.0, %v4229
    %v4231 = vmul.f32 %v4228, %v4230
    %v4232 = vadd.f32 %v4228, %v4231
    %vm4233 = vweird.f32 %v4228
    %v4234 = vsel %vm4233, %v4228, %v4232
    %v4235 = vmul.f32 %v4164, %v4234
    %v4236 = vmul.f32 %v4185, %v4234
    %v4237 = vmul.f32 %v4206, %v4234
    %v4238 = vmul.f32 %v4227, %v4234
    %v4239 = vmul.f32 %v4080, %v4080
    %v4240 = vmul.f32 %v4081, %v4081
    %v4241 = vmul.f32 %v4082, %v4082
    %v4242 = vmul.f32 %v4083, %v4083
    %v4243 = vmul.f32 %v4084, %v4084
    %v4244 = vmul.f32 %v4085, %v4085
    %v4245 = vmul.f32 %v4086, %v4086
    %v4246 = vmul.f32 %v4087, %v4087
    %v4247 = vmul.f32 %v4088, %v4088
    %v4248 = vmul.f32 %v4089, %v4089
    %v4249 = vmul.f32 %v4090, %v4090
    %v4250 = vmul.f32 %v4091, %v4091
    %v4251 = vmul.f32 %v4092, %v4092
    %v4252 = vmul.f32 %v4093, %v4093
    %v4253 = vmul.f32 %v4094, %v4094
    %v4254 = vmul.f32 %v4095, %v4095
    %v4255 = vmul.f32 %v4096, %v4096
    %v4256 = vmul.f32 %v4097, %v4097
    %v4257 = vmul.f32 %v4098, %v4098
    %v4258 = vmul.f32 %v4099, %v4099
    %v4259 = vmul.f32 %v4100, %v4100
    %v4260 = vmul.f32 %v4101, %v4101
    %v4261 = vmul.f32 %v4102, %v4102
    %v4262 = vmul.f32 %v4103, %v4103
    %v4263 = vmul.f32 %v4104, %v4104
    %v4264 = vmul.f32 %v4105, %v4105
    %v4265 = vmul.f32 %v4106, %v4106
    %v4266 = vmul.f32 %v4107, %v4107
    %v4267 = vmul.f32 %v4108, %v4108
    %v4268 = vmul.f32 %v4109, %v4109
    %v4269 = vmul.f32 %v4110, %v4110
    %v4270 = vmul.f32 %v4111, %v4111
    %v4271 = vmul.f32 %v4112, %v4112
    %v4272 = vmul.f32 %v4113, %v4113
    %v4273 = vmul.f32 %v4114, %v4114
    %v4274 = vmul.f32 %v4115, %v4115
    %v4275 = vmul.f32 %v4116, %v4116
    %v4276 = vmul.f32 %v4117, %v4117
    %v4277 = vmul.f32 %v4118, %v4118
    %v4278 = vmul.f32 %v4119, %v4119
    %v4279 = vmul.f32 %v4120, %v4120
    %v4280 = vmul.f32 %v4121, %v4121
    %v4281 = vmul.f32 %v4122, %v4122
    %v4282 = vmul.f32 %v4123, %v4123
    %v4283 = vmul.f32 %v4124, %v4124
    %v4284 = vmul.f32 %v4125, %v4125
    %v4285 = vmul.f32 %v4126, %v4126
    %v4286 = vmul.f32 %v4127, %v4127
    %v4287 = vmul.f32 %v4128, %v4128
    %v4288 = vmul.f32 %v4129, %v4129
    %v4289 = vmul.f32 %v4130, %v4130
    %v4290 = vmul.f32 %v4131, %v4131
    %v4291 = vmul.f32 %v4132, %v4132
    %v4292 = vmul.f32 %v4133, %v4133
    %v4293 = vmul.f32 %v4134, %v4134
    %v4294 = vmul.f32 %v4135, %v4135
    %v4295 = vmul.f32 %v4136, %v4136
    %v4296 = vmul.f32 %v4137, %v4137
    %v4297 = vmul.f32 %v4138, %v4138
    %v4298 = vmul.f32 %v4139, %v4139
    %v4299 = vmul.f32 %v4140, %v4140
    %v4300 = vmul.f32 %v4141, %v4141
    %v4301 = vmul.f32 %v4142, %v4142
    %v4302 = vmul.f32 %v4143, %v4143
    %v4303 = vadd.f32 %v4239, %v4243
    %v4304 = vadd.f32 %v4303, %v4247
    %v4305 = vadd.f32 %v4304, %v4251
    %v4306 = vadd.f32 %v4305, %v4255
    %v4307 = vadd.f32 %v4306, %v4259
    %v4308 = vadd.f32 %v4307, %v4263
    %v4309 = vadd.f32 %v4308, %v4267
    %v4310 = vadd.f32 %v4309, %v4271
    %v4311 = vadd.f32 %v4310, %v4275
    %v4312 = vadd.f32 %v4311, %v4279
    %v4313 = vadd.f32 %v4312, %v4283
    %v4314 = vadd.f32 %v4313, %v4287
    %v4315 = vadd.f32 %v4314, %v4291
    %v4316 = vadd.f32 %v4315, %v4295
    %v4317 = vadd.f32 %v4316, %v4299
    %v4318 = vrot.slane %v4317, 4
    %v4319 = vadd.f32 %v4317, %v4318
    %v4320 = vrot.slane %v4319, 2
    %v4321 = vadd.f32 %v4319, %v4320
    %v4322 = vrot.slane %v4321, 1
    %v4323 = vadd.f32 %v4321, %v4322
    %v4324 = vadd.f32 %v4240, %v4244
    %v4325 = vadd.f32 %v4324, %v4248
    %v4326 = vadd.f32 %v4325, %v4252
    %v4327 = vadd.f32 %v4326, %v4256
    %v4328 = vadd.f32 %v4327, %v4260
    %v4329 = vadd.f32 %v4328, %v4264
    %v4330 = vadd.f32 %v4329, %v4268
    %v4331 = vadd.f32 %v4330, %v4272
    %v4332 = vadd.f32 %v4331, %v4276
    %v4333 = vadd.f32 %v4332, %v4280
    %v4334 = vadd.f32 %v4333, %v4284
    %v4335 = vadd.f32 %v4334, %v4288
    %v4336 = vadd.f32 %v4335, %v4292
    %v4337 = vadd.f32 %v4336, %v4296
    %v4338 = vadd.f32 %v4337, %v4300
    %v4339 = vrot.slane %v4338, 4
    %v4340 = vadd.f32 %v4338, %v4339
    %v4341 = vrot.slane %v4340, 2
    %v4342 = vadd.f32 %v4340, %v4341
    %v4343 = vrot.slane %v4342, 1
    %v4344 = vadd.f32 %v4342, %v4343
    %v4345 = vadd.f32 %v4241, %v4245
    %v4346 = vadd.f32 %v4345, %v4249
    %v4347 = vadd.f32 %v4346, %v4253
    %v4348 = vadd.f32 %v4347, %v4257
    %v4349 = vadd.f32 %v4348, %v4261
    %v4350 = vadd.f32 %v4349, %v4265
    %v4351 = vadd.f32 %v4350, %v4269
    %v4352 = vadd.f32 %v4351, %v4273
    %v4353 = vadd.f32 %v4352, %v4277
    %v4354 = vadd.f32 %v4353, %v4281
    %v4355 = vadd.f32 %v4354, %v4285
    %v4356 = vadd.f32 %v4355, %v4289
    %v4357 = vadd.f32 %v4356, %v4293
    %v4358 = vadd.f32 %v4357, %v4297
    %v4359 = vadd.f32 %v4358, %v4301
    %v4360 = vrot.slane %v4359, 4
    %v4361 = vadd.f32 %v4359, %v4360
    %v4362 = vrot.slane %v4361, 2
    %v4363 = vadd.f32 %v4361, %v4362
    %v4364 = vrot.slane %v4363, 1
    %v4365 = vadd.f32 %v4363, %v4364
    %v4366 = vadd.f32 %v4242, %v4246
    %v4367 = vadd.f32 %v4366, %v4250
    %v4368 = vadd.f32 %v4367, %v4254
    %v4369 = vadd.f32 %v4368, %v4258
    %v4370 = vadd.f32 %v4369, %v4262
    %v4371 = vadd.f32 %v4370, %v4266
    %v4372 = vadd.f32 %v4371, %v4270
    %v4373 = vadd.f32 %v4372, %v4274
    %v4374 = vadd.f32 %v4373, %v4278
    %v4375 = vadd.f32 %v4374, %v4282
    %v4376 = vadd.f32 %v4375, %v4286
    %v4377 = vadd.f32 %v4376, %v4290
    %v4378 = vadd.f32 %v4377, %v4294
    %v4379 = vadd.f32 %v4378, %v4298
    %v4380 = vadd.f32 %v4379, %v4302
    %v4381 = vrot.slane %v4380, 4
    %v4382 = vadd.f32 %v4380, %v4381
    %v4383 = vrot.slane %v4382, 2
    %v4384 = vadd.f32 %v4382, %v4383
    %v4385 = vrot.slane %v4384, 1
    %v4386 = vadd.f32 %v4384, %v4385
    %v4387 = vmul.f32 %v4323, %v4234
    %v4388 = vmul.f32 %v4344, %v4234
    %v4389 = vmul.f32 %v4365, %v4234
    %v4390 = vmul.f32 %v4386, %v4234
    %v4391 = vmul.f32 %v4235, %v4235
    %v4392 = vmul.f32 %v4236, %v4236
    %v4393 = vmul.f32 %v4237, %v4237
    %v4394 = vmul.f32 %v4238, %v4238
    %v4395 = vsub.f32 %v4387, %v4391
    %v4396 = vsub.f32 %v4388, %v4392
    %v4397 = vsub.f32 %v4389, %v4393
    %v4398 = vsub.f32 %v4390, %v4394
    %v4399 = vmax.f32 %v4395, 0.0
    %v4400 = vmax.f32 %v4396, 0.0
    %v4401 = vmax.f32 %v4397, 0.0
    %v4402 = vmax.f32 %v4398, 0.0
    %v4403 = vadd.f32 %v4399, 1e-05
    %v4404 = vadd.f32 %v4400, 1e-05
    %v4405 = vadd.f32 %v4401, 1e-05
    %v4406 = vadd.f32 %v4402, 1e-05
    %v4407 = vrsqrt.pop %v4403
    %v4408 = vmul.f32 %v4407, %v4403
    %v4409 = vmul.f32 %v4408, %v4407
    %v4410 = vmul.f32 0.5, %v4409
    %v4411 = vsub.f32 1.5, %v4410
    %v4412 = vmul.f32 %v4407, %v4411
    %vm4413 = vweird.f32 %v4403
    %vm4414 = vweird.f32 %v4407
    %vm4415 = vmor %vm4413, %vm4414
    %v4416 = vsel %vm4415, %v4407, %v4412
    %v4417 = vrsqrt.pop %v4404
    %v4418 = vmul.f32 %v4417, %v4404
    %v4419 = vmul.f32 %v4418, %v4417
    %v4420 = vmul.f32 0.5, %v4419
    %v4421 = vsub.f32 1.5, %v4420
    %v4422 = vmul.f32 %v4417, %v4421
    %vm4423 = vweird.f32 %v4404
    %vm4424 = vweird.f32 %v4417
    %vm4425 = vmor %vm4423, %vm4424
    %v4426 = vsel %vm4425, %v4417, %v4422
    %v4427 = vrsqrt.pop %v4405
    %v4428 = vmul.f32 %v4427, %v4405
    %v4429 = vmul.f32 %v4428, %v4427
    %v4430 = vmul.f32 0.5, %v4429
    %v4431 = vsub.f32 1.5, %v4430
    %v4432 = vmul.f32 %v4427, %v4431
    %vm4433 = vweird.f32 %v4405
    %vm4434 = vweird.f32 %v4427
    %vm4435 = vmor %vm4433, %vm4434
    %v4436 = vsel %vm4435, %v4427, %v4432
    %v4437 = vrsqrt.pop %v4406
    %v4438 = vmul.f32 %v4437, %v4406
    %v4439 = vmul.f32 %v4438, %v4437
    %v4440 = vmul.f32 0.5, %v4439
    %v4441 = vsub.f32 1.5, %v4440
    %v4442 = vmul.f32 %v4437, %v4441
    %vm4443 = vweird.f32 %v4406
    %vm4444 = vweird.f32 %v4437
    %vm4445 = vmor %vm4443, %vm4444
    %v4446 = vsel %vm4445, %v4437, %v4442
    %v4448 = vperm.slane %v198, 0
    %v4449 = vperm.slane %v198, 1
    %v4450 = vperm.slane %v198, 2
    %v4451 = vperm.slane %v198, 3
    %v4456 = vmul.f32 %v4416, %v4448
    %v4457 = vmul.f32 %v4426, %v4449
    %v4458 = vmul.f32 %v4436, %v4450
    %v4459 = vmul.f32 %v4446, %v4451
    %v4460 = vmul.f32 %v4235, %v4456
    %v4461 = vmul.f32 %v4236, %v4457
    %v4462 = vmul.f32 %v4237, %v4458
    %v4463 = vmul.f32 %v4238, %v4459
    %v4468 = vrot.slane %v4461, 7
    %v4469 = vrot.slane %v4462, 6
    %v4470 = vrot.slane %v4463, 5
    %vm4471 = vcmask 1040384
    %v4472 = vsel %vm4471, %v4460, %v4468
    %vm4473 = vcmask 1042434
    %v4474 = vsel %vm4473, %v4469, %v4470
    %vm4475 = vcmask 1041408
    %v4476 = vsel %vm4475, %v4472, %v4474
    %v4478 = vsub.f32 %v200, %v4476
    %v4479 = vperm.slane %v4456, 0
    %v4480 = vperm.slane %v4457, 0
    %v4481 = vperm.slane %v4458, 0
    %v4482 = vperm.slane %v4459, 0
    %v4483 = vmul.f32 %v4080, %v4479
    %v4484 = vmul.f32 %v4081, %v4480
    %v4485 = vmul.f32 %v4082, %v4481
    %v4486 = vmul.f32 %v4083, %v4482
    %v4487 = vmul.f32 %v4084, %v4479
    %v4488 = vmul.f32 %v4085, %v4480
    %v4489 = vmul.f32 %v4086, %v4481
    %v4490 = vmul.f32 %v4087, %v4482
    %v4491 = vmul.f32 %v4088, %v4479
    %v4492 = vmul.f32 %v4089, %v4480
    %v4493 = vmul.f32 %v4090, %v4481
    %v4494 = vmul.f32 %v4091, %v4482
    %v4495 = vmul.f32 %v4092, %v4479
    %v4496 = vmul.f32 %v4093, %v4480
    %v4497 = vmul.f32 %v4094, %v4481
    %v4498 = vmul.f32 %v4095, %v4482
    %v4499 = vmul.f32 %v4096, %v4479
    %v4500 = vmul.f32 %v4097, %v4480
    %v4501 = vmul.f32 %v4098, %v4481
    %v4502 = vmul.f32 %v4099, %v4482
    %v4503 = vmul.f32 %v4100, %v4479
    %v4504 = vmul.f32 %v4101, %v4480
    %v4505 = vmul.f32 %v4102, %v4481
    %v4506 = vmul.f32 %v4103, %v4482
    %v4507 = vmul.f32 %v4104, %v4479
    %v4508 = vmul.f32 %v4105, %v4480
    %v4509 = vmul.f32 %v4106, %v4481
    %v4510 = vmul.f32 %v4107, %v4482
    %v4511 = vmul.f32 %v4108, %v4479
    %v4512 = vmul.f32 %v4109, %v4480
    %v4513 = vmul.f32 %v4110, %v4481
    %v4514 = vmul.f32 %v4111, %v4482
    %v4515 = vmul.f32 %v4112, %v4479
    %v4516 = vmul.f32 %v4113, %v4480
    %v4517 = vmul.f32 %v4114, %v4481
    %v4518 = vmul.f32 %v4115, %v4482
    %v4519 = vmul.f32 %v4116, %v4479
    %v4520 = vmul.f32 %v4117, %v4480
    %v4521 = vmul.f32 %v4118, %v4481
    %v4522 = vmul.f32 %v4119, %v4482
    %v4523 = vmul.f32 %v4120, %v4479
    %v4524 = vmul.f32 %v4121, %v4480
    %v4525 = vmul.f32 %v4122, %v4481
    %v4526 = vmul.f32 %v4123, %v4482
    %v4527 = vmul.f32 %v4124, %v4479
    %v4528 = vmul.f32 %v4125, %v4480
    %v4529 = vmul.f32 %v4126, %v4481
    %v4530 = vmul.f32 %v4127, %v4482
    %v4531 = vmul.f32 %v4128, %v4479
    %v4532 = vmul.f32 %v4129, %v4480
    %v4533 = vmul.f32 %v4130, %v4481
    %v4534 = vmul.f32 %v4131, %v4482
    %v4535 = vmul.f32 %v4132, %v4479
    %v4536 = vmul.f32 %v4133, %v4480
    %v4537 = vmul.f32 %v4134, %v4481
    %v4538 = vmul.f32 %v4135, %v4482
    %v4539 = vmul.f32 %v4136, %v4479
    %v4540 = vmul.f32 %v4137, %v4480
    %v4541 = vmul.f32 %v4138, %v4481
    %v4542 = vmul.f32 %v4139, %v4482
    %v4543 = vmul.f32 %v4140, %v4479
    %v4544 = vmul.f32 %v4141, %v4480
    %v4545 = vmul.f32 %v4142, %v4481
    %v4546 = vmul.f32 %v4143, %v4482
    %v4548 = vperm.slane %v4478, 0
    %v4549 = vperm.slane %v4478, 1
    %v4550 = vperm.slane %v4478, 2
    %v4551 = vperm.slane %v4478, 3
    %v4556 = vadd.f32 %v4483, %v4548
    %v4557 = vadd.f32 %v4484, %v4549
    %v4558 = vadd.f32 %v4485, %v4550
    %v4559 = vadd.f32 %v4486, %v4551
    %v4560 = vadd.f32 %v4487, %v4548
    %v4561 = vadd.f32 %v4488, %v4549
    %v4562 = vadd.f32 %v4489, %v4550
    %v4563 = vadd.f32 %v4490, %v4551
    %v4564 = vadd.f32 %v4491, %v4548
    %v4565 = vadd.f32 %v4492, %v4549
    %v4566 = vadd.f32 %v4493, %v4550
    %v4567 = vadd.f32 %v4494, %v4551
    %v4568 = vadd.f32 %v4495, %v4548
    %v4569 = vadd.f32 %v4496, %v4549
    %v4570 = vadd.f32 %v4497, %v4550
    %v4571 = vadd.f32 %v4498, %v4551
    %v4572 = vadd.f32 %v4499, %v4548
    %v4573 = vadd.f32 %v4500, %v4549
    %v4574 = vadd.f32 %v4501, %v4550
    %v4575 = vadd.f32 %v4502, %v4551
    %v4576 = vadd.f32 %v4503, %v4548
    %v4577 = vadd.f32 %v4504, %v4549
    %v4578 = vadd.f32 %v4505, %v4550
    %v4579 = vadd.f32 %v4506, %v4551
    %v4580 = vadd.f32 %v4507, %v4548
    %v4581 = vadd.f32 %v4508, %v4549
    %v4582 = vadd.f32 %v4509, %v4550
    %v4583 = vadd.f32 %v4510, %v4551
    %v4584 = vadd.f32 %v4511, %v4548
    %v4585 = vadd.f32 %v4512, %v4549
    %v4586 = vadd.f32 %v4513, %v4550
    %v4587 = vadd.f32 %v4514, %v4551
    %v4588 = vadd.f32 %v4515, %v4548
    %v4589 = vadd.f32 %v4516, %v4549
    %v4590 = vadd.f32 %v4517, %v4550
    %v4591 = vadd.f32 %v4518, %v4551
    %v4592 = vadd.f32 %v4519, %v4548
    %v4593 = vadd.f32 %v4520, %v4549
    %v4594 = vadd.f32 %v4521, %v4550
    %v4595 = vadd.f32 %v4522, %v4551
    %v4596 = vadd.f32 %v4523, %v4548
    %v4597 = vadd.f32 %v4524, %v4549
    %v4598 = vadd.f32 %v4525, %v4550
    %v4599 = vadd.f32 %v4526, %v4551
    %v4600 = vadd.f32 %v4527, %v4548
    %v4601 = vadd.f32 %v4528, %v4549
    %v4602 = vadd.f32 %v4529, %v4550
    %v4603 = vadd.f32 %v4530, %v4551
    %v4604 = vadd.f32 %v4531, %v4548
    %v4605 = vadd.f32 %v4532, %v4549
    %v4606 = vadd.f32 %v4533, %v4550
    %v4607 = vadd.f32 %v4534, %v4551
    %v4608 = vadd.f32 %v4535, %v4548
    %v4609 = vadd.f32 %v4536, %v4549
    %v4610 = vadd.f32 %v4537, %v4550
    %v4611 = vadd.f32 %v4538, %v4551
    %v4612 = vadd.f32 %v4539, %v4548
    %v4613 = vadd.f32 %v4540, %v4549
    %v4614 = vadd.f32 %v4541, %v4550
    %v4615 = vadd.f32 %v4542, %v4551
    %v4616 = vadd.f32 %v4543, %v4548
    %v4617 = vadd.f32 %v4544, %v4549
    %v4618 = vadd.f32 %v4545, %v4550
    %v4619 = vadd.f32 %v4546, %v4551
    %v4620 = vpack.c.bf16 %v4560, %v4556
    %v4621 = vpack.c.bf16 %v4561, %v4557
    %v4622 = vpack.c.bf16 %v4562, %v4558
    %v4623 = vpack.c.bf16 %v4563, %v4559
    %v4624 = vpack.c.bf16 %v4568, %v4564
    %v4625 = vpack.c.bf16 %v4569, %v4565
    %v4626 = vpack.c.bf16 %v4570, %v4566
    %v4627 = vpack.c.bf16 %v4571, %v4567
    %v4628 = vpack.c.bf16 %v4576, %v4572
    %v4629 = vpack.c.bf16 %v4577, %v4573
    %v4630 = vpack.c.bf16 %v4578, %v4574
    %v4631 = vpack.c.bf16 %v4579, %v4575
    %v4632 = vpack.c.bf16 %v4584, %v4580
    %v4633 = vpack.c.bf16 %v4585, %v4581
    %v4634 = vpack.c.bf16 %v4586, %v4582
    %v4635 = vpack.c.bf16 %v4587, %v4583
    %v4636 = vpack.c.bf16 %v4592, %v4588
    %v4637 = vpack.c.bf16 %v4593, %v4589
    %v4638 = vpack.c.bf16 %v4594, %v4590
    %v4639 = vpack.c.bf16 %v4595, %v4591
    %v4640 = vpack.c.bf16 %v4600, %v4596
    %v4641 = vpack.c.bf16 %v4601, %v4597
    %v4642 = vpack.c.bf16 %v4602, %v4598
    %v4643 = vpack.c.bf16 %v4603, %v4599
    %v4644 = vpack.c.bf16 %v4608, %v4604
    %v4645 = vpack.c.bf16 %v4609, %v4605
    %v4646 = vpack.c.bf16 %v4610, %v4606
    %v4647 = vpack.c.bf16 %v4611, %v4607
    %v4648 = vpack.c.bf16 %v4616, %v4612
    %v4649 = vpack.c.bf16 %v4617, %v4613
    %v4650 = vpack.c.bf16 %v4618, %v4614
    %v4651 = vpack.c.bf16 %v4619, %v4615
    %v4652 = vld [vmem:[#allocation7] sm:$0xff]
    %v4653 = vld [vmem:[#allocation7 + $0x8] sm:$0xff]
    %v4654 = vld [vmem:[#allocation7 + $0x10] sm:$0xff]
    %v4655 = vld [vmem:[#allocation7 + $0x18] sm:$0xff]
    %v4656 = vld [vmem:[#allocation7 + $0x20] sm:$0xff]
    %v4657 = vld [vmem:[#allocation7 + $0x28] sm:$0xff]
    %v4658 = vld [vmem:[#allocation7 + $0x30] sm:$0xff]
    %v4659 = vld [vmem:[#allocation7 + $0x38] sm:$0xff]
    %v4660 = vld [vmem:[#allocation7 + $0x40] sm:$0xff]
    %v4661 = vld [vmem:[#allocation7 + $0x48] sm:$0xff]
    %v4662 = vld [vmem:[#allocation7 + $0x50] sm:$0xff]
    %v4663 = vld [vmem:[#allocation7 + $0x58] sm:$0xff]
    %v4664 = vld [vmem:[#allocation7 + $0x60] sm:$0xff]
    %v4665 = vld [vmem:[#allocation7 + $0x68] sm:$0xff]
    %v4666 = vld [vmem:[#allocation7 + $0x70] sm:$0xff]
    %v4667 = vld [vmem:[#allocation7 + $0x78] sm:$0xff]
    %v4668 = vld [vmem:[#allocation7 + $0x80] sm:$0xff]
    %v4669 = vld [vmem:[#allocation7 + $0x88] sm:$0xff]
    %v4670 = vld [vmem:[#allocation7 + $0x90] sm:$0xff]
    %v4671 = vld [vmem:[#allocation7 + $0x98] sm:$0xff]
    %v4672 = vld [vmem:[#allocation7 + $0xa0] sm:$0xff]
    %v4673 = vld [vmem:[#allocation7 + $0xa8] sm:$0xff]
    %v4674 = vld [vmem:[#allocation7 + $0xb0] sm:$0xff]
    %v4675 = vld [vmem:[#allocation7 + $0xb8] sm:$0xff]
    %v4676 = vld [vmem:[#allocation7 + $0xc0] sm:$0xff]
    %v4677 = vld [vmem:[#allocation7 + $0xc8] sm:$0xff]
    %v4678 = vld [vmem:[#allocation7 + $0xd0] sm:$0xff]
    %v4679 = vld [vmem:[#allocation7 + $0xd8] sm:$0xff]
    %v4680 = vld [vmem:[#allocation7 + $0xe0] sm:$0xff]
    %v4681 = vld [vmem:[#allocation7 + $0xe8] sm:$0xff]
    %v4682 = vld [vmem:[#allocation7 + $0xf0] sm:$0xff]
    %v4683 = vld [vmem:[#allocation7 + $0xf8] sm:$0xff]
    %v4684 = vld [vmem:[#allocation7 + $0x100] sm:$0xff]
    %v4685 = vld [vmem:[#allocation7 + $0x108] sm:$0xff]
    %v4686 = vld [vmem:[#allocation7 + $0x110] sm:$0xff]
    %v4687 = vld [vmem:[#allocation7 + $0x118] sm:$0xff]
    %v4688 = vld [vmem:[#allocation7 + $0x120] sm:$0xff]
    %v4689 = vld [vmem:[#allocation7 + $0x128] sm:$0xff]
    %v4690 = vld [vmem:[#allocation7 + $0x130] sm:$0xff]
    %v4691 = vld [vmem:[#allocation7 + $0x138] sm:$0xff]
    %v4692 = vld [vmem:[#allocation7 + $0x140] sm:$0xff]
    %v4693 = vld [vmem:[#allocation7 + $0x148] sm:$0xff]
    %v4694 = vld [vmem:[#allocation7 + $0x150] sm:$0xff]
    %v4695 = vld [vmem:[#allocation7 + $0x158] sm:$0xff]
    %v4696 = vld [vmem:[#allocation7 + $0x160] sm:$0xff]
    %v4697 = vld [vmem:[#allocation7 + $0x168] sm:$0xff]
    %v4698 = vld [vmem:[#allocation7 + $0x170] sm:$0xff]
    %v4699 = vld [vmem:[#allocation7 + $0x178] sm:$0xff]
    %v4700 = vld [vmem:[#allocation7 + $0x180] sm:$0xff]
    %v4701 = vld [vmem:[#allocation7 + $0x188] sm:$0xff]
    %v4702 = vld [vmem:[#allocation7 + $0x190] sm:$0xff]
    %v4703 = vld [vmem:[#allocation7 + $0x198] sm:$0xff]
    %v4704 = vld [vmem:[#allocation7 + $0x1a0] sm:$0xff]
    %v4705 = vld [vmem:[#allocation7 + $0x1a8] sm:$0xff]
    %v4706 = vld [vmem:[#allocation7 + $0x1b0] sm:$0xff]
    %v4707 = vld [vmem:[#allocation7 + $0x1b8] sm:$0xff]
    %v4708 = vld [vmem:[#allocation7 + $0x1c0] sm:$0xff]
    %v4709 = vld [vmem:[#allocation7 + $0x1c8] sm:$0xff]
    %v4710 = vld [vmem:[#allocation7 + $0x1d0] sm:$0xff]
    %v4711 = vld [vmem:[#allocation7 + $0x1d8] sm:$0xff]
    %v4712 = vld [vmem:[#allocation7 + $0x1e0] sm:$0xff]
    %v4713 = vld [vmem:[#allocation7 + $0x1e8] sm:$0xff]
    %v4714 = vld [vmem:[#allocation7 + $0x1f0] sm:$0xff]
    %v4715 = vld [vmem:[#allocation7 + $0x1f8] sm:$0xff]
    %v4717 = vperm.slane %v202, 0
    %v4718 = vperm.slane %v202, 1
    %v4785 = vunpack.c.l.b16 %v4652
    %v4786 = vunpack.c.h.b16 %v4652
    %v4787 = vunpack.c.l.b16 %v4653
    %v4788 = vunpack.c.h.b16 %v4653
    %v4789 = vunpack.c.l.b16 %v4654
    %v4790 = vunpack.c.h.b16 %v4654
    %v4791 = vunpack.c.l.b16 %v4655
    %v4792 = vunpack.c.h.b16 %v4655
    %v4793 = vunpack.c.l.b16 %v4656
    %v4794 = vunpack.c.h.b16 %v4656
    %v4795 = vunpack.c.l.b16 %v4657
    %v4796 = vunpack.c.h.b16 %v4657
    %v4797 = vunpack.c.l.b16 %v4658
    %v4798 = vunpack.c.h.b16 %v4658
    %v4799 = vunpack.c.l.b16 %v4659
    %v4800 = vunpack.c.h.b16 %v4659
    %v4801 = vunpack.c.l.b16 %v4660
    %v4802 = vunpack.c.h.b16 %v4660
    %v4803 = vunpack.c.l.b16 %v4661
    %v4804 = vunpack.c.h.b16 %v4661
    %v4805 = vunpack.c.l.b16 %v4662
    %v4806 = vunpack.c.h.b16 %v4662
    %v4807 = vunpack.c.l.b16 %v4663
    %v4808 = vunpack.c.h.b16 %v4663
    %v4809 = vunpack.c.l.b16 %v4664
    %v4810 = vunpack.c.h.b16 %v4664
    %v4811 = vunpack.c.l.b16 %v4665
    %v4812 = vunpack.c.h.b16 %v4665
    %v4813 = vunpack.c.l.b16 %v4666
    %v4814 = vunpack.c.h.b16 %v4666
    %v4815 = vunpack.c.l.b16 %v4667
    %v4816 = vunpack.c.h.b16 %v4667
    %v4817 = vunpack.c.l.b16 %v4668
    %v4818 = vunpack.c.h.b16 %v4668
    %v4819 = vunpack.c.l.b16 %v4669
    %v4820 = vunpack.c.h.b16 %v4669
    %v4821 = vunpack.c.l.b16 %v4670
    %v4822 = vunpack.c.h.b16 %v4670
    %v4823 = vunpack.c.l.b16 %v4671
    %v4824 = vunpack.c.h.b16 %v4671
    %v4825 = vunpack.c.l.b16 %v4672
    %v4826 = vunpack.c.h.b16 %v4672
    %v4827 = vunpack.c.l.b16 %v4673
    %v4828 = vunpack.c.h.b16 %v4673
    %v4829 = vunpack.c.l.b16 %v4674
    %v4830 = vunpack.c.h.b16 %v4674
    %v4831 = vunpack.c.l.b16 %v4675
    %v4832 = vunpack.c.h.b16 %v4675
    %v4833 = vunpack.c.l.b16 %v4676
    %v4834 = vunpack.c.h.b16 %v4676
    %v4835 = vunpack.c.l.b16 %v4677
    %v4836 = vunpack.c.h.b16 %v4677
    %v4837 = vunpack.c.l.b16 %v4678
    %v4838 = vunpack.c.h.b16 %v4678
    %v4839 = vunpack.c.l.b16 %v4679
    %v4840 = vunpack.c.h.b16 %v4679
    %v4841 = vunpack.c.l.b16 %v4680
    %v4842 = vunpack.c.h.b16 %v4680
    %v4843 = vunpack.c.l.b16 %v4681
    %v4844 = vunpack.c.h.b16 %v4681
    %v4845 = vunpack.c.l.b16 %v4682
    %v4846 = vunpack.c.h.b16 %v4682
    %v4847 = vunpack.c.l.b16 %v4683
    %v4848 = vunpack.c.h.b16 %v4683
    %v4849 = vunpack.c.l.b16 %v4684
    %v4850 = vunpack.c.h.b16 %v4684
    %v4851 = vunpack.c.l.b16 %v4685
    %v4852 = vunpack.c.h.b16 %v4685
    %v4853 = vunpack.c.l.b16 %v4686
    %v4854 = vunpack.c.h.b16 %v4686
    %v4855 = vunpack.c.l.b16 %v4687
    %v4856 = vunpack.c.h.b16 %v4687
    %v4857 = vunpack.c.l.b16 %v4688
    %v4858 = vunpack.c.h.b16 %v4688
    %v4859 = vunpack.c.l.b16 %v4689
    %v4860 = vunpack.c.h.b16 %v4689
    %v4861 = vunpack.c.l.b16 %v4690
    %v4862 = vunpack.c.h.b16 %v4690
    %v4863 = vunpack.c.l.b16 %v4691
    %v4864 = vunpack.c.h.b16 %v4691
    %v4865 = vunpack.c.l.b16 %v4692
    %v4866 = vunpack.c.h.b16 %v4692
    %v4867 = vunpack.c.l.b16 %v4693
    %v4868 = vunpack.c.h.b16 %v4693
    %v4869 = vunpack.c.l.b16 %v4694
    %v4870 = vunpack.c.h.b16 %v4694
    %v4871 = vunpack.c.l.b16 %v4695
    %v4872 = vunpack.c.h.b16 %v4695
    %v4873 = vunpack.c.l.b16 %v4696
    %v4874 = vunpack.c.h.b16 %v4696
    %v4875 = vunpack.c.l.b16 %v4697
    %v4876 = vunpack.c.h.b16 %v4697
    %v4877 = vunpack.c.l.b16 %v4698
    %v4878 = vunpack.c.h.b16 %v4698
    %v4879 = vunpack.c.l.b16 %v4699
    %v4880 = vunpack.c.h.b16 %v4699
    %v4881 = vunpack.c.l.b16 %v4700
    %v4882 = vunpack.c.h.b16 %v4700
    %v4883 = vunpack.c.l.b16 %v4701
    %v4884 = vunpack.c.h.b16 %v4701
    %v4885 = vunpack.c.l.b16 %v4702
    %v4886 = vunpack.c.h.b16 %v4702
    %v4887 = vunpack.c.l.b16 %v4703
    %v4888 = vunpack.c.h.b16 %v4703
    %v4889 = vunpack.c.l.b16 %v4704
    %v4890 = vunpack.c.h.b16 %v4704
    %v4891 = vunpack.c.l.b16 %v4705
    %v4892 = vunpack.c.h.b16 %v4705
    %v4893 = vunpack.c.l.b16 %v4706
    %v4894 = vunpack.c.h.b16 %v4706
    %v4895 = vunpack.c.l.b16 %v4707
    %v4896 = vunpack.c.h.b16 %v4707
    %v4897 = vunpack.c.l.b16 %v4708
    %v4898 = vunpack.c.h.b16 %v4708
    %v4899 = vunpack.c.l.b16 %v4709
    %v4900 = vunpack.c.h.b16 %v4709
    %v4901 = vunpack.c.l.b16 %v4710
    %v4902 = vunpack.c.h.b16 %v4710
    %v4903 = vunpack.c.l.b16 %v4711
    %v4904 = vunpack.c.h.b16 %v4711
    %v4905 = vunpack.c.l.b16 %v4712
    %v4906 = vunpack.c.h.b16 %v4712
    %v4907 = vunpack.c.l.b16 %v4713
    %v4908 = vunpack.c.h.b16 %v4713
    %v4909 = vunpack.c.l.b16 %v4714
    %v4910 = vunpack.c.h.b16 %v4714
    %v4911 = vunpack.c.l.b16 %v4715
    %v4912 = vunpack.c.h.b16 %v4715
    %v4913 = vpack.c.b16 %v4787, %v4785
    %v4914 = vpack.c.b16 %v4788, %v4786
    %v4915 = vpack.c.b16 %v4791, %v4789
    %v4916 = vpack.c.b16 %v4792, %v4790
    %v4917 = vpack.c.b16 %v4795, %v4793
    %v4918 = vpack.c.b16 %v4796, %v4794
    %v4919 = vpack.c.b16 %v4799, %v4797
    %v4920 = vpack.c.b16 %v4800, %v4798
    %v4921 = vpack.c.b16 %v4803, %v4801
    %v4922 = vpack.c.b16 %v4804, %v4802
    %v4923 = vpack.c.b16 %v4807, %v4805
    %v4924 = vpack.c.b16 %v4808, %v4806
    %v4925 = vpack.c.b16 %v4811, %v4809
    %v4926 = vpack.c.b16 %v4812, %v4810
    %v4927 = vpack.c.b16 %v4815, %v4813
    %v4928 = vpack.c.b16 %v4816, %v4814
    %v4929 = vpack.c.b16 %v4819, %v4817
    %v4930 = vpack.c.b16 %v4820, %v4818
    %v4931 = vpack.c.b16 %v4823, %v4821
    %v4932 = vpack.c.b16 %v4824, %v4822
    %v4933 = vpack.c.b16 %v4827, %v4825
    %v4934 = vpack.c.b16 %v4828, %v4826
    %v4935 = vpack.c.b16 %v4831, %v4829
    %v4936 = vpack.c.b16 %v4832, %v4830
    %v4937 = vpack.c.b16 %v4835, %v4833
    %v4938 = vpack.c.b16 %v4836, %v4834
    %v4939 = vpack.c.b16 %v4839, %v4837
    %v4940 = vpack.c.b16 %v4840, %v4838
    %v4941 = vpack.c.b16 %v4843, %v4841
    %v4942 = vpack.c.b16 %v4844, %v4842
    %v4943 = vpack.c.b16 %v4847, %v4845
    %v4944 = vpack.c.b16 %v4848, %v4846
    %v4945 = vpack.c.b16 %v4851, %v4849
    %v4946 = vpack.c.b16 %v4852, %v4850
    %v4947 = vpack.c.b16 %v4855, %v4853
    %v4948 = vpack.c.b16 %v4856, %v4854
    %v4949 = vpack.c.b16 %v4859, %v4857
    %v4950 = vpack.c.b16 %v4860, %v4858
    %v4951 = vpack.c.b16 %v4863, %v4861
    %v4952 = vpack.c.b16 %v4864, %v4862
    %v4953 = vpack.c.b16 %v4867, %v4865
    %v4954 = vpack.c.b16 %v4868, %v4866
    %v4955 = vpack.c.b16 %v4871, %v4869
    %v4956 = vpack.c.b16 %v4872, %v4870
    %v4957 = vpack.c.b16 %v4875, %v4873
    %v4958 = vpack.c.b16 %v4876, %v4874
    %v4959 = vpack.c.b16 %v4879, %v4877
    %v4960 = vpack.c.b16 %v4880, %v4878
    %v4961 = vpack.c.b16 %v4883, %v4881
    %v4962 = vpack.c.b16 %v4884, %v4882
    %v4963 = vpack.c.b16 %v4887, %v4885
    %v4964 = vpack.c.b16 %v4888, %v4886
    %v4965 = vpack.c.b16 %v4891, %v4889
    %v4966 = vpack.c.b16 %v4892, %v4890
    %v4967 = vpack.c.b16 %v4895, %v4893
    %v4968 = vpack.c.b16 %v4896, %v4894
    %v4969 = vpack.c.b16 %v4899, %v4897
    %v4970 = vpack.c.b16 %v4900, %v4898
    %v4971 = vpack.c.b16 %v4903, %v4901
    %v4972 = vpack.c.b16 %v4904, %v4902
    %v4973 = vpack.c.b16 %v4907, %v4905
    %v4974 = vpack.c.b16 %v4908, %v4906
    %v4975 = vpack.c.b16 %v4911, %v4909
    %v4976 = vpack.c.b16 %v4912, %v4910
    %5041 = vmatpush.bf16.msra.mxu0 %v4927
    %5042 = vmatpush.bf16.msra.mxu0 %v4925
    %5043 = vmatpush.bf16.msra.mxu0 %v4923
    %5044 = vmatpush.bf16.msra.mxu0 %v4921
    %5045 = vmatpush.bf16.msra.mxu0 %v4919
    %5046 = vmatpush.bf16.msra.mxu0 %v4917
    %5047 = vmatpush.bf16.msra.mxu0 %v4915
    %5048 = vmatpush.bf16.msra.mxu0 %v4913
    %5049 = vmatmul.bf16.gmra.mxu0 %v4620
    %v5050 = vpop.f32.mrf.mxu0
    %v5051 = vadd.f32 %v4717, %v5050
    %v5052 = vpop.f32.mrf.mxu0
    %v5053 = vadd.f32 %v4717, %v5052
    %5054 = vmatmul.bf16.gmra.mxu0 %v4624
    %v5055 = vpop.f32.mrf.mxu0
    %v5056 = vadd.f32 %v4717, %v5055
    %v5057 = vpop.f32.mrf.mxu0
    %v5058 = vadd.f32 %v4717, %v5057
    %5059 = vmatmul.bf16.gmra.mxu0 %v4628
    %v5060 = vpop.f32.mrf.mxu0
    %v5061 = vadd.f32 %v4717, %v5060
    %v5062 = vpop.f32.mrf.mxu0
    %v5063 = vadd.f32 %v4717, %v5062
    %5064 = vmatmul.bf16.gmra.mxu0 %v4632
    %v5065 = vpop.f32.mrf.mxu0
    %v5066 = vadd.f32 %v4717, %v5065
    %v5067 = vpop.f32.mrf.mxu0
    %v5068 = vadd.f32 %v4717, %v5067
    %5069 = vmatmul.bf16.gmra.mxu0 %v4636
    %v5070 = vpop.f32.mrf.mxu0
    %v5071 = vadd.f32 %v4717, %v5070
    %v5072 = vpop.f32.mrf.mxu0
    %v5073 = vadd.f32 %v4717, %v5072
    %5074 = vmatmul.bf16.gmra.mxu0 %v4640
    %v5075 = vpop.f32.mrf.mxu0
    %v5076 = vadd.f32 %v4717, %v5075
    %v5077 = vpop.f32.mrf.mxu0
    %v5078 = vadd.f32 %v4717, %v5077
    %5079 = vmatmul.bf16.gmra.mxu0 %v4644
    %v5080 = vpop.f32.mrf.mxu0
    %v5081 = vadd.f32 %v4717, %v5080
    %v5082 = vpop.f32.mrf.mxu0
    %v5083 = vadd.f32 %v4717, %v5082
    %5084 = vmatmul.bf16.gmra.mxu0 %v4648
    %v5085 = vpop.f32.mrf.mxu0
    %v5086 = vadd.f32 %v4717, %v5085
    %v5087 = vpop.f32.mrf.mxu0
    %v5088 = vadd.f32 %v4717, %v5087
    %5089 = vdwg.mxu0
    %5090 = vmatpush.bf16.msra.mxu0 %v4943
    %5091 = vmatpush.bf16.msra.mxu0 %v4941
    %5092 = vmatpush.bf16.msra.mxu0 %v4939
    %5093 = vmatpush.bf16.msra.mxu0 %v4937
    %5094 = vmatpush.bf16.msra.mxu0 %v4935
    %5095 = vmatpush.bf16.msra.mxu0 %v4933
    %5096 = vmatpush.bf16.msra.mxu0 %v4931
    %5097 = vmatpush.bf16.msra.mxu0 %v4929
    %5098 = vmatmul.bf16.gmra.mxu0 %v4621
    %v5099 = vpop.f32.mrf.mxu0
    %v5100 = vadd.f32 %v5051, %v5099
    %v5101 = vpop.f32.mrf.mxu0
    %v5102 = vadd.f32 %v5053, %v5101
    %5103 = vmatmul.bf16.gmra.mxu0 %v4625
    %v5104 = vpop.f32.mrf.mxu0
    %v5105 = vadd.f32 %v5056, %v5104
    %v5106 = vpop.f32.mrf.mxu0
    %v5107 = vadd.f32 %v5058, %v5106
    %5108 = vmatmul.bf16.gmra.mxu0 %v4629
    %v5109 = vpop.f32.mrf.mxu0
    %v5110 = vadd.f32 %v5061, %v5109
    %v5111 = vpop.f32.mrf.mxu0
    %v5112 = vadd.f32 %v5063, %v5111
    %5113 = vmatmul.bf16.gmra.mxu0 %v4633
    %v5114 = vpop.f32.mrf.mxu0
    %v5115 = vadd.f32 %v5066, %v5114
    %v5116 = vpop.f32.mrf.mxu0
    %v5117 = vadd.f32 %v5068, %v5116
    %5118 = vmatmul.bf16.gmra.mxu0 %v4637
    %v5119 = vpop.f32.mrf.mxu0
    %v5120 = vadd.f32 %v5071, %v5119
    %v5121 = vpop.f32.mrf.mxu0
    %v5122 = vadd.f32 %v5073, %v5121
    %5123 = vmatmul.bf16.gmra.mxu0 %v4641
    %v5124 = vpop.f32.mrf.mxu0
    %v5125 = vadd.f32 %v5076, %v5124
    %v5126 = vpop.f32.mrf.mxu0
    %v5127 = vadd.f32 %v5078, %v5126
    %5128 = vmatmul.bf16.gmra.mxu0 %v4645
    %v5129 = vpop.f32.mrf.mxu0
    %v5130 = vadd.f32 %v5081, %v5129
    %v5131 = vpop.f32.mrf.mxu0
    %v5132 = vadd.f32 %v5083, %v5131
    %5133 = vmatmul.bf16.gmra.mxu0 %v4649
    %v5134 = vpop.f32.mrf.mxu0
    %v5135 = vadd.f32 %v5086, %v5134
    %v5136 = vpop.f32.mrf.mxu0
    %v5137 = vadd.f32 %v5088, %v5136
    %5138 = vdwg.mxu0
    %5139 = vmatpush.bf16.msra.mxu0 %v4959
    %5140 = vmatpush.bf16.msra.mxu0 %v4957
    %5141 = vmatpush.bf16.msra.mxu0 %v4955
    %5142 = vmatpush.bf16.msra.mxu0 %v4953
    %5143 = vmatpush.bf16.msra.mxu0 %v4951
    %5144 = vmatpush.bf16.msra.mxu0 %v4949
    %5145 = vmatpush.bf16.msra.mxu0 %v4947
    %5146 = vmatpush.bf16.msra.mxu0 %v4945
    %5147 = vmatmul.bf16.gmra.mxu0 %v4622
    %v5148 = vpop.f32.mrf.mxu0
    %v5149 = vadd.f32 %v5100, %v5148
    %v5150 = vpop.f32.mrf.mxu0
    %v5151 = vadd.f32 %v5102, %v5150
    %5152 = vmatmul.bf16.gmra.mxu0 %v4626
    %v5153 = vpop.f32.mrf.mxu0
    %v5154 = vadd.f32 %v5105, %v5153
    %v5155 = vpop.f32.mrf.mxu0
    %v5156 = vadd.f32 %v5107, %v5155
    %5157 = vmatmul.bf16.gmra.mxu0 %v4630
    %v5158 = vpop.f32.mrf.mxu0
    %v5159 = vadd.f32 %v5110, %v5158
    %v5160 = vpop.f32.mrf.mxu0
    %v5161 = vadd.f32 %v5112, %v5160
    %5162 = vmatmul.bf16.gmra.mxu0 %v4634
    %v5163 = vpop.f32.mrf.mxu0
    %v5164 = vadd.f32 %v5115, %v5163
    %v5165 = vpop.f32.mrf.mxu0
    %v5166 = vadd.f32 %v5117, %v5165
    %5167 = vmatmul.bf16.gmra.mxu0 %v4638
    %v5168 = vpop.f32.mrf.mxu0
    %v5169 = vadd.f32 %v5120, %v5168
    %v5170 = vpop.f32.mrf.mxu0
    %v5171 = vadd.f32 %v5122, %v5170
    %5172 = vmatmul.bf16.gmra.mxu0 %v4642
    %v5173 = vpop.f32.mrf.mxu0
    %v5174 = vadd.f32 %v5125, %v5173
    %v5175 = vpop.f32.mrf.mxu0
    %v5176 = vadd.f32 %v5127, %v5175
    %5177 = vmatmul.bf16.gmra.mxu0 %v4646
    %v5178 = vpop.f32.mrf.mxu0
    %v5179 = vadd.f32 %v5130, %v5178
    %v5180 = vpop.f32.mrf.mxu0
    %v5181 = vadd.f32 %v5132, %v5180
    %5182 = vmatmul.bf16.gmra.mxu0 %v4650
    %v5183 = vpop.f32.mrf.mxu0
    %v5184 = vadd.f32 %v5135, %v5183
    %v5185 = vpop.f32.mrf.mxu0
    %v5186 = vadd.f32 %v5137, %v5185
    %5187 = vdwg.mxu0
    %5188 = vmatpush.bf16.msra.mxu0 %v4975
    %5189 = vmatpush.bf16.msra.mxu0 %v4973
    %5190 = vmatpush.bf16.msra.mxu0 %v4971
    %5191 = vmatpush.bf16.msra.mxu0 %v4969
    %5192 = vmatpush.bf16.msra.mxu0 %v4967
    %5193 = vmatpush.bf16.msra.mxu0 %v4965
    %5194 = vmatpush.bf16.msra.mxu0 %v4963
    %5195 = vmatpush.bf16.msra.mxu0 %v4961
    %5196 = vmatmul.bf16.gmra.mxu0 %v4623
    %v5197 = vpop.f32.mrf.mxu0
    %v5198 = vadd.f32 %v5149, %v5197
    %v5199 = vpop.f32.mrf.mxu0
    %v5200 = vadd.f32 %v5151, %v5199
    %5201 = vmatmul.bf16.gmra.mxu0 %v4627
    %v5202 = vpop.f32.mrf.mxu0
    %v5203 = vadd.f32 %v5154, %v5202
    %v5204 = vpop.f32.mrf.mxu0
    %v5205 = vadd.f32 %v5156, %v5204
    %5206 = vmatmul.bf16.gmra.mxu0 %v4631
    %v5207 = vpop.f32.mrf.mxu0
    %v5208 = vadd.f32 %v5159, %v5207
    %v5209 = vpop.f32.mrf.mxu0
    %v5210 = vadd.f32 %v5161, %v5209
    %5211 = vmatmul.bf16.gmra.mxu0 %v4635
    %v5212 = vpop.f32.mrf.mxu0
    %v5213 = vadd.f32 %v5164, %v5212
    %v5214 = vpop.f32.mrf.mxu0
    %v5215 = vadd.f32 %v5166, %v5214
    %5216 = vmatmul.bf16.gmra.mxu0 %v4639
    %v5217 = vpop.f32.mrf.mxu0
    %v5218 = vadd.f32 %v5169, %v5217
    %v5219 = vpop.f32.mrf.mxu0
    %v5220 = vadd.f32 %v5171, %v5219
    %5221 = vmatmul.bf16.gmra.mxu0 %v4643
    %v5222 = vpop.f32.mrf.mxu0
    %v5223 = vadd.f32 %v5174, %v5222
    %v5224 = vpop.f32.mrf.mxu0
    %v5225 = vadd.f32 %v5176, %v5224
    %5226 = vmatmul.bf16.gmra.mxu0 %v4647
    %v5227 = vpop.f32.mrf.mxu0
    %v5228 = vadd.f32 %v5179, %v5227
    %v5229 = vpop.f32.mrf.mxu0
    %v5230 = vadd.f32 %v5181, %v5229
    %5231 = vmatmul.bf16.gmra.mxu0 %v4651
    %v5232 = vpop.f32.mrf.mxu0
    %v5233 = vadd.f32 %v5184, %v5232
    %v5234 = vpop.f32.mrf.mxu0
    %v5235 = vadd.f32 %v5186, %v5234
    %5236 = vdwg.mxu0
    %5237 = vmatpush.bf16.msra.mxu0 %v4928
    %5238 = vmatpush.bf16.msra.mxu0 %v4926
    %5239 = vmatpush.bf16.msra.mxu0 %v4924
    %5240 = vmatpush.bf16.msra.mxu0 %v4922
    %5241 = vmatpush.bf16.msra.mxu0 %v4920
    %5242 = vmatpush.bf16.msra.mxu0 %v4918
    %5243 = vmatpush.bf16.msra.mxu0 %v4916
    %5244 = vmatpush.bf16.msra.mxu0 %v4914
    %5245 = vmatmul.bf16.gmra.mxu0 %v4620
    %v5246 = vpop.f32.mrf.mxu0
    %v5247 = vadd.f32 %v4718, %v5246
    %v5248 = vpop.f32.mrf.mxu0
    %v5249 = vadd.f32 %v4718, %v5248
    %5250 = vmatmul.bf16.gmra.mxu0 %v4624
    %v5251 = vpop.f32.mrf.mxu0
    %v5252 = vadd.f32 %v4718, %v5251
    %v5253 = vpop.f32.mrf.mxu0
    %v5254 = vadd.f32 %v4718, %v5253
    %5255 = vmatmul.bf16.gmra.mxu0 %v4628
    %v5256 = vpop.f32.mrf.mxu0
    %v5257 = vadd.f32 %v4718, %v5256
    %v5258 = vpop.f32.mrf.mxu0
    %v5259 = vadd.f32 %v4718, %v5258
    %5260 = vmatmul.bf16.gmra.mxu0 %v4632
    %v5261 = vpop.f32.mrf.mxu0
    %v5262 = vadd.f32 %v4718, %v5261
    %v5263 = vpop.f32.mrf.mxu0
    %v5264 = vadd.f32 %v4718, %v5263
    %5265 = vmatmul.bf16.gmra.mxu0 %v4636
    %v5266 = vpop.f32.mrf.mxu0
    %v5267 = vadd.f32 %v4718, %v5266
    %v5268 = vpop.f32.mrf.mxu0
    %v5269 = vadd.f32 %v4718, %v5268
    %5270 = vmatmul.bf16.gmra.mxu0 %v4640
    %v5271 = vpop.f32.mrf.mxu0
    %v5272 = vadd.f32 %v4718, %v5271
    %v5273 = vpop.f32.mrf.mxu0
    %v5274 = vadd.f32 %v4718, %v5273
    %5275 = vmatmul.bf16.gmra.mxu0 %v4644
    %v5276 = vpop.f32.mrf.mxu0
    %v5277 = vadd.f32 %v4718, %v5276
    %v5278 = vpop.f32.mrf.mxu0
    %v5279 = vadd.f32 %v4718, %v5278
    %5280 = vmatmul.bf16.gmra.mxu0 %v4648
    %v5281 = vpop.f32.mrf.mxu0
    %v5282 = vadd.f32 %v4718, %v5281
    %v5283 = vpop.f32.mrf.mxu0
    %v5284 = vadd.f32 %v4718, %v5283
    %5285 = vdwg.mxu0
    %5286 = vmatpush.bf16.msra.mxu0 %v4944
    %5287 = vmatpush.bf16.msra.mxu0 %v4942
    %5288 = vmatpush.bf16.msra.mxu0 %v4940
    %5289 = vmatpush.bf16.msra.mxu0 %v4938
    %5290 = vmatpush.bf16.msra.mxu0 %v4936
    %5291 = vmatpush.bf16.msra.mxu0 %v4934
    %5292 = vmatpush.bf16.msra.mxu0 %v4932
    %5293 = vmatpush.bf16.msra.mxu0 %v4930
    %5294 = vmatmul.bf16.gmra.mxu0 %v4621
    %v5295 = vpop.f32.mrf.mxu0
    %v5296 = vadd.f32 %v5247, %v5295
    %v5297 = vpop.f32.mrf.mxu0
    %v5298 = vadd.f32 %v5249, %v5297
    %5299 = vmatmul.bf16.gmra.mxu0 %v4625
    %v5300 = vpop.f32.mrf.mxu0
    %v5301 = vadd.f32 %v5252, %v5300
    %v5302 = vpop.f32.mrf.mxu0
    %v5303 = vadd.f32 %v5254, %v5302
    %5304 = vmatmul.bf16.gmra.mxu0 %v4629
    %v5305 = vpop.f32.mrf.mxu0
    %v5306 = vadd.f32 %v5257, %v5305
    %v5307 = vpop.f32.mrf.mxu0
    %v5308 = vadd.f32 %v5259, %v5307
    %5309 = vmatmul.bf16.gmra.mxu0 %v4633
    %v5310 = vpop.f32.mrf.mxu0
    %v5311 = vadd.f32 %v5262, %v5310
    %v5312 = vpop.f32.mrf.mxu0
    %v5313 = vadd.f32 %v5264, %v5312
    %5314 = vmatmul.bf16.gmra.mxu0 %v4637
    %v5315 = vpop.f32.mrf.mxu0
    %v5316 = vadd.f32 %v5267, %v5315
    %v5317 = vpop.f32.mrf.mxu0
    %v5318 = vadd.f32 %v5269, %v5317
    %5319 = vmatmul.bf16.gmra.mxu0 %v4641
    %v5320 = vpop.f32.mrf.mxu0
    %v5321 = vadd.f32 %v5272, %v5320
    %v5322 = vpop.f32.mrf.mxu0
    %v5323 = vadd.f32 %v5274, %v5322
    %5324 = vmatmul.bf16.gmra.mxu0 %v4645
    %v5325 = vpop.f32.mrf.mxu0
    %v5326 = vadd.f32 %v5277, %v5325
    %v5327 = vpop.f32.mrf.mxu0
    %v5328 = vadd.f32 %v5279, %v5327
    %5329 = vmatmul.bf16.gmra.mxu0 %v4649
    %v5330 = vpop.f32.mrf.mxu0
    %v5331 = vadd.f32 %v5282, %v5330
    %v5332 = vpop.f32.mrf.mxu0
    %v5333 = vadd.f32 %v5284, %v5332
    %5334 = vdwg.mxu0
    %5335 = vmatpush.bf16.msra.mxu0 %v4960
    %5336 = vmatpush.bf16.msra.mxu0 %v4958
    %5337 = vmatpush.bf16.msra.mxu0 %v4956
    %5338 = vmatpush.bf16.msra.mxu0 %v4954
    %5339 = vmatpush.bf16.msra.mxu0 %v4952
    %5340 = vmatpush.bf16.msra.mxu0 %v4950
    %5341 = vmatpush.bf16.msra.mxu0 %v4948
    %5342 = vmatpush.bf16.msra.mxu0 %v4946
    %5343 = vmatmul.bf16.gmra.mxu0 %v4622
    %v5344 = vpop.f32.mrf.mxu0
    %v5345 = vadd.f32 %v5296, %v5344
    %v5346 = vpop.f32.mrf.mxu0
    %v5347 = vadd.f32 %v5298, %v5346
    %5348 = vmatmul.bf16.gmra.mxu0 %v4626
    %v5349 = vpop.f32.mrf.mxu0
    %v5350 = vadd.f32 %v5301, %v5349
    %v5351 = vpop.f32.mrf.mxu0
    %v5352 = vadd.f32 %v5303, %v5351
    %5353 = vmatmul.bf16.gmra.mxu0 %v4630
    %v5354 = vpop.f32.mrf.mxu0
    %v5355 = vadd.f32 %v5306, %v5354
    %v5356 = vpop.f32.mrf.mxu0
    %v5357 = vadd.f32 %v5308, %v5356
    %5358 = vmatmul.bf16.gmra.mxu0 %v4634
    %v5359 = vpop.f32.mrf.mxu0
    %v5360 = vadd.f32 %v5311, %v5359
    %v5361 = vpop.f32.mrf.mxu0
    %v5362 = vadd.f32 %v5313, %v5361
    %5363 = vmatmul.bf16.gmra.mxu0 %v4638
    %v5364 = vpop.f32.mrf.mxu0
    %v5365 = vadd.f32 %v5316, %v5364
    %v5366 = vpop.f32.mrf.mxu0
    %v5367 = vadd.f32 %v5318, %v5366
    %5368 = vmatmul.bf16.gmra.mxu0 %v4642
    %v5369 = vpop.f32.mrf.mxu0
    %v5370 = vadd.f32 %v5321, %v5369
    %v5371 = vpop.f32.mrf.mxu0
    %v5372 = vadd.f32 %v5323, %v5371
    %5373 = vmatmul.bf16.gmra.mxu0 %v4646
    %v5374 = vpop.f32.mrf.mxu0
    %v5375 = vadd.f32 %v5326, %v5374
    %v5376 = vpop.f32.mrf.mxu0
    %v5377 = vadd.f32 %v5328, %v5376
    %5378 = vmatmul.bf16.gmra.mxu0 %v4650
    %v5379 = vpop.f32.mrf.mxu0
    %v5380 = vadd.f32 %v5331, %v5379
    %v5381 = vpop.f32.mrf.mxu0
    %v5382 = vadd.f32 %v5333, %v5381
    %5383 = vdwg.mxu0
    %5384 = vmatpush.bf16.msra.mxu0 %v4976
    %5385 = vmatpush.bf16.msra.mxu0 %v4974
    %5386 = vmatpush.bf16.msra.mxu0 %v4972
    %5387 = vmatpush.bf16.msra.mxu0 %v4970
    %5388 = vmatpush.bf16.msra.mxu0 %v4968
    %5389 = vmatpush.bf16.msra.mxu0 %v4966
    %5390 = vmatpush.bf16.msra.mxu0 %v4964
    %5391 = vmatpush.bf16.msra.mxu0 %v4962
    %5392 = vmatmul.bf16.gmra.mxu0 %v4623
    %v5393 = vpop.f32.mrf.mxu0
    %v5394 = vadd.f32 %v5345, %v5393
    %v5395 = vpop.f32.mrf.mxu0
    %v5396 = vadd.f32 %v5347, %v5395
    %5397 = vmatmul.bf16.gmra.mxu0 %v4627
    %v5398 = vpop.f32.mrf.mxu0
    %v5399 = vadd.f32 %v5350, %v5398
    %v5400 = vpop.f32.mrf.mxu0
    %v5401 = vadd.f32 %v5352, %v5400
    %5402 = vmatmul.bf16.gmra.mxu0 %v4631
    %v5403 = vpop.f32.mrf.mxu0
    %v5404 = vadd.f32 %v5355, %v5403
    %v5405 = vpop.f32.mrf.mxu0
    %v5406 = vadd.f32 %v5357, %v5405
    %5407 = vmatmul.bf16.gmra.mxu0 %v4635
    %v5408 = vpop.f32.mrf.mxu0
    %v5409 = vadd.f32 %v5360, %v5408
    %v5410 = vpop.f32.mrf.mxu0
    %v5411 = vadd.f32 %v5362, %v5410
    %5412 = vmatmul.bf16.gmra.mxu0 %v4639
    %v5413 = vpop.f32.mrf.mxu0
    %v5414 = vadd.f32 %v5365, %v5413
    %v5415 = vpop.f32.mrf.mxu0
    %v5416 = vadd.f32 %v5367, %v5415
    %5417 = vmatmul.bf16.gmra.mxu0 %v4643
    %v5418 = vpop.f32.mrf.mxu0
    %v5419 = vadd.f32 %v5370, %v5418
    %v5420 = vpop.f32.mrf.mxu0
    %v5421 = vadd.f32 %v5372, %v5420
    %5422 = vmatmul.bf16.gmra.mxu0 %v4647
    %v5423 = vpop.f32.mrf.mxu0
    %v5424 = vadd.f32 %v5375, %v5423
    %v5425 = vpop.f32.mrf.mxu0
    %v5426 = vadd.f32 %v5377, %v5425
    %5427 = vmatmul.bf16.gmra.mxu0 %v4651
    %v5428 = vpop.f32.mrf.mxu0
    %v5429 = vadd.f32 %v5380, %v5428
    %v5430 = vpop.f32.mrf.mxu0
    %v5431 = vadd.f32 %v5382, %v5430
    %5432 = vdwg.mxu0
    %v5433 = vmax.f32 %v5198, 0.0
    %v5434 = vmax.f32 %v5394, 0.0
    %v5435 = vmax.f32 %v5200, 0.0
    %v5436 = vmax.f32 %v5396, 0.0
    %v5437 = vmax.f32 %v5203, 0.0
    %v5438 = vmax.f32 %v5399, 0.0
    %v5439 = vmax.f32 %v5205, 0.0
    %v5440 = vmax.f32 %v5401, 0.0
    %v5441 = vmax.f32 %v5208, 0.0
    %v5442 = vmax.f32 %v5404, 0.0
    %v5443 = vmax.f32 %v5210, 0.0
    %v5444 = vmax.f32 %v5406, 0.0
    %v5445 = vmax.f32 %v5213, 0.0
    %v5446 = vmax.f32 %v5409, 0.0
    %v5447 = vmax.f32 %v5215, 0.0
    %v5448 = vmax.f32 %v5411, 0.0
    %v5449 = vmax.f32 %v5218, 0.0
    %v5450 = vmax.f32 %v5414, 0.0
    %v5451 = vmax.f32 %v5220, 0.0
    %v5452 = vmax.f32 %v5416, 0.0
    %v5453 = vmax.f32 %v5223, 0.0
    %v5454 = vmax.f32 %v5419, 0.0
    %v5455 = vmax.f32 %v5225, 0.0
    %v5456 = vmax.f32 %v5421, 0.0
    %v5457 = vmax.f32 %v5228, 0.0
    %v5458 = vmax.f32 %v5424, 0.0
    %v5459 = vmax.f32 %v5230, 0.0
    %v5460 = vmax.f32 %v5426, 0.0
    %v5461 = vmax.f32 %v5233, 0.0
    %v5462 = vmax.f32 %v5429, 0.0
    %v5463 = vmax.f32 %v5235, 0.0
    %v5464 = vmax.f32 %v5431, 0.0
    %v5465 = vadd.f32 %v5433, %v5435
    %v5466 = vadd.f32 %v5465, %v5437
    %v5467 = vadd.f32 %v5466, %v5439
    %v5468 = vadd.f32 %v5467, %v5441
    %v5469 = vadd.f32 %v5468, %v5443
    %v5470 = vadd.f32 %v5469, %v5445
    %v5471 = vadd.f32 %v5470, %v5447
    %v5472 = vadd.f32 %v5471, %v5449
    %v5473 = vadd.f32 %v5472, %v5451
    %v5474 = vadd.f32 %v5473, %v5453
    %v5475 = vadd.f32 %v5474, %v5455
    %v5476 = vadd.f32 %v5475, %v5457
    %v5477 = vadd.f32 %v5476, %v5459
    %v5478 = vadd.f32 %v5477, %v5461
    %v5479 = vadd.f32 %v5478, %v5463
    %v5480 = vrot.slane %v5479, 4
    %v5481 = vadd.f32 %v5479, %v5480
    %v5482 = vrot.slane %v5481, 2
    %v5483 = vadd.f32 %v5481, %v5482
    %v5484 = vrot.slane %v5483, 1
    %v5485 = vadd.f32 %v5483, %v5484
    %v5486 = vadd.f32 %v5434, %v5436
    %v5487 = vadd.f32 %v5486, %v5438
    %v5488 = vadd.f32 %v5487, %v5440
    %v5489 = vadd.f32 %v5488, %v5442
    %v5490 = vadd.f32 %v5489, %v5444
    %v5491 = vadd.f32 %v5490, %v5446
    %v5492 = vadd.f32 %v5491, %v5448
    %v5493 = vadd.f32 %v5492, %v5450
    %v5494 = vadd.f32 %v5493, %v5452
    %v5495 = vadd.f32 %v5494, %v5454
    %v5496 = vadd.f32 %v5495, %v5456
    %v5497 = vadd.f32 %v5496, %v5458
    %v5498 = vadd.f32 %v5497, %v5460
    %v5499 = vadd.f32 %v5498, %v5462
    %v5500 = vadd.f32 %v5499, %v5464
    %v5501 = vrot.slane %v5500, 4
    %v5502 = vadd.f32 %v5500, %v5501
    %v5503 = vrot.slane %v5502, 2
    %v5504 = vadd.f32 %v5502, %v5503
    %v5505 = vrot.slane %v5504, 1
    %v5506 = vadd.f32 %v5504, %v5505
    %v5507 = vmul.f32 %v5485, %v4234
    %v5508 = vmul.f32 %v5506, %v4234
    %v5509 = vmul.f32 %v5433, %v5433
    %v5510 = vmul.f32 %v5434, %v5434
    %v5511 = vmul.f32 %v5435, %v5435
    %v5512 = vmul.f32 %v5436, %v5436
    %v5513 = vmul.f32 %v5437, %v5437
    %v5514 = vmul.f32 %v5438, %v5438
    %v5515 = vmul.f32 %v5439, %v5439
    %v5516 = vmul.f32 %v5440, %v5440
    %v5517 = vmul.f32 %v5441, %v5441
    %v5518 = vmul.f32 %v5442, %v5442
    %v5519 = vmul.f32 %v5443, %v5443
    %v5520 = vmul.f32 %v5444, %v5444
    %v5521 = vmul.f32 %v5445, %v5445
    %v5522 = vmul.f32 %v5446, %v5446
    %v5523 = vmul.f32 %v5447, %v5447
    %v5524 = vmul.f32 %v5448, %v5448
    %v5525 = vmul.f32 %v5449, %v5449
    %v5526 = vmul.f32 %v5450, %v5450
    %v5527 = vmul.f32 %v5451, %v5451
    %v5528 = vmul.f32 %v5452, %v5452
    %v5529 = vmul.f32 %v5453, %v5453
    %v5530 = vmul.f32 %v5454, %v5454
    %v5531 = vmul.f32 %v5455, %v5455
    %v5532 = vmul.f32 %v5456, %v5456
    %v5533 = vmul.f32 %v5457, %v5457
    %v5534 = vmul.f32 %v5458, %v5458
    %v5535 = vmul.f32 %v5459, %v5459
    %v5536 = vmul.f32 %v5460, %v5460
    %v5537 = vmul.f32 %v5461, %v5461
    %v5538 = vmul.f32 %v5462, %v5462
    %v5539 = vmul.f32 %v5463, %v5463
    %v5540 = vmul.f32 %v5464, %v5464
    %v5541 = vadd.f32 %v5509, %v5511
    %v5542 = vadd.f32 %v5541, %v5513
    %v5543 = vadd.f32 %v5542, %v5515
    %v5544 = vadd.f32 %v5543, %v5517
    %v5545 = vadd.f32 %v5544, %v5519
    %v5546 = vadd.f32 %v5545, %v5521
    %v5547 = vadd.f32 %v5546, %v5523
    %v5548 = vadd.f32 %v5547, %v5525
    %v5549 = vadd.f32 %v5548, %v5527
    %v5550 = vadd.f32 %v5549, %v5529
    %v5551 = vadd.f32 %v5550, %v5531
    %v5552 = vadd.f32 %v5551, %v5533
    %v5553 = vadd.f32 %v5552, %v5535
    %v5554 = vadd.f32 %v5553, %v5537
    %v5555 = vadd.f32 %v5554, %v5539
    %v5556 = vrot.slane %v5555, 4
    %v5557 = vadd.f32 %v5555, %v5556
    %v5558 = vrot.slane %v5557, 2
    %v5559 = vadd.f32 %v5557, %v5558
    %v5560 = vrot.slane %v5559, 1
    %v5561 = vadd.f32 %v5559, %v5560
    %v5562 = vadd.f32 %v5510, %v5512
    %v5563 = vadd.f32 %v5562, %v5514
    %v5564 = vadd.f32 %v5563, %v5516
    %v5565 = vadd.f32 %v5564, %v5518
    %v5566 = vadd.f32 %v5565, %v5520
    %v5567 = vadd.f32 %v5566, %v5522
    %v5568 = vadd.f32 %v5567, %v5524
    %v5569 = vadd.f32 %v5568, %v5526
    %v5570 = vadd.f32 %v5569, %v5528
    %v5571 = vadd.f32 %v5570, %v5530
    %v5572 = vadd.f32 %v5571, %v5532
    %v5573 = vadd.f32 %v5572, %v5534
    %v5574 = vadd.f32 %v5573, %v5536
    %v5575 = vadd.f32 %v5574, %v5538
    %v5576 = vadd.f32 %v5575, %v5540
    %v5577 = vrot.slane %v5576, 4
    %v5578 = vadd.f32 %v5576, %v5577
    %v5579 = vrot.slane %v5578, 2
    %v5580 = vadd.f32 %v5578, %v5579
    %v5581 = vrot.slane %v5580, 1
    %v5582 = vadd.f32 %v5580, %v5581
    %v5583 = vmul.f32 %v5561, %v4234
    %v5584 = vmul.f32 %v5582, %v4234
    %v5585 = vmul.f32 %v5507, %v5507
    %v5586 = vmul.f32 %v5508, %v5508
    %v5587 = vsub.f32 %v5583, %v5585
    %v5588 = vsub.f32 %v5584, %v5586
    %v5589 = vmax.f32 %v5587, 0.0
    %v5590 = vmax.f32 %v5588, 0.0
    %v5591 = vadd.f32 %v5589, 1e-05
    %v5592 = vadd.f32 %v5590, 1e-05
    %v5593 = vrsqrt.pop %v5591
    %v5594 = vmul.f32 %v5593, %v5591
    %v5595 = vmul.f32 %v5594, %v5593
    %v5596 = vmul.f32 0.5, %v5595
    %v5597 = vsub.f32 1.5, %v5596
    %v5598 = vmul.f32 %v5593, %v5597
    %vm5599 = vweird.f32 %v5591
    %vm5600 = vweird.f32 %v5593
    %vm5601 = vmor %vm5599, %vm5600
    %v5602 = vsel %vm5601, %v5593, %v5598
    %v5603 = vrsqrt.pop %v5592
    %v5604 = vmul.f32 %v5603, %v5592
    %v5605 = vmul.f32 %v5604, %v5603
    %v5606 = vmul.f32 0.5, %v5605
    %v5607 = vsub.f32 1.5, %v5606
    %v5608 = vmul.f32 %v5603, %v5607
    %vm5609 = vweird.f32 %v5592
    %vm5610 = vweird.f32 %v5603
    %vm5611 = vmor %vm5609, %vm5610
    %v5612 = vsel %vm5611, %v5603, %v5608
    %v5614 = vperm.slane %v204, 0
    %v5615 = vperm.slane %v204, 1
    %v5618 = vmul.f32 %v5602, %v5614
    %v5619 = vmul.f32 %v5612, %v5615
    %v5620 = vmul.f32 %v5507, %v5618
    %v5621 = vmul.f32 %v5508, %v5619
    %v5624 = vrot.slane %v5621, 7
    %v5625 = vsel %vm4471, %v5620, %v5624
    %v5627 = vsub.f32 %v206, %v5625
    %v5628 = vperm.slane %v5618, 0
    %v5629 = vperm.slane %v5619, 0
    %v5630 = vmul.f32 %v5433, %v5628
    %v5631 = vmul.f32 %v5434, %v5629
    %v5632 = vmul.f32 %v5435, %v5628
    %v5633 = vmul.f32 %v5436, %v5629
    %v5634 = vmul.f32 %v5437, %v5628
    %v5635 = vmul.f32 %v5438, %v5629
    %v5636 = vmul.f32 %v5439, %v5628
    %v5637 = vmul.f32 %v5440, %v5629
    %v5638 = vmul.f32 %v5441, %v5628
    %v5639 = vmul.f32 %v5442, %v5629
    %v5640 = vmul.f32 %v5443, %v5628
    %v5641 = vmul.f32 %v5444, %v5629
    %v5642 = vmul.f32 %v5445, %v5628
    %v5643 = vmul.f32 %v5446, %v5629
    %v5644 = vmul.f32 %v5447, %v5628
    %v5645 = vmul.f32 %v5448, %v5629
    %v5646 = vmul.f32 %v5449, %v5628
    %v5647 = vmul.f32 %v5450, %v5629
    %v5648 = vmul.f32 %v5451, %v5628
    %v5649 = vmul.f32 %v5452, %v5629
    %v5650 = vmul.f32 %v5453, %v5628
    %v5651 = vmul.f32 %v5454, %v5629
    %v5652 = vmul.f32 %v5455, %v5628
    %v5653 = vmul.f32 %v5456, %v5629
    %v5654 = vmul.f32 %v5457, %v5628
    %v5655 = vmul.f32 %v5458, %v5629
    %v5656 = vmul.f32 %v5459, %v5628
    %v5657 = vmul.f32 %v5460, %v5629
    %v5658 = vmul.f32 %v5461, %v5628
    %v5659 = vmul.f32 %v5462, %v5629
    %v5660 = vmul.f32 %v5463, %v5628
    %v5661 = vmul.f32 %v5464, %v5629
    %v5663 = vperm.slane %v5627, 0
    %v5664 = vperm.slane %v5627, 1
    %v5667 = vadd.f32 %v5630, %v5663
    %v5668 = vadd.f32 %v5631, %v5664
    %v5669 = vadd.f32 %v5632, %v5663
    %v5670 = vadd.f32 %v5633, %v5664
    %v5671 = vadd.f32 %v5634, %v5663
    %v5672 = vadd.f32 %v5635, %v5664
    %v5673 = vadd.f32 %v5636, %v5663
    %v5674 = vadd.f32 %v5637, %v5664
    %v5675 = vadd.f32 %v5638, %v5663
    %v5676 = vadd.f32 %v5639, %v5664
    %v5677 = vadd.f32 %v5640, %v5663
    %v5678 = vadd.f32 %v5641, %v5664
    %v5679 = vadd.f32 %v5642, %v5663
    %v5680 = vadd.f32 %v5643, %v5664
    %v5681 = vadd.f32 %v5644, %v5663
    %v5682 = vadd.f32 %v5645, %v5664
    %v5683 = vadd.f32 %v5646, %v5663
    %v5684 = vadd.f32 %v5647, %v5664
    %v5685 = vadd.f32 %v5648, %v5663
    %v5686 = vadd.f32 %v5649, %v5664
    %v5687 = vadd.f32 %v5650, %v5663
    %v5688 = vadd.f32 %v5651, %v5664
    %v5689 = vadd.f32 %v5652, %v5663
    %v5690 = vadd.f32 %v5653, %v5664
    %v5691 = vadd.f32 %v5654, %v5663
    %v5692 = vadd.f32 %v5655, %v5664
    %v5693 = vadd.f32 %v5656, %v5663
    %v5694 = vadd.f32 %v5657, %v5664
    %v5695 = vadd.f32 %v5658, %v5663
    %v5696 = vadd.f32 %v5659, %v5664
    %v5697 = vadd.f32 %v5660, %v5663
    %v5698 = vadd.f32 %v5661, %v5664
    %v5699 = vpack.c.bf16 %v5669, %v5667
    %v5700 = vpack.c.bf16 %v5670, %v5668
    %v5701 = vpack.c.bf16 %v5673, %v5671
    %v5702 = vpack.c.bf16 %v5674, %v5672
    %v5703 = vpack.c.bf16 %v5677, %v5675
    %v5704 = vpack.c.bf16 %v5678, %v5676
    %v5705 = vpack.c.bf16 %v5681, %v5679
    %v5706 = vpack.c.bf16 %v5682, %v5680
    %v5707 = vpack.c.bf16 %v5685, %v5683
    %v5708 = vpack.c.bf16 %v5686, %v5684
    %v5709 = vpack.c.bf16 %v5689, %v5687
    %v5710 = vpack.c.bf16 %v5690, %v5688
    %v5711 = vpack.c.bf16 %v5693, %v5691
    %v5712 = vpack.c.bf16 %v5694, %v5692
    %v5713 = vpack.c.bf16 %v5697, %v5695
    %v5714 = vpack.c.bf16 %v5698, %v5696
    %v5715 = vld [vmem:[#allocation8] sm:$0xf]
    %v5716 = vld [vmem:[#allocation8 + $0x4] sm:$0xf]
    %v5717 = vld [vmem:[#allocation8 + $0x8] sm:$0xf]
    %v5718 = vld [vmem:[#allocation8 + $0xc] sm:$0xf]
    %v5719 = vld [vmem:[#allocation8 + $0x10] sm:$0xf]
    %v5720 = vld [vmem:[#allocation8 + $0x14] sm:$0xf]
    %v5721 = vld [vmem:[#allocation8 + $0x18] sm:$0xf]
    %v5722 = vld [vmem:[#allocation8 + $0x1c] sm:$0xf]
    %v5723 = vld [vmem:[#allocation8 + $0x20] sm:$0xf]
    %v5724 = vld [vmem:[#allocation8 + $0x24] sm:$0xf]
    %v5725 = vld [vmem:[#allocation8 + $0x28] sm:$0xf]
    %v5726 = vld [vmem:[#allocation8 + $0x2c] sm:$0xf]
    %v5727 = vld [vmem:[#allocation8 + $0x30] sm:$0xf]
    %v5728 = vld [vmem:[#allocation8 + $0x34] sm:$0xf]
    %v5729 = vld [vmem:[#allocation8 + $0x38] sm:$0xf]
    %v5730 = vld [vmem:[#allocation8 + $0x3c] sm:$0xf]
    %v5731 = vld [vmem:[#allocation8 + $0x40] sm:$0xf]
    %v5732 = vld [vmem:[#allocation8 + $0x44] sm:$0xf]
    %v5733 = vld [vmem:[#allocation8 + $0x48] sm:$0xf]
    %v5734 = vld [vmem:[#allocation8 + $0x4c] sm:$0xf]
    %v5735 = vld [vmem:[#allocation8 + $0x50] sm:$0xf]
    %v5736 = vld [vmem:[#allocation8 + $0x54] sm:$0xf]
    %v5737 = vld [vmem:[#allocation8 + $0x58] sm:$0xf]
    %v5738 = vld [vmem:[#allocation8 + $0x5c] sm:$0xf]
    %v5739 = vld [vmem:[#allocation8 + $0x60] sm:$0xf]
    %v5740 = vld [vmem:[#allocation8 + $0x64] sm:$0xf]
    %v5741 = vld [vmem:[#allocation8 + $0x68] sm:$0xf]
    %v5742 = vld [vmem:[#allocation8 + $0x6c] sm:$0xf]
    %v5743 = vld [vmem:[#allocation8 + $0x70] sm:$0xf]
    %v5744 = vld [vmem:[#allocation8 + $0x74] sm:$0xf]
    %v5745 = vld [vmem:[#allocation8 + $0x78] sm:$0xf]
    %v5746 = vld [vmem:[#allocation8 + $0x7c] sm:$0xf]
    %v5779 = vunpack.c.l.b16 %v5715
    %v5780 = vunpack.c.l.b16 %v5716
    %v5781 = vunpack.c.l.b16 %v5717
    %v5782 = vunpack.c.l.b16 %v5718
    %v5783 = vunpack.c.l.b16 %v5719
    %v5784 = vunpack.c.l.b16 %v5720
    %v5785 = vunpack.c.l.b16 %v5721
    %v5786 = vunpack.c.l.b16 %v5722
    %v5787 = vunpack.c.l.b16 %v5723
    %v5788 = vunpack.c.l.b16 %v5724
    %v5789 = vunpack.c.l.b16 %v5725
    %v5790 = vunpack.c.l.b16 %v5726
    %v5791 = vunpack.c.l.b16 %v5727
    %v5792 = vunpack.c.l.b16 %v5728
    %v5793 = vunpack.c.l.b16 %v5729
    %v5794 = vunpack.c.l.b16 %v5730
    %v5795 = vunpack.c.l.b16 %v5731
    %v5796 = vunpack.c.l.b16 %v5732
    %v5797 = vunpack.c.l.b16 %v5733
    %v5798 = vunpack.c.l.b16 %v5734
    %v5799 = vunpack.c.l.b16 %v5735
    %v5800 = vunpack.c.l.b16 %v5736
    %v5801 = vunpack.c.l.b16 %v5737
    %v5802 = vunpack.c.l.b16 %v5738
    %v5803 = vunpack.c.l.b16 %v5739
    %v5804 = vunpack.c.l.b16 %v5740
    %v5805 = vunpack.c.l.b16 %v5741
    %v5806 = vunpack.c.l.b16 %v5742
    %v5807 = vunpack.c.l.b16 %v5743
    %v5808 = vunpack.c.l.b16 %v5744
    %v5809 = vunpack.c.l.b16 %v5745
    %v5810 = vunpack.c.l.b16 %v5746
    %v5811 = vpack.c.b16 %v5780, %v5779
    %v5812 = vpack.c.b16 %v5782, %v5781
    %v5813 = vpack.c.b16 %v5784, %v5783
    %v5814 = vpack.c.b16 %v5786, %v5785
    %v5815 = vpack.c.b16 %v5788, %v5787
    %v5816 = vpack.c.b16 %v5790, %v5789
    %v5817 = vpack.c.b16 %v5792, %v5791
    %v5818 = vpack.c.b16 %v5794, %v5793
    %v5819 = vpack.c.b16 %v5796, %v5795
    %v5820 = vpack.c.b16 %v5798, %v5797
    %v5821 = vpack.c.b16 %v5800, %v5799
    %v5822 = vpack.c.b16 %v5802, %v5801
    %v5823 = vpack.c.b16 %v5804, %v5803
    %v5824 = vpack.c.b16 %v5806, %v5805
    %v5825 = vpack.c.b16 %v5808, %v5807
    %v5826 = vpack.c.b16 %v5810, %v5809
    %5843 = vmatpush.bf16.msra.mxu0 %v5818
    %5844 = vmatpush.bf16.msra.mxu0 %v5817
    %5845 = vmatpush.bf16.msra.mxu0 %v5816
    %5846 = vmatpush.bf16.msra.mxu0 %v5815
    %5847 = vmatpush.bf16.msra.mxu0 %v5814
    %5848 = vmatpush.bf16.msra.mxu0 %v5813
    %5849 = vmatpush.bf16.msra.mxu0 %v5812
    %5850 = vmatpush.bf16.msra.mxu0 %v5811
    %5851 = vmatmul.bf16.gmra.mxu0 %v5699
    %v5852 = vpop.f32.mrf.mxu0
    %v5853 = vadd.f32 %v207, %v5852
    %v5854 = vpop.f32.mrf.mxu0
    %v5855 = vadd.f32 %v207, %v5854
    %5856 = vmatmul.bf16.gmra.mxu0 %v5701
    %v5857 = vpop.f32.mrf.mxu0
    %v5858 = vadd.f32 %v207, %v5857
    %v5859 = vpop.f32.mrf.mxu0
    %v5860 = vadd.f32 %v207, %v5859
    %5861 = vmatmul.bf16.gmra.mxu0 %v5703
    %v5862 = vpop.f32.mrf.mxu0
    %v5863 = vadd.f32 %v207, %v5862
    %v5864 = vpop.f32.mrf.mxu0
    %v5865 = vadd.f32 %v207, %v5864
    %5866 = vmatmul.bf16.gmra.mxu0 %v5705
    %v5867 = vpop.f32.mrf.mxu0
    %v5868 = vadd.f32 %v207, %v5867
    %v5869 = vpop.f32.mrf.mxu0
    %v5870 = vadd.f32 %v207, %v5869
    %5871 = vmatmul.bf16.gmra.mxu0 %v5707
    %v5872 = vpop.f32.mrf.mxu0
    %v5873 = vadd.f32 %v207, %v5872
    %v5874 = vpop.f32.mrf.mxu0
    %v5875 = vadd.f32 %v207, %v5874
    %5876 = vmatmul.bf16.gmra.mxu0 %v5709
    %v5877 = vpop.f32.mrf.mxu0
    %v5878 = vadd.f32 %v207, %v5877
    %v5879 = vpop.f32.mrf.mxu0
    %v5880 = vadd.f32 %v207, %v5879
    %5881 = vmatmul.bf16.gmra.mxu0 %v5711
    %v5882 = vpop.f32.mrf.mxu0
    %v5883 = vadd.f32 %v207, %v5882
    %v5884 = vpop.f32.mrf.mxu0
    %v5885 = vadd.f32 %v207, %v5884
    %5886 = vmatmul.bf16.gmra.mxu0 %v5713
    %v5887 = vpop.f32.mrf.mxu0
    %v5888 = vadd.f32 %v207, %v5887
    %v5889 = vpop.f32.mrf.mxu0
    %v5890 = vadd.f32 %v207, %v5889
    %5891 = vdwg.mxu0
    %5892 = vmatpush.bf16.msra.mxu0 %v5826
    %5893 = vmatpush.bf16.msra.mxu0 %v5825
    %5894 = vmatpush.bf16.msra.mxu0 %v5824
    %5895 = vmatpush.bf16.msra.mxu0 %v5823
    %5896 = vmatpush.bf16.msra.mxu0 %v5822
    %5897 = vmatpush.bf16.msra.mxu0 %v5821
    %5898 = vmatpush.bf16.msra.mxu0 %v5820
    %5899 = vmatpush.bf16.msra.mxu0 %v5819
    %5900 = vmatmul.bf16.gmra.mxu0 %v5700
    %v5901 = vpop.f32.mrf.mxu0
    %v5902 = vadd.f32 %v5853, %v5901
    %v5903 = vpop.f32.mrf.mxu0
    %v5904 = vadd.f32 %v5855, %v5903
    %5905 = vmatmul.bf16.gmra.mxu0 %v5702
    %v5906 = vpop.f32.mrf.mxu0
    %v5907 = vadd.f32 %v5858, %v5906
    %v5908 = vpop.f32.mrf.mxu0
    %v5909 = vadd.f32 %v5860, %v5908
    %5910 = vmatmul.bf16.gmra.mxu0 %v5704
    %v5911 = vpop.f32.mrf.mxu0
    %v5912 = vadd.f32 %v5863, %v5911
    %v5913 = vpop.f32.mrf.mxu0
    %v5914 = vadd.f32 %v5865, %v5913
    %5915 = vmatmul.bf16.gmra.mxu0 %v5706
    %v5916 = vpop.f32.mrf.mxu0
    %v5917 = vadd.f32 %v5868, %v5916
    %v5918 = vpop.f32.mrf.mxu0
    %v5919 = vadd.f32 %v5870, %v5918
    %5920 = vmatmul.bf16.gmra.mxu0 %v5708
    %v5921 = vpop.f32.mrf.mxu0
    %v5922 = vadd.f32 %v5873, %v5921
    %v5923 = vpop.f32.mrf.mxu0
    %v5924 = vadd.f32 %v5875, %v5923
    %5925 = vmatmul.bf16.gmra.mxu0 %v5710
    %v5926 = vpop.f32.mrf.mxu0
    %v5927 = vadd.f32 %v5878, %v5926
    %v5928 = vpop.f32.mrf.mxu0
    %v5929 = vadd.f32 %v5880, %v5928
    %5930 = vmatmul.bf16.gmra.mxu0 %v5712
    %v5931 = vpop.f32.mrf.mxu0
    %v5932 = vadd.f32 %v5883, %v5931
    %v5933 = vpop.f32.mrf.mxu0
    %v5934 = vadd.f32 %v5885, %v5933
    %5935 = vmatmul.bf16.gmra.mxu0 %v5714
    %v5936 = vpop.f32.mrf.mxu0
    %v5937 = vadd.f32 %v5888, %v5936
    %v5938 = vpop.f32.mrf.mxu0
    %v5939 = vadd.f32 %v5890, %v5938
    %5940 = vdwg.mxu0
    %v5941 = vmax.f32 %v5902, 0.0
    %v5942 = vmax.f32 %v5904, 0.0
    %v5943 = vmax.f32 %v5907, 0.0
    %v5944 = vmax.f32 %v5909, 0.0
    %v5945 = vmax.f32 %v5912, 0.0
    %v5946 = vmax.f32 %v5914, 0.0
    %v5947 = vmax.f32 %v5917, 0.0
    %v5948 = vmax.f32 %v5919, 0.0
    %v5949 = vmax.f32 %v5922, 0.0
    %v5950 = vmax.f32 %v5924, 0.0
    %v5951 = vmax.f32 %v5927, 0.0
    %v5952 = vmax.f32 %v5929, 0.0
    %v5953 = vmax.f32 %v5932, 0.0
    %v5954 = vmax.f32 %v5934, 0.0
    %v5955 = vmax.f32 %v5937, 0.0
    %v5956 = vmax.f32 %v5939, 0.0
    %v5957 = vadd.f32 %v5941, %v5942
    %v5958 = vadd.f32 %v5957, %v5943
    %v5959 = vadd.f32 %v5958, %v5944
    %v5960 = vadd.f32 %v5959, %v5945
    %v5961 = vadd.f32 %v5960, %v5946
    %v5962 = vadd.f32 %v5961, %v5947
    %v5963 = vadd.f32 %v5962, %v5948
    %v5964 = vadd.f32 %v5963, %v5949
    %v5965 = vadd.f32 %v5964, %v5950
    %v5966 = vadd.f32 %v5965, %v5951
    %v5967 = vadd.f32 %v5966, %v5952
    %v5968 = vadd.f32 %v5967, %v5953
    %v5969 = vadd.f32 %v5968, %v5954
    %v5970 = vadd.f32 %v5969, %v5955
    %v5971 = vadd.f32 %v5970, %v5956
    %v5972 = vrot.slane %v5971, 4
    %v5973 = vadd.f32 %v5971, %v5972
    %v5974 = vrot.slane %v5973, 2
    %v5975 = vadd.f32 %v5973, %v5974
    %v5976 = vrot.slane %v5975, 1
    %v5977 = vadd.f32 %v5975, %v5976
    %v5978 = vmul.f32 %v5977, %v4234
    %v5979 = vmul.f32 %v5941, %v5941
    %v5980 = vmul.f32 %v5942, %v5942
    %v5981 = vmul.f32 %v5943, %v5943
    %v5982 = vmul.f32 %v5944, %v5944
    %v5983 = vmul.f32 %v5945, %v5945
    %v5984 = vmul.f32 %v5946, %v5946
    %v5985 = vmul.f32 %v5947, %v5947
    %v5986 = vmul.f32 %v5948, %v5948
    %v5987 = vmul.f32 %v5949, %v5949
    %v5988 = vmul.f32 %v5950, %v5950
    %v5989 = vmul.f32 %v5951, %v5951
    %v5990 = vmul.f32 %v5952, %v5952
    %v5991 = vmul.f32 %v5953, %v5953
    %v5992 = vmul.f32 %v5954, %v5954
    %v5993 = vmul.f32 %v5955, %v5955
    %v5994 = vmul.f32 %v5956, %v5956
    %v5995 = vadd.f32 %v5979, %v5980
    %v5996 = vadd.f32 %v5995, %v5981
    %v5997 = vadd.f32 %v5996, %v5982
    %v5998 = vadd.f32 %v5997, %v5983
    %v5999 = vadd.f32 %v5998, %v5984
    %v6000 = vadd.f32 %v5999, %v5985
    %v6001 = vadd.f32 %v6000, %v5986
    %v6002 = vadd.f32 %v6001, %v5987
    %v6003 = vadd.f32 %v6002, %v5988
    %v6004 = vadd.f32 %v6003, %v5989
    %v6005 = vadd.f32 %v6004, %v5990
    %v6006 = vadd.f32 %v6005, %v5991
    %v6007 = vadd.f32 %v6006, %v5992
    %v6008 = vadd.f32 %v6007, %v5993
    %v6009 = vadd.f32 %v6008, %v5994
    %v6010 = vrot.slane %v6009, 4
    %v6011 = vadd.f32 %v6009, %v6010
    %v6012 = vrot.slane %v6011, 2
    %v6013 = vadd.f32 %v6011, %v6012
    %v6014 = vrot.slane %v6013, 1
    %v6015 = vadd.f32 %v6013, %v6014
    %v6016 = vmul.f32 %v6015, %v4234
    %v6017 = vmul.f32 %v5978, %v5978
    %v6018 = vsub.f32 %v6016, %v6017
    %v6019 = vmax.f32 %v6018, 0.0
    %v6020 = vadd.f32 %v6019, 1e-05
    %v6021 = vrsqrt.pop %v6020
    %v6022 = vmul.f32 %v6021, %v6020
    %v6023 = vmul.f32 %v6022, %v6021
    %v6024 = vmul.f32 0.5, %v6023
    %v6025 = vsub.f32 1.5, %v6024
    %v6026 = vmul.f32 %v6021, %v6025
    %vm6027 = vweird.f32 %v6020
    %vm6028 = vweird.f32 %v6021
    %vm6029 = vmor %vm6027, %vm6028
    %v6030 = vsel %vm6029, %v6021, %v6026
    %v6031 = vmul.f32 %v6030, %v208
    %v6032 = vmul.f32 %v5978, %v6031
    %v6033 = vsub.f32 %v209, %v6032
    %v6034 = vmul.f32 %v5941, %v6031
    %v6035 = vmul.f32 %v5942, %v6031
    %v6036 = vmul.f32 %v5943, %v6031
    %v6037 = vmul.f32 %v5944, %v6031
    %v6038 = vmul.f32 %v5945, %v6031
    %v6039 = vmul.f32 %v5946, %v6031
    %v6040 = vmul.f32 %v5947, %v6031
    %v6041 = vmul.f32 %v5948, %v6031
    %v6042 = vmul.f32 %v5949, %v6031
    %v6043 = vmul.f32 %v5950, %v6031
    %v6044 = vmul.f32 %v5951, %v6031
    %v6045 = vmul.f32 %v5952, %v6031
    %v6046 = vmul.f32 %v5953, %v6031
    %v6047 = vmul.f32 %v5954, %v6031
    %v6048 = vmul.f32 %v5955, %v6031
    %v6049 = vmul.f32 %v5956, %v6031
    %v6050 = vadd.f32 %v6034, %v6033
    %v6051 = vadd.f32 %v6035, %v6033
    %v6052 = vadd.f32 %v6036, %v6033
    %v6053 = vadd.f32 %v6037, %v6033
    %v6054 = vadd.f32 %v6038, %v6033
    %v6055 = vadd.f32 %v6039, %v6033
    %v6056 = vadd.f32 %v6040, %v6033
    %v6057 = vadd.f32 %v6041, %v6033
    %v6058 = vadd.f32 %v6042, %v6033
    %v6059 = vadd.f32 %v6043, %v6033
    %v6060 = vadd.f32 %v6044, %v6033
    %v6061 = vadd.f32 %v6045, %v6033
    %v6062 = vadd.f32 %v6046, %v6033
    %v6063 = vadd.f32 %v6047, %v6033
    %v6064 = vadd.f32 %v6048, %v6033
    %v6065 = vadd.f32 %v6049, %v6033
    %v6066 = vld [vmem:[#allocation10] sm:$0x1]
    %v6067 = vpack.c.bf16 %v6051, %v6050
    %v6068 = vpack.c.bf16 %v6053, %v6052
    %v6069 = vpack.c.bf16 %v6055, %v6054
    %v6070 = vpack.c.bf16 %v6057, %v6056
    %v6071 = vpack.c.bf16 %v6059, %v6058
    %v6072 = vpack.c.bf16 %v6061, %v6060
    %v6073 = vpack.c.bf16 %v6063, %v6062
    %v6074 = vpack.c.bf16 %v6065, %v6064
    %6076 = vset.pattern.permute.xlu0 0
    %6077 = vperm.xlu0 %6076, %v210
    %v6078 = vpop.permute.xlu0 %6077
    %6080 = vmatpush.bf16.xpose.msra.mxu0 %v6074
    %6081 = vmatpush.bf16.xpose.msra.mxu0 %v6073
    %6082 = vmatpush.bf16.xpose.msra.mxu0 %v6072
    %6083 = vmatpush.bf16.xpose.msra.mxu0 %v6071
    %6084 = vmatpush.bf16.xpose.msra.mxu0 %v6070
    %6085 = vmatpush.bf16.xpose.msra.mxu0 %v6069
    %6086 = vmatpush.bf16.xpose.msra.mxu0 %v6068
    %6087 = vmatpush.bf16.xpose.msra.mxu0 %v6067
    %6088 = vmatmul.bf16.gmra.mxu0 %v6066
    %v6089 = vpop.f32.mrf.mxu0
    %v6090 = vadd.f32 %v6078, %v6089
    %v6091 = vpop.f32.mrf.mxu0
    %6092 = vdwg.mxu0
    %6093 = vst [vmem:[#allocation13] sm:$0x1] %v6090
    // Predicated region
    $region50: #{nnue_forward.1} parent=1 // pred_check
      _
    $region51: #{nnue_forward.1} parent=1 // pred_check_branch
      %6095 = sbr.rel (0) target = $region53
    $region52: #{nnue_forward.1} parent=1 // pred_region
      %6097 = vsyncadd [#allocation4], 0
      %s6099 = sshll.u32 [#allocation13], 4
      %s6100 = int_to_ptr.vmem [resolvable:$true] %s6099
      %s6101 = sshll.u32 %s6, 4
      %s6102 = int_to_ptr.hbm [resolvable:$true] %s6101
      %6104 = dma.vmem_to_hbm [thread:$0]  %s6100, 16, %s6102, [#allocation4]
    $region53: #{nnue_forward.1} parent=1 // pred_fallthru
      _
    // Predicated region
    $region54: #{nnue_forward.1} parent=1 // pred_check
      _
    $region55: #{nnue_forward.1} parent=1 // pred_check_branch
      %6106 = sbr.rel (0) target = $region57
    $region56: #{nnue_forward.1} parent=1 // pred_region
      %6108 = dma.done [#allocation4], 16
    $region57: #{nnue_forward.1} parent=1 // pred_fallthru
      _
    %6109 = vsyncpa [#allocation3], 1
    %6110 = vsyncpa [#allocation6], 1
    %6111 = vsyncpa [#allocation9], 1
    %6112 = vsyncpa [#allocation12], 1
    %6113 = vsyncpa [#allocation4], 1

</llo_original>
